<compile_context>
chip_gen: v5e
topology: v5e:2x2
jax: 0.10.0
libtpu: 0.0.40
codegen_flags: <defaults>
</compile_context>

<pallas_src>
import jax
import jax.numpy as jnp
from jax.experimental import pallas as pl
from jax.experimental.pallas import tpu as pltpu

EPS = 1e-5


def fused_conv_bn_add_relu_kernel(x_ref, w_ref, gamma_ref, beta_ref, res_ref, o_ref):
    # x_ref:     [Cin, M]   f32   (full array, resident across grid steps)
    # w_ref:     [tc, Cin]  f32   (Cout tile)
    # gamma_ref: [tc, 1]    f32
    # beta_ref:  [tc, 1]    f32
    # res_ref:   [tc, M]    f32 (or bf16 if the producer emits bf16)
    # o_ref:     [tc, M]    bf16
    #
    # In-kernel bf16 casts (cheap VPU passes; avoids standalone XLA converts
    # in the wrapper that would each re-round-trip HBM).
    x_bf = x_ref[...].astype(jnp.bfloat16)
    w_bf = w_ref[...].astype(jnp.bfloat16)

    # 1x1 conv == matmul on the MXU, f32 accumulation.
    y = jnp.dot(w_bf, x_bf, preferred_element_type=jnp.float32)     # [tc, M]

    # BatchNorm batch statistics over M = N*H*W (biased variance, matching
    # PyTorch training-mode normalization).  Two-pass (centered) variance to
    # avoid E[y^2] - mean^2 cancellation when |mean| >> std.
    m = jnp.float32(y.shape[1])
    mean = jnp.sum(y, axis=1, keepdims=True) / m                     # [tc, 1]
    yc = y - mean                                                    # [tc, M]
    var = jnp.sum(yc * yc, axis=1, keepdims=True) / m                # [tc, 1]
    inv_std = jax.lax.rsqrt(var + EPS)

    # Fold BN into a per-channel affine on the centered values.
    scale = gamma_ref[...] * inv_std                                 # [tc, 1]

    # normalize + residual add + ReLU, stored as bf16 (halves writeback bytes).
    out = jnp.maximum(yc * scale + beta_ref[...] + res_ref[...], 0.0)
    o_ref[...] = out.astype(o_ref.dtype)


def _default_block_cout(cout):
    """256 on v5e/v6e (fewer grid steps, fills 256x256 MXU); 128 on v7x so the
    megacore split keeps 2 pipelined steps per TensorCore."""
    try:
        kind = jax.devices()[0].device_kind.lower()
    except Exception:
        kind = ""
    bc = 128 if ("v7" in kind or "7x" in kind) else 256
    while cout % bc != 0:
        bc //= 2
    return max(bc, 8)


def fused_forward(x66_nchw, x60_nchw, weight_oihw, gamma, beta,
                  *, block_cout=None, out_dtype=jnp.bfloat16):
    """x66: [N, Cin, H, W], x60: [N, Cout, H, W], weight: [Cout, Cin, 1, 1]."""
    n, cin, h, wdim = x66_nchw.shape
    cout = weight_oihw.shape[0]
    m = n * h * wdim
    if block_cout is None:
        block_cout = _default_block_cout(cout)
    assert cout % block_cout == 0

    # Channels-on-sublanes layout [C, M].  For N == 1 this is a free reshape
    # (no data movement); for N > 1 a single moveaxis is needed.
    if n == 1:
        x_cm = x66_nchw.reshape(cin, m)
        r_cm = x60_nchw.reshape(cout, m)
    else:
        x_cm = jnp.moveaxis(x66_nchw, 1, 0).reshape(cin, m)
        r_cm = jnp.moveaxis(x60_nchw, 1, 0).reshape(cout, m)

    # NOTE: no dtype casts here -- x/W are cast to bf16 inside the kernel, and
    # the residual is consumed in whatever dtype its producer emitted.
    w_oc = weight_oihw.reshape(cout, cin)                            # [Cout, Cin]
    gamma2d = gamma.reshape(cout, 1).astype(jnp.float32)
    beta2d = beta.reshape(cout, 1).astype(jnp.float32)

    grid = (cout // block_cout,)

    itemsize = lambda a: jnp.dtype(a.dtype).itemsize
    cost = pl.CostEstimate(
        flops=2 * cout * cin * m,
        transcendentals=cout,                                        # rsqrt per channel
        bytes_accessed=(x_cm.size * itemsize(x_cm)
                        + w_oc.size * itemsize(w_oc)
                        + gamma2d.size * 4 + beta2d.size * 4
                        + r_cm.size * itemsize(r_cm)
                        + cout * m * jnp.dtype(out_dtype).itemsize),
    )

    out_cm = pl.pallas_call(
        fused_conv_bn_add_relu_kernel,
        out_shape=jax.ShapeDtypeStruct((cout, m), out_dtype),
        grid=grid,
        in_specs=[
            pl.BlockSpec((cin, m), lambda i: (0, 0)),                # x, resident
            pl.BlockSpec((block_cout, cin), lambda i: (i, 0)),       # W tile
            pl.BlockSpec((block_cout, 1), lambda i: (i, 0)),         # gamma tile
            pl.BlockSpec((block_cout, 1), lambda i: (i, 0)),         # beta tile
            pl.BlockSpec((block_cout, m), lambda i: (i, 0)),         # residual tile
        ],
        out_specs=pl.BlockSpec((block_cout, m), lambda i: (i, 0)),
        compiler_params=pltpu.CompilerParams(
            # Each Cout block is fully independent (per-channel stats over the
            # full M extent) -> parallel grid axis (megacore on v7x).
            dimension_semantics=("parallel",),
        ),
        cost_estimate=cost,
    )(x_cm, w_oc, gamma2d, beta2d, r_cm)

    # [Cout, M] -> NCHW (free for N == 1).
    if n == 1:
        return out_cm.reshape(1, cout, h, wdim)
    return jnp.moveaxis(out_cm.reshape(cout, n, h, wdim), 0, 1)


def reference_forward(x66, x60, weight, gamma, beta):
    """Pure-jnp f32 reference (training-mode BN, biased variance)."""
    n, cin, h, w = x66.shape
    cout = weight.shape[0]
    xm = jnp.transpose(x66, (0, 2, 3, 1)).reshape(-1, cin)
    y = xm @ weight.reshape(cout, cin).T                             # [M, Cout]
    mean = jnp.mean(y, axis=0, keepdims=True)
    var = jnp.mean((y - mean) ** 2, axis=0, keepdims=True)
    yh = (y - mean) / jnp.sqrt(var + EPS) * gamma + beta
    yh = jnp.transpose(yh.reshape(n, h, w, cout), (0, 3, 1, 2))
    return jnp.maximum(yh + x60, 0.0)


if __name__ == "__main__":
    # Shapes taken directly from the module.
    N, CIN, COUT, H, W = 1, 128, 512, 28, 28

    key = jax.random.PRNGKey(0)
    k1, k2, k3 = jax.random.split(key, 3)

    x66 = jax.random.normal(k1, (N, CIN, H, W), dtype=jnp.float32)
    x60 = jax.random.normal(k2, (N, COUT, H, W), dtype=jnp.float32)

    # Deterministic params (Conv2d weight; BN default init: gamma=1, beta=0).
    conv_w = 0.05 * jax.random.normal(k3, (COUT, CIN, 1, 1), dtype=jnp.float32)
    bn_gamma = jnp.ones((COUT,), dtype=jnp.float32)
    bn_beta = jnp.zeros((COUT,), dtype=jnp.float32)

    out = fused_forward(x66, x60, conv_w, bn_gamma, bn_beta)
    out = jax.block_until_ready(out)

    assert out.shape == (N, COUT, H, W)
    out_f32 = out.astype(jnp.float32)

    ref = reference_forward(x66, x60, conv_w, bn_gamma, bn_beta)

    # Relaxed tolerance vs the pure-f32 reference: the kernel feeds the MXU
    # bf16 inputs (f32 accumulation) and emits a bf16 output.
    assert jnp.allclose(out_f32, ref, atol=5e-2, rtol=5e-2)

    # Tighter check that isolates the kernel's BN/add/ReLU math: apply the
    # same bf16 rounding of the matmul inputs to the reference; remaining
    # difference is just the bf16 output rounding + accumulation order.
    ref_bf16 = reference_forward(
        x66.astype(jnp.bfloat16).astype(jnp.float32), x60,
        conv_w.astype(jnp.bfloat16).astype(jnp.float32), bn_gamma, bn_beta)
    assert jnp.allclose(out_f32, ref_bf16, atol=2e-2, rtol=2e-2)

    # TODO(synk): BatchNorm2d running_mean/running_var momentum update is
    # module state, not part of the forward activation, and is not emitted.
    print("KERNEL_OK")
</pallas_src>

<mosaic_0001>
module attributes {stable_mosaic.version = 11 : i64} {
  func.func @fused_conv_bn_add_relu_kernel(%arg0: i32, %arg1: memref<128x784xf32, #tpu.memory_space<vmem>>, %arg2: memref<256x128xf32, #tpu.memory_space<vmem>>, %arg3: memref<256x1xf32, #tpu.memory_space<vmem>>, %arg4: memref<256x1xf32, #tpu.memory_space<vmem>>, %arg5: memref<256x784xf32, #tpu.memory_space<vmem>>, %arg6: memref<256x784xbf16, #tpu.memory_space<vmem>>) attributes {dimension_semantics = [#tpu.dimension_semantics<parallel>], iteration_bounds = array<i64: 2>, scalar_prefetch = 0 : i64, scratch_operands = 0 : i64, tpu.core_type = #tpu.core_type<tc>, window_params = [{pipeline_mode = #tpu.pipeline_mode<synchronous>, transform_indices = @transform_0, window_bounds = array<i64: 128, 784>}, {transform_indices = @transform_1, window_bounds = array<i64: 256, 128>}, {transform_indices = @transform_2, window_bounds = array<i64: 256, 1>}, {transform_indices = @transform_3, window_bounds = array<i64: 256, 1>}, {transform_indices = @transform_4, window_bounds = array<i64: 256, 784>}, {transform_indices = @transform_5, window_bounds = array<i64: 256, 784>}]} {
    %c0 = arith.constant 0 : index
    %c0_0 = arith.constant 0 : index
    %0 = vector.load %arg1[%c0, %c0_0] : memref<128x784xf32, #tpu.memory_space<vmem>>, vector<128x784xf32>
    %1 = arith.truncf %0 : vector<128x784xf32> to vector<128x784xbf16>
    %c0_1 = arith.constant 0 : index
    %c0_2 = arith.constant 0 : index
    %2 = vector.load %arg2[%c0_1, %c0_2] : memref<256x128xf32, #tpu.memory_space<vmem>>, vector<256x128xf32>
    %3 = arith.truncf %2 : vector<256x128xf32> to vector<256x128xbf16>
    %cst = arith.constant dense<0.000000e+00> : vector<256x784xf32>
    %4 = tpu.matmul %3, %1, %cst {dimension_numbers = #tpu.dot_dimension_numbers<[1], [0], [0], [1], [0, 0, 1, 1], [], []>} : vector<256x128xbf16>, vector<128x784xbf16>, vector<256x784xf32> -> vector<256x784xf32>
    %cst_3 = arith.constant dense<0.000000e+00> : vector<256xf32>
    %5 = vector.multi_reduction <add>, %4, %cst_3 [1] : vector<256x784xf32> to vector<256xf32>
    %6 = vector.shape_cast %5 : vector<256xf32> to vector<256x1xf32>
    %cst_4 = arith.constant 7.840000e+02 : f32
    %7 = vector.broadcast %cst_4 : f32 to vector<256x1xf32>
    %8 = arith.divf %6, %7 : vector<256x1xf32>
    %9 = vector.broadcast %8 : vector<256x1xf32> to vector<256x784xf32>
    %10 = arith.subf %4, %9 : vector<256x784xf32>
    %11 = arith.mulf %10, %10 : vector<256x784xf32>
    %cst_5 = arith.constant dense<0.000000e+00> : vector<256xf32>
    %12 = vector.multi_reduction <add>, %11, %cst_5 [1] : vector<256x784xf32> to vector<256xf32>
    %13 = vector.shape_cast %12 : vector<256xf32> to vector<256x1xf32>
    %cst_6 = arith.constant 7.840000e+02 : f32
    %14 = vector.broadcast %cst_6 : f32 to vector<256x1xf32>
    %15 = arith.divf %13, %14 : vector<256x1xf32>
    %cst_7 = arith.constant 9.99999974E-6 : f32
    %16 = vector.broadcast %cst_7 : f32 to vector<256x1xf32>
    %17 = arith.addf %15, %16 : vector<256x1xf32>
    %18 = math.rsqrt %17 : vector<256x1xf32>
    %c0_8 = arith.constant 0 : index
    %c0_9 = arith.constant 0 : index
    %19 = vector.load %arg3[%c0_8, %c0_9] : memref<256x1xf32, #tpu.memory_space<vmem>>, vector<256x1xf32>
    %20 = arith.mulf %19, %18 : vector<256x1xf32>
    %21 = vector.broadcast %20 : vector<256x1xf32> to vector<256x784xf32>
    %22 = arith.mulf %10, %21 : vector<256x784xf32>
    %c0_10 = arith.constant 0 : index
    %c0_11 = arith.constant 0 : index
    %23 = vector.load %arg4[%c0_10, %c0_11] : memref<256x1xf32, #tpu.memory_space<vmem>>, vector<256x1xf32>
    %24 = vector.broadcast %23 : vector<256x1xf32> to vector<256x784xf32>
    %25 = arith.addf %22, %24 : vector<256x784xf32>
    %c0_12 = arith.constant 0 : index
    %c0_13 = arith.constant 0 : index
    %26 = vector.load %arg5[%c0_12, %c0_13] : memref<256x784xf32, #tpu.memory_space<vmem>>, vector<256x784xf32>
    %27 = arith.addf %25, %26 : vector<256x784xf32>
    %cst_14 = arith.constant 0.000000e+00 : f32
    %28 = vector.broadcast %cst_14 : f32 to vector<256x784xf32>
    %29 = arith.maximumf %27, %28 : vector<256x784xf32>
    %30 = arith.truncf %29 : vector<256x784xf32> to vector<256x784xbf16>
    %c0_15 = arith.constant 0 : index
    %c0_16 = arith.constant 0 : index
    %31 = vector.load %arg6[%c0_15, %c0_16] : memref<256x784xbf16, #tpu.memory_space<vmem>>, vector<256x784xbf16>
    tpu.vector_store %arg6[%c0_15, %c0_16], %30 {strides = array<i32>} : memref<256x784xbf16, #tpu.memory_space<vmem>>, vector<256x784xbf16>,
    return
  }
  func.func @transform_0(%arg0: i32) -> (i32, i32) {
    %c0_i32 = arith.constant 0 : i32
    %c0_i32_0 = arith.constant 0 : i32
    %c0_i32_1 = arith.constant 0 : i32
    return %c0_i32, %c0_i32_0 : i32, i32
  }
  func.func @transform_1(%arg0: i32) -> (i32, i32) {
    %c0_i32 = arith.constant 0 : i32
    %c0_i32_0 = arith.constant 0 : i32
    return %arg0, %c0_i32 : i32, i32
  }
  func.func @transform_2(%arg0: i32) -> (i32, i32) {
    %c0_i32 = arith.constant 0 : i32
    %c0_i32_0 = arith.constant 0 : i32
    return %arg0, %c0_i32 : i32, i32
  }
  func.func @transform_3(%arg0: i32) -> (i32, i32) {
    %c0_i32 = arith.constant 0 : i32
    %c0_i32_0 = arith.constant 0 : i32
    return %arg0, %c0_i32 : i32, i32
  }
  func.func @transform_4(%arg0: i32) -> (i32, i32) {
    %c0_i32 = arith.constant 0 : i32
    %c0_i32_0 = arith.constant 0 : i32
    return %arg0, %c0_i32 : i32, i32
  }
  func.func @transform_5(%arg0: i32) -> (i32, i32) {
    %c0_i32 = arith.constant 0 : i32
    %c0_i32_0 = arith.constant 0 : i32
    return %arg0, %c0_i32 : i32, i32
  }
}

</mosaic_0001>

<llo_original>
// kernel: tpu_custom_call.1
$region0: #{tpu_custom_call.1}
  #allocation0 [shape = 'u32[]', space=smem, size = 0x4, offset = 0x4, fixed_abs, tag = 'smem constant byte address 0x4 - core index']
  #allocation1 [shape = 'u32[72,128]{1,0:T(1,128)}', space=vmem, size = 0x9000, scoped, tag = 'internal scratch']
  %s0 = inlined_call_operand.vmem [shape: f32[128,784], index: 0, kind: input, shape index: {}]
  %s1 = inlined_call_operand.vmem [shape: f32[512,128], index: 1, kind: input, shape index: {}]
  %s2 = inlined_call_operand.vmem [shape: f32[512,1], index: 2, kind: input, shape index: {}]
  %s3 = inlined_call_operand.vmem [shape: f32[512,1], index: 3, kind: input, shape index: {}]
  %s4 = inlined_call_operand.vmem [shape: f32[512,784], index: 4, kind: input, shape index: {}]
  %s5 = inlined_call_operand.vmem [shape: bf16[512,784], index: 5, kind: output, shape index: {}]
  %s6 = sld [smem:[#allocation0]]
  $region53: #{tpu_custom_call.1} parent=0
    _
  %s8 = ssub.s32 1, %s6
  %s9 = scalar_select 0, %s8, %s6
  loop: start=0, step=1, limit=4
  $region2: #{tpu_custom_call.1} parent=0 // loop_pre_header
    _
  $region3: #{tpu_custom_call.1} parent=0 // loop_header
    %s11 = sphi 0, %s15
    %p12 = scmp.ge.s32.totalorder %s11, 4
    %s19 = sphi 0, %s19
    %s21 = sphi 0, %s19
    %s22 = sphi 0, %s21
    %s36 = sphi 0, %s22
    %s42 = sphi 0, %s44
    %s45 = sphi 0, %s42
    %s46 = sphi 0, %s45
    %s62 = sphi 0, %s46
    %s68 = sphi 0, %s70
    %s71 = sphi 0, %s68
    %s72 = sphi 0, %s71
    %s88 = sphi 0, %s72
    %s94 = sphi 0, %s96
    %s97 = sphi 0, %s94
    %s98 = sphi 0, %s97
    %s114 = sphi 0, %s98
    %s120 = sphi 0, %s122
    %s123 = sphi 0, %s120
    %s124 = sphi 0, %s123
    %s140 = sphi 0, %s124
    %s146 = sphi 0, %s148
    %s149 = sphi 0, %s146
    %s150 = sphi 0, %s149
    %s166 = sphi 0, %s150
  $region4: #{tpu_custom_call.1} parent=0 // loop_header_branch
    %14 = sbr.rel (%p12) target = $region8
  $region5: #{tpu_custom_call.1} parent=0 // loop_body
    %s16 = ssub.s32 %s11, 1
    %s17 = ssub.s32 %s11, 2
    %s18 = sadd.s32 %s11, 1
    %s20 = sadd.s32 %s19, 1
    %p23 = scmp.eq.s32.totalorder %s11, 1
    %p24 = scmp.ne.s32.totalorder %s19, %s21
    %p25 = scmp.eq.s32.totalorder %s11, 0
    %p26 = por %p24, %p25
    %p27 = scmp.ne.s32.totalorder %s19, %s21
    %p28 = scmp.eq.s32.totalorder %s16, 1
    %p29 = por %p27, %p28
    %p30 = scmp.ne.s32.totalorder %s21, %s22
    %p31 = scmp.eq.s32.totalorder %s16, 0
    %p32 = por %p30, %p31
    %p33 = scmp.ne.s32.totalorder %s21, %s22
    %p34 = scmp.eq.s32.totalorder %s17, 1
    %p35 = por %p33, %p34
    %p37 = scmp.ne.s32.totalorder %s22, %s36
    %p38 = scmp.eq.s32.totalorder %s17, 0
    %p39 = por %p37, %p38
    %s40 = ssub.s32 %s11, %s18
    %p41 = scmp.eq.s32.totalorder %s40, 0
    %s43 = sadd.s32 %s42, 1
    %s44 = scalar_select %p41, %s42, %s43
    %p47 = pneg %p41
    %p48 = scmp.eq.s32.totalorder %s11, 1
    %p49 = por %p47, %p48
    %p50 = scmp.ne.s32.totalorder %s42, %s45
    %p51 = scmp.eq.s32.totalorder %s11, 0
    %p52 = por %p50, %p51
    %p53 = scmp.ne.s32.totalorder %s42, %s45
    %p54 = scmp.eq.s32.totalorder %s16, 1
    %p55 = por %p53, %p54
    %p56 = scmp.ne.s32.totalorder %s45, %s46
    %p57 = scmp.eq.s32.totalorder %s16, 0
    %p58 = por %p56, %p57
    %p59 = scmp.ne.s32.totalorder %s45, %s46
    %p60 = scmp.eq.s32.totalorder %s17, 1
    %p61 = por %p59, %p60
    %p63 = scmp.ne.s32.totalorder %s46, %s62
    %p64 = scmp.eq.s32.totalorder %s17, 0
    %p65 = por %p63, %p64
    %s66 = ssub.s32 %s11, %s18
    %p67 = scmp.eq.s32.totalorder %s66, 0
    %s69 = sadd.s32 %s68, 1
    %s70 = scalar_select %p67, %s68, %s69
    %p73 = pneg %p67
    %p74 = scmp.eq.s32.totalorder %s11, 1
    %p75 = por %p73, %p74
    %p76 = scmp.ne.s32.totalorder %s68, %s71
    %p77 = scmp.eq.s32.totalorder %s11, 0
    %p78 = por %p76, %p77
    %p79 = scmp.ne.s32.totalorder %s68, %s71
    %p80 = scmp.eq.s32.totalorder %s16, 1
    %p81 = por %p79, %p80
    %p82 = scmp.ne.s32.totalorder %s71, %s72
    %p83 = scmp.eq.s32.totalorder %s16, 0
    %p84 = por %p82, %p83
    %p85 = scmp.ne.s32.totalorder %s71, %s72
    %p86 = scmp.eq.s32.totalorder %s17, 1
    %p87 = por %p85, %p86
    %p89 = scmp.ne.s32.totalorder %s72, %s88
    %p90 = scmp.eq.s32.totalorder %s17, 0
    %p91 = por %p89, %p90
    %s92 = ssub.s32 %s11, %s18
    %p93 = scmp.eq.s32.totalorder %s92, 0
    %s95 = sadd.s32 %s94, 1
    %s96 = scalar_select %p93, %s94, %s95
    %p99 = pneg %p93
    %p100 = scmp.eq.s32.totalorder %s11, 1
    %p101 = por %p99, %p100
    %p102 = scmp.ne.s32.totalorder %s94, %s97
    %p103 = scmp.eq.s32.totalorder %s11, 0
    %p104 = por %p102, %p103
    %p105 = scmp.ne.s32.totalorder %s94, %s97
    %p106 = scmp.eq.s32.totalorder %s16, 1
    %p107 = por %p105, %p106
    %p108 = scmp.ne.s32.totalorder %s97, %s98
    %p109 = scmp.eq.s32.totalorder %s16, 0
    %p110 = por %p108, %p109
    %p111 = scmp.ne.s32.totalorder %s97, %s98
    %p112 = scmp.eq.s32.totalorder %s17, 1
    %p113 = por %p111, %p112
    %p115 = scmp.ne.s32.totalorder %s98, %s114
    %p116 = scmp.eq.s32.totalorder %s17, 0
    %p117 = por %p115, %p116
    %s118 = ssub.s32 %s11, %s18
    %p119 = scmp.eq.s32.totalorder %s118, 0
    %s121 = sadd.s32 %s120, 1
    %s122 = scalar_select %p119, %s120, %s121
    %p125 = pneg %p119
    %p126 = scmp.eq.s32.totalorder %s11, 1
    %p127 = por %p125, %p126
    %p128 = scmp.ne.s32.totalorder %s120, %s123
    %p129 = scmp.eq.s32.totalorder %s11, 0
    %p130 = por %p128, %p129
    %p131 = scmp.ne.s32.totalorder %s120, %s123
    %p132 = scmp.eq.s32.totalorder %s16, 1
    %p133 = por %p131, %p132
    %p134 = scmp.ne.s32.totalorder %s123, %s124
    %p135 = scmp.eq.s32.totalorder %s16, 0
    %p136 = por %p134, %p135
    %p137 = scmp.ne.s32.totalorder %s123, %s124
    %p138 = scmp.eq.s32.totalorder %s17, 1
    %p139 = por %p137, %p138
    %p141 = scmp.ne.s32.totalorder %s124, %s140
    %p142 = scmp.eq.s32.totalorder %s17, 0
    %p143 = por %p141, %p142
    %s144 = ssub.s32 %s11, %s18
    %p145 = scmp.eq.s32.totalorder %s144, 0
    %s147 = sadd.s32 %s146, 1
    %s148 = scalar_select %p145, %s146, %s147
    %p151 = pneg %p145
    %p152 = scmp.eq.s32.totalorder %s11, 1
    %p153 = por %p151, %p152
    %p154 = scmp.ne.s32.totalorder %s146, %s149
    %p155 = scmp.eq.s32.totalorder %s11, 0
    %p156 = por %p154, %p155
    %p157 = scmp.ne.s32.totalorder %s146, %s149
    %p158 = scmp.eq.s32.totalorder %s16, 1
    %p159 = por %p157, %p158
    %p160 = scmp.ne.s32.totalorder %s149, %s150
    %p161 = scmp.eq.s32.totalorder %s16, 0
    %p162 = por %p160, %p161
    %p163 = scmp.ne.s32.totalorder %s149, %s150
    %p164 = scmp.eq.s32.totalorder %s17, 1
    %p165 = por %p163, %p164
    %p167 = scmp.ne.s32.totalorder %s150, %s166
    %p168 = scmp.eq.s32.totalorder %s17, 0
    %p169 = por %p167, %p168
    %p170 = scmp.le.s32.totalorder 1, %s11
    %p171 = scmp.lt.s32.totalorder %s11, 3
    %p172 = pnand %p170, %p171
    %p173 = pneg %p172
    // Predicated region
    $region9: #{tpu_custom_call.1} parent=5 // pred_check
      _
    $region10: #{tpu_custom_call.1} parent=5 // pred_check_branch
      %175 = sbr.rel (%p172) target = $region12
    $region11: #{tpu_custom_call.1} parent=5 // pred_region
      %s176 = ssub.s32 %s11, 1
      // Predicated region
      $region13: #{tpu_custom_call.1} parent=11 // pred_check
        %p177 = pneg %p32
      $region14: #{tpu_custom_call.1} parent=11 // pred_check_branch
        %179 = sbr.rel (%p177) target = $region16
      $region15: #{tpu_custom_call.1} parent=11 // pred_region
        _
      $region16: #{tpu_custom_call.1} parent=11 // pred_fallthru
        _
    $region12: #{tpu_custom_call.1} parent=5 // pred_fallthru
      _
    %p180 = scmp.lt.s32.totalorder %s11, 2
    // Predicated region
    $region17: #{tpu_custom_call.1} parent=5 // pred_check
      %p181 = pneg %p180
    $region18: #{tpu_custom_call.1} parent=5 // pred_check_branch
      %183 = sbr.rel (%p181) target = $region20
    $region19: #{tpu_custom_call.1} parent=5 // pred_region
      // Predicated region
      $region21: #{tpu_custom_call.1} parent=19 // pred_check
        %p184 = pneg %p52
      $region22: #{tpu_custom_call.1} parent=19 // pred_check_branch
        %186 = sbr.rel (%p184) target = $region24
      $region23: #{tpu_custom_call.1} parent=19 // pred_region
        %s187 = smul.u32 32, %s11
        %p188 = scmp.lt.s32.totalorder %s187, 63
        %s189 = scalar_select %p188, %s187, 63
        %s190 = smul.addr %s189, 8
        %s191 = scalar_lea.vmem %s1, %s190
        %s192 = smul.u32 32, %s11
      $region24: #{tpu_custom_call.1} parent=19 // pred_fallthru
        _
      // Predicated region
      $region25: #{tpu_custom_call.1} parent=19 // pred_check
        %p193 = pneg %p78
      $region26: #{tpu_custom_call.1} parent=19 // pred_check_branch
        %195 = sbr.rel (%p193) target = $region28
      $region27: #{tpu_custom_call.1} parent=19 // pred_region
        %s196 = smul.u32 32, %s11
        %p197 = scmp.lt.s32.totalorder %s196, 63
        %s198 = scalar_select %p197, %s196, 63
        %s199 = smul.addr %s198, 8
        %s200 = scalar_lea.vmem %s2, %s199
        %s201 = smul.u32 32, %s11
      $region28: #{tpu_custom_call.1} parent=19 // pred_fallthru
        _
      // Predicated region
      $region29: #{tpu_custom_call.1} parent=19 // pred_check
        %p202 = pneg %p104
      $region30: #{tpu_custom_call.1} parent=19 // pred_check_branch
        %204 = sbr.rel (%p202) target = $region32
      $region31: #{tpu_custom_call.1} parent=19 // pred_region
        %s205 = smul.u32 32, %s11
        %p206 = scmp.lt.s32.totalorder %s205, 63
        %s207 = scalar_select %p206, %s205, 63
        %s208 = smul.addr %s207, 8
        %s209 = scalar_lea.vmem %s3, %s208
        %s210 = smul.u32 32, %s11
      $region32: #{tpu_custom_call.1} parent=19 // pred_fallthru
        _
      // Predicated region
      $region33: #{tpu_custom_call.1} parent=19 // pred_check
        %p211 = pneg %p130
      $region34: #{tpu_custom_call.1} parent=19 // pred_check_branch
        %213 = sbr.rel (%p211) target = $region36
      $region35: #{tpu_custom_call.1} parent=19 // pred_region
        %s214 = smul.u32 32, %s11
        %p215 = scmp.lt.s32.totalorder %s214, 63
        %s216 = scalar_select %p215, %s214, 63
        %s217 = smul.addr %s216, 7
        %s218 = smul.addr %s217, 8
        %s219 = scalar_lea.vmem %s4, %s218
        %s220 = smul.u32 32, %s11
      $region36: #{tpu_custom_call.1} parent=19 // pred_fallthru
        _
    $region20: #{tpu_custom_call.1} parent=5 // pred_fallthru
      _
    %p221 = scmp.le.s32.totalorder 1, %s11
    %p222 = scmp.lt.s32.totalorder %s11, 3
    %p223 = pnand %p221, %p222
    %p224 = pneg %p223
    // Predicated region
    $region37: #{tpu_custom_call.1} parent=5 // pred_check
      _
    $region38: #{tpu_custom_call.1} parent=5 // pred_check_branch
      %226 = sbr.rel (%p223) target = $region40
    $region39: #{tpu_custom_call.1} parent=5 // pred_region
      %s227 = ssub.s32 %s11, 1
      %p228 = pneg %p32
      %p229 = pneg %p29
      %s230 = smul.u32 32, %s16
      %p231 = scmp.lt.s32.totalorder %s230, 63
      %s232 = scalar_select %p231, %s230, 63
      %s233 = smul.addr %s232, 8
      %s234 = scalar_lea.vmem %s1, %s233
      %p235 = pneg %p58
      %p236 = pneg %p55
      %s237 = smul.u32 32, %s16
      %p238 = scmp.lt.s32.totalorder %s237, 63
      %s239 = scalar_select %p238, %s237, 63
      %s240 = smul.addr %s239, 8
      %s241 = scalar_lea.vmem %s2, %s240
      %p242 = pneg %p84
      %p243 = pneg %p81
      %s244 = smul.u32 32, %s16
      %p245 = scmp.lt.s32.totalorder %s244, 63
      %s246 = scalar_select %p245, %s244, 63
      %s247 = smul.addr %s246, 8
      %s248 = scalar_lea.vmem %s3, %s247
      %p249 = pneg %p110
      %p250 = pneg %p107
      %s251 = smul.u32 32, %s16
      %p252 = scmp.lt.s32.totalorder %s251, 63
      %s253 = scalar_select %p252, %s251, 63
      %s254 = smul.addr %s253, 7
      %s255 = smul.addr %s254, 8
      %s256 = scalar_lea.vmem %s4, %s255
      %p257 = pneg %p136
      %p258 = pneg %p133
      %p259 = pneg %p162
      %p260 = pneg %p159
      %s261 = smul.u32 32, %s16
      %p262 = scmp.lt.s32.totalorder %s261, 63
      %s263 = scalar_select %p262, %s261, 63
      %s264 = smul.addr %s263, 7
      %s265 = smul.addr %s264, 4
      %s266 = scalar_lea.vmem %s5, %s265
      %s267 = smul.u32 32, %s16
      %p268 = scmp.lt.s32.totalorder %s267, 63
      %s269 = scalar_select %p268, %s267, 63
      %s270 = smul.addr %s269, 8
      %s271 = scalar_lea.vmem %s1, %s270
      %s272 = smul.u32 32, %s16
      %s273 = smul.u32 32, %s16
      %p274 = scmp.lt.s32.totalorder %s273, 63
      %s275 = scalar_select %p274, %s273, 63
      %s276 = smul.addr %s275, 8
      %s277 = scalar_lea.vmem %s2, %s276
      %s278 = smul.u32 32, %s16
      %s279 = smul.u32 32, %s16
      %p280 = scmp.lt.s32.totalorder %s279, 63
      %s281 = scalar_select %p280, %s279, 63
      %s282 = smul.addr %s281, 8
      %s283 = scalar_lea.vmem %s3, %s282
      %s284 = smul.u32 32, %s16
      %s285 = smul.u32 32, %s16
      %p286 = scmp.lt.s32.totalorder %s285, 63
      %s287 = scalar_select %p286, %s285, 63
      %s288 = smul.addr %s287, 7
      %s289 = smul.addr %s288, 8
      %s290 = scalar_lea.vmem %s4, %s289
      %s291 = smul.u32 32, %s16
      %s292 = smul.u32 32, %s16
      %p293 = scmp.lt.s32.totalorder %s292, 63
      %s294 = scalar_select %p293, %s292, 63
      %s295 = smul.addr %s294, 7
      %s296 = smul.addr %s295, 4
      %s297 = scalar_lea.vmem %s5, %s296
      %s298 = smul.u32 32, %s16
      %v299 = vld [vmem:[%s0] sm:$0xff]
      %v300 = vld [vmem:[%s0 + $0x8] sm:$0xff]
      %v301 = vld [vmem:[%s0 + $0x10] sm:$0xff]
      %v302 = vld [vmem:[%s0 + $0x18] sm:$0xff]
      %v303 = vld [vmem:[%s0 + $0x20] sm:$0xff]
      %v304 = vld [vmem:[%s0 + $0x28] sm:$0xff]
      %v305 = vld [vmem:[%s0 + $0x30] sm:$0xff]
      %v306 = vld [vmem:[%s0 + $0x38] sm:$0xff]
      %v307 = vld [vmem:[%s0 + $0x40] sm:$0xff]
      %v308 = vld [vmem:[%s0 + $0x48] sm:$0xff]
      %v309 = vld [vmem:[%s0 + $0x50] sm:$0xff]
      %v310 = vld [vmem:[%s0 + $0x58] sm:$0xff]
      %v311 = vld [vmem:[%s0 + $0x60] sm:$0xff]
      %v312 = vld [vmem:[%s0 + $0x68] sm:$0xff]
      %v313 = vld [vmem:[%s0 + $0x70] sm:$0xff]
      %v314 = vld [vmem:[%s0 + $0x78] sm:$0xff]
      %v315 = vld [vmem:[%s0 + $0x80] sm:$0xff]
      %v316 = vld [vmem:[%s0 + $0x88] sm:$0xff]
      %v317 = vld [vmem:[%s0 + $0x90] sm:$0xff]
      %v318 = vld [vmem:[%s0 + $0x98] sm:$0xff]
      %v319 = vld [vmem:[%s0 + $0xa0] sm:$0xff]
      %v320 = vld [vmem:[%s0 + $0xa8] sm:$0xff]
      %v321 = vld [vmem:[%s0 + $0xb0] sm:$0xff]
      %v322 = vld [vmem:[%s0 + $0xb8] sm:$0xff]
      %v323 = vld [vmem:[%s0 + $0xc0] sm:$0xff]
      %v324 = vld [vmem:[%s0 + $0xc8] sm:$0xff]
      %v325 = vld [vmem:[%s0 + $0xd0] sm:$0xff]
      %v326 = vld [vmem:[%s0 + $0xd8] sm:$0xff]
      %v327 = vld [vmem:[%s0 + $0xe0] sm:$0xff]
      %v328 = vld [vmem:[%s0 + $0xe8] sm:$0xff]
      %v329 = vld [vmem:[%s0 + $0xf0] sm:$0xff]
      %v330 = vld [vmem:[%s0 + $0xf8] sm:$0xff]
      %v331 = vld [vmem:[%s0 + $0x100] sm:$0xff]
      %v332 = vld [vmem:[%s0 + $0x108] sm:$0xff]
      %v333 = vld [vmem:[%s0 + $0x110] sm:$0xff]
      %v334 = vld [vmem:[%s0 + $0x118] sm:$0xff]
      %v335 = vld [vmem:[%s0 + $0x120] sm:$0xff]
      %v336 = vld [vmem:[%s0 + $0x128] sm:$0xff]
      %v337 = vld [vmem:[%s0 + $0x130] sm:$0xff]
      %v338 = vld [vmem:[%s0 + $0x138] sm:$0xff]
      %v339 = vld [vmem:[%s0 + $0x140] sm:$0xff]
      %v340 = vld [vmem:[%s0 + $0x148] sm:$0xff]
      %v341 = vld [vmem:[%s0 + $0x150] sm:$0xff]
      %v342 = vld [vmem:[%s0 + $0x158] sm:$0xff]
      %v343 = vld [vmem:[%s0 + $0x160] sm:$0xff]
      %v344 = vld [vmem:[%s0 + $0x168] sm:$0xff]
      %v345 = vld [vmem:[%s0 + $0x170] sm:$0xff]
      %v346 = vld [vmem:[%s0 + $0x178] sm:$0xff]
      %v347 = vld [vmem:[%s0 + $0x180] sm:$0xff]
      %v348 = vld [vmem:[%s0 + $0x188] sm:$0xff]
      %v349 = vld [vmem:[%s0 + $0x190] sm:$0xff]
      %v350 = vld [vmem:[%s0 + $0x198] sm:$0xff]
      %v351 = vld [vmem:[%s0 + $0x1a0] sm:$0xff]
      %v352 = vld [vmem:[%s0 + $0x1a8] sm:$0xff]
      %v353 = vld [vmem:[%s0 + $0x1b0] sm:$0xff]
      %v354 = vld [vmem:[%s0 + $0x1b8] sm:$0xff]
      %v355 = vld [vmem:[%s0 + $0x1c0] sm:$0xff]
      %v356 = vld [vmem:[%s0 + $0x1c8] sm:$0xff]
      %v357 = vld [vmem:[%s0 + $0x1d0] sm:$0xff]
      %v358 = vld [vmem:[%s0 + $0x1d8] sm:$0xff]
      %v359 = vld [vmem:[%s0 + $0x1e0] sm:$0xff]
      %v360 = vld [vmem:[%s0 + $0x1e8] sm:$0xff]
      %v361 = vld [vmem:[%s0 + $0x1f0] sm:$0xff]
      %v362 = vld [vmem:[%s0 + $0x1f8] sm:$0xff]
      %v363 = vld [vmem:[%s0 + $0x200] sm:$0xff]
      %v364 = vld [vmem:[%s0 + $0x208] sm:$0xff]
      %v365 = vld [vmem:[%s0 + $0x210] sm:$0xff]
      %v366 = vld [vmem:[%s0 + $0x218] sm:$0xff]
      %v367 = vld [vmem:[%s0 + $0x220] sm:$0xff]
      %v368 = vld [vmem:[%s0 + $0x228] sm:$0xff]
      %v369 = vld [vmem:[%s0 + $0x230] sm:$0xff]
      %v370 = vld [vmem:[%s0 + $0x238] sm:$0xff]
      %v371 = vld [vmem:[%s0 + $0x240] sm:$0xff]
      %v372 = vld [vmem:[%s0 + $0x248] sm:$0xff]
      %v373 = vld [vmem:[%s0 + $0x250] sm:$0xff]
      %v374 = vld [vmem:[%s0 + $0x258] sm:$0xff]
      %v375 = vld [vmem:[%s0 + $0x260] sm:$0xff]
      %v376 = vld [vmem:[%s0 + $0x268] sm:$0xff]
      %v377 = vld [vmem:[%s0 + $0x270] sm:$0xff]
      %v378 = vld [vmem:[%s0 + $0x278] sm:$0xff]
      %v379 = vld [vmem:[%s0 + $0x280] sm:$0xff]
      %v380 = vld [vmem:[%s0 + $0x288] sm:$0xff]
      %v381 = vld [vmem:[%s0 + $0x290] sm:$0xff]
      %v382 = vld [vmem:[%s0 + $0x298] sm:$0xff]
      %v383 = vld [vmem:[%s0 + $0x2a0] sm:$0xff]
      %v384 = vld [vmem:[%s0 + $0x2a8] sm:$0xff]
      %v385 = vld [vmem:[%s0 + $0x2b0] sm:$0xff]
      %v386 = vld [vmem:[%s0 + $0x2b8] sm:$0xff]
      %v387 = vld [vmem:[%s0 + $0x2c0] sm:$0xff]
      %v388 = vld [vmem:[%s0 + $0x2c8] sm:$0xff]
      %v389 = vld [vmem:[%s0 + $0x2d0] sm:$0xff]
      %v390 = vld [vmem:[%s0 + $0x2d8] sm:$0xff]
      %v391 = vld [vmem:[%s0 + $0x2e0] sm:$0xff]
      %v392 = vld [vmem:[%s0 + $0x2e8] sm:$0xff]
      %v393 = vld [vmem:[%s0 + $0x2f0] sm:$0xff]
      %v394 = vld [vmem:[%s0 + $0x2f8] sm:$0xff]
      %v395 = vld [vmem:[%s0 + $0x300] sm:$0xff]
      %v396 = vld [vmem:[%s0 + $0x308] sm:$0xff]
      %v397 = vld [vmem:[%s0 + $0x310] sm:$0xff]
      %v398 = vld [vmem:[%s0 + $0x318] sm:$0xff]
      %v399 = vld [vmem:[%s0 + $0x320] sm:$0xff]
      %v400 = vld [vmem:[%s0 + $0x328] sm:$0xff]
      %v401 = vld [vmem:[%s0 + $0x330] sm:$0xff]
      %v402 = vld [vmem:[%s0 + $0x338] sm:$0xff]
      %v403 = vld [vmem:[%s0 + $0x340] sm:$0xff]
      %v404 = vld [vmem:[%s0 + $0x348] sm:$0xff]
      %v405 = vld [vmem:[%s0 + $0x350] sm:$0xff]
      %v406 = vld [vmem:[%s0 + $0x358] sm:$0xff]
      %v407 = vld [vmem:[%s0 + $0x360] sm:$0xff]
      %v408 = vld [vmem:[%s0 + $0x368] sm:$0xff]
      %v409 = vld [vmem:[%s0 + $0x370] sm:$0xff]
      %v410 = vld [vmem:[%s0 + $0x378] sm:$0xff]
      %v411 = vpack.c.bf16 %v306, %v299
      %v412 = vpack.c.bf16 %v307, %v300
      %v413 = vpack.c.bf16 %v308, %v301
      %v414 = vpack.c.bf16 %v309, %v302
      %v415 = vpack.c.bf16 %v310, %v303
      %v416 = vpack.c.bf16 %v311, %v304
      %v417 = vpack.c.bf16 %v312, %v305
      %v418 = vpack.c.bf16 %v320, %v313
      %v419 = vpack.c.bf16 %v321, %v314
      %v420 = vpack.c.bf16 %v322, %v315
      %v421 = vpack.c.bf16 %v323, %v316
      %v422 = vpack.c.bf16 %v324, %v317
      %v423 = vpack.c.bf16 %v325, %v318
      %v424 = vpack.c.bf16 %v326, %v319
      %v425 = vpack.c.bf16 %v334, %v327
      %v426 = vpack.c.bf16 %v335, %v328
      %v427 = vpack.c.bf16 %v336, %v329
      %v428 = vpack.c.bf16 %v337, %v330
      %v429 = vpack.c.bf16 %v338, %v331
      %v430 = vpack.c.bf16 %v339, %v332
      %v431 = vpack.c.bf16 %v340, %v333
      %v432 = vpack.c.bf16 %v348, %v341
      %v433 = vpack.c.bf16 %v349, %v342
      %v434 = vpack.c.bf16 %v350, %v343
      %v435 = vpack.c.bf16 %v351, %v344
      %v436 = vpack.c.bf16 %v352, %v345
      %v437 = vpack.c.bf16 %v353, %v346
      %v438 = vpack.c.bf16 %v354, %v347
      %v439 = vpack.c.bf16 %v362, %v355
      %v440 = vpack.c.bf16 %v363, %v356
      %v441 = vpack.c.bf16 %v364, %v357
      %v442 = vpack.c.bf16 %v365, %v358
      %v443 = vpack.c.bf16 %v366, %v359
      %v444 = vpack.c.bf16 %v367, %v360
      %v445 = vpack.c.bf16 %v368, %v361
      %v446 = vpack.c.bf16 %v376, %v369
      %v447 = vpack.c.bf16 %v377, %v370
      %v448 = vpack.c.bf16 %v378, %v371
      %v449 = vpack.c.bf16 %v379, %v372
      %v450 = vpack.c.bf16 %v380, %v373
      %v451 = vpack.c.bf16 %v381, %v374
      %v452 = vpack.c.bf16 %v382, %v375
      %v453 = vpack.c.bf16 %v390, %v383
      %v454 = vpack.c.bf16 %v391, %v384
      %v455 = vpack.c.bf16 %v392, %v385
      %v456 = vpack.c.bf16 %v393, %v386
      %v457 = vpack.c.bf16 %v394, %v387
      %v458 = vpack.c.bf16 %v395, %v388
      %v459 = vpack.c.bf16 %v396, %v389
      %v460 = vpack.c.bf16 %v404, %v397
      %v461 = vpack.c.bf16 %v405, %v398
      %v462 = vpack.c.bf16 %v406, %v399
      %v463 = vpack.c.bf16 %v407, %v400
      %v464 = vpack.c.bf16 %v408, %v401
      %v465 = vpack.c.bf16 %v409, %v402
      %v466 = vpack.c.bf16 %v410, %v403
      %v467 = vld [vmem:[%s271] sm:$0xff]
      %v468 = vld [vmem:[%s271 + $0x8] sm:$0xff]
      %v469 = vld [vmem:[%s271 + $0x10] sm:$0xff]
      %v470 = vld [vmem:[%s271 + $0x18] sm:$0xff]
      %v471 = vld [vmem:[%s271 + $0x20] sm:$0xff]
      %v472 = vld [vmem:[%s271 + $0x28] sm:$0xff]
      %v473 = vld [vmem:[%s271 + $0x30] sm:$0xff]
      %v474 = vld [vmem:[%s271 + $0x38] sm:$0xff]
      %v475 = vld [vmem:[%s271 + $0x40] sm:$0xff]
      %v476 = vld [vmem:[%s271 + $0x48] sm:$0xff]
      %v477 = vld [vmem:[%s271 + $0x50] sm:$0xff]
      %v478 = vld [vmem:[%s271 + $0x58] sm:$0xff]
      %v479 = vld [vmem:[%s271 + $0x60] sm:$0xff]
      %v480 = vld [vmem:[%s271 + $0x68] sm:$0xff]
      %v481 = vld [vmem:[%s271 + $0x70] sm:$0xff]
      %v482 = vld [vmem:[%s271 + $0x78] sm:$0xff]
      %v483 = vld [vmem:[%s271 + $0x80] sm:$0xff]
      %v484 = vld [vmem:[%s271 + $0x88] sm:$0xff]
      %v485 = vld [vmem:[%s271 + $0x90] sm:$0xff]
      %v486 = vld [vmem:[%s271 + $0x98] sm:$0xff]
      %v487 = vld [vmem:[%s271 + $0xa0] sm:$0xff]
      %v488 = vld [vmem:[%s271 + $0xa8] sm:$0xff]
      %v489 = vld [vmem:[%s271 + $0xb0] sm:$0xff]
      %v490 = vld [vmem:[%s271 + $0xb8] sm:$0xff]
      %v491 = vld [vmem:[%s271 + $0xc0] sm:$0xff]
      %v492 = vld [vmem:[%s271 + $0xc8] sm:$0xff]
      %v493 = vld [vmem:[%s271 + $0xd0] sm:$0xff]
      %v494 = vld [vmem:[%s271 + $0xd8] sm:$0xff]
      %v495 = vld [vmem:[%s271 + $0xe0] sm:$0xff]
      %v496 = vld [vmem:[%s271 + $0xe8] sm:$0xff]
      %v497 = vld [vmem:[%s271 + $0xf0] sm:$0xff]
      %v498 = vld [vmem:[%s271 + $0xf8] sm:$0xff]
      %v499 = vpack.c.bf16 %v468, %v467
      %v500 = vpack.c.bf16 %v470, %v469
      %v501 = vpack.c.bf16 %v472, %v471
      %v502 = vpack.c.bf16 %v474, %v473
      %v503 = vpack.c.bf16 %v476, %v475
      %v504 = vpack.c.bf16 %v478, %v477
      %v505 = vpack.c.bf16 %v480, %v479
      %v506 = vpack.c.bf16 %v482, %v481
      %v507 = vpack.c.bf16 %v484, %v483
      %v508 = vpack.c.bf16 %v486, %v485
      %v509 = vpack.c.bf16 %v488, %v487
      %v510 = vpack.c.bf16 %v490, %v489
      %v511 = vpack.c.bf16 %v492, %v491
      %v512 = vpack.c.bf16 %v494, %v493
      %v513 = vpack.c.bf16 %v496, %v495
      %v514 = vpack.c.bf16 %v498, %v497
      %515 = vmatpush.bf16.msra.mxu0 %v460
      %516 = vmatpush.bf16.msra.mxu0 %v453
      %517 = vmatpush.bf16.msra.mxu0 %v446
      %518 = vmatpush.bf16.msra.mxu0 %v439
      %519 = vmatpush.bf16.msra.mxu0 %v432
      %520 = vmatpush.bf16.msra.mxu0 %v425
      %521 = vmatpush.bf16.msra.mxu0 %v418
      %522 = vmatpush.bf16.msra.mxu0 %v411
      %523 = vmatmul.bf16.gmra.mxu0 %v499
      %v524 = vpop.f32.mrf.mxu0
      %v525 = vadd.f32 0.0, %v524
      %v526 = vpop.f32.mrf.mxu0
      %v527 = vadd.f32 0.0, %v526
      %528 = vmatmul.bf16.gmra.mxu0 %v500
      %v529 = vpop.f32.mrf.mxu0
      %v530 = vadd.f32 0.0, %v529
      %v531 = vpop.f32.mrf.mxu0
      %v532 = vadd.f32 0.0, %v531
      %533 = vmatmul.bf16.gmra.mxu0 %v501
      %v534 = vpop.f32.mrf.mxu0
      %v535 = vadd.f32 0.0, %v534
      %v536 = vpop.f32.mrf.mxu0
      %v537 = vadd.f32 0.0, %v536
      %538 = vmatmul.bf16.gmra.mxu0 %v502
      %v539 = vpop.f32.mrf.mxu0
      %v540 = vadd.f32 0.0, %v539
      %v541 = vpop.f32.mrf.mxu0
      %v542 = vadd.f32 0.0, %v541
      %543 = vmatmul.bf16.gmra.mxu0 %v503
      %v544 = vpop.f32.mrf.mxu0
      %v545 = vadd.f32 0.0, %v544
      %v546 = vpop.f32.mrf.mxu0
      %v547 = vadd.f32 0.0, %v546
      %548 = vmatmul.bf16.gmra.mxu0 %v504
      %v549 = vpop.f32.mrf.mxu0
      %v550 = vadd.f32 0.0, %v549
      %v551 = vpop.f32.mrf.mxu0
      %v552 = vadd.f32 0.0, %v551
      %553 = vmatmul.bf16.gmra.mxu0 %v505
      %v554 = vpop.f32.mrf.mxu0
      %v555 = vadd.f32 0.0, %v554
      %v556 = vpop.f32.mrf.mxu0
      %v557 = vadd.f32 0.0, %v556
      %558 = vmatmul.bf16.gmra.mxu0 %v506
      %v559 = vpop.f32.mrf.mxu0
      %v560 = vadd.f32 0.0, %v559
      %v561 = vpop.f32.mrf.mxu0
      %v562 = vadd.f32 0.0, %v561
      %563 = vmatmul.bf16.gmra.mxu0 %v507
      %v564 = vpop.f32.mrf.mxu0
      %v565 = vadd.f32 0.0, %v564
      %v566 = vpop.f32.mrf.mxu0
      %v567 = vadd.f32 0.0, %v566
      %568 = vmatmul.bf16.gmra.mxu0 %v508
      %v569 = vpop.f32.mrf.mxu0
      %v570 = vadd.f32 0.0, %v569
      %v571 = vpop.f32.mrf.mxu0
      %v572 = vadd.f32 0.0, %v571
      %573 = vmatmul.bf16.gmra.mxu0 %v509
      %v574 = vpop.f32.mrf.mxu0
      %v575 = vadd.f32 0.0, %v574
      %v576 = vpop.f32.mrf.mxu0
      %v577 = vadd.f32 0.0, %v576
      %578 = vmatmul.bf16.gmra.mxu0 %v510
      %v579 = vpop.f32.mrf.mxu0
      %v580 = vadd.f32 0.0, %v579
      %v581 = vpop.f32.mrf.mxu0
      %v582 = vadd.f32 0.0, %v581
      %583 = vmatmul.bf16.gmra.mxu0 %v511
      %v584 = vpop.f32.mrf.mxu0
      %v585 = vadd.f32 0.0, %v584
      %v586 = vpop.f32.mrf.mxu0
      %v587 = vadd.f32 0.0, %v586
      %588 = vmatmul.bf16.gmra.mxu0 %v512
      %v589 = vpop.f32.mrf.mxu0
      %v590 = vadd.f32 0.0, %v589
      %v591 = vpop.f32.mrf.mxu0
      %v592 = vadd.f32 0.0, %v591
      %593 = vmatmul.bf16.gmra.mxu0 %v513
      %v594 = vpop.f32.mrf.mxu0
      %v595 = vadd.f32 0.0, %v594
      %v596 = vpop.f32.mrf.mxu0
      %v597 = vadd.f32 0.0, %v596
      %598 = vmatmul.bf16.gmra.mxu0 %v514
      %v599 = vpop.f32.mrf.mxu0
      %v600 = vadd.f32 0.0, %v599
      %v601 = vpop.f32.mrf.mxu0
      %v602 = vadd.f32 0.0, %v601
      %603 = vdwg.mxu0
      %604 = vmatpush.bf16.msra.mxu0 %v461
      %605 = vmatpush.bf16.msra.mxu0 %v454
      %606 = vmatpush.bf16.msra.mxu0 %v447
      %607 = vmatpush.bf16.msra.mxu0 %v440
      %608 = vmatpush.bf16.msra.mxu0 %v433
      %609 = vmatpush.bf16.msra.mxu0 %v426
      %610 = vmatpush.bf16.msra.mxu0 %v419
      %611 = vmatpush.bf16.msra.mxu0 %v412
      %612 = vmatmul.bf16.gmra.mxu0 %v499
      %v613 = vpop.f32.mrf.mxu0
      %v614 = vadd.f32 0.0, %v613
      %v615 = vpop.f32.mrf.mxu0
      %v616 = vadd.f32 0.0, %v615
      %617 = vmatmul.bf16.gmra.mxu0 %v500
      %v618 = vpop.f32.mrf.mxu0
      %v619 = vadd.f32 0.0, %v618
      %v620 = vpop.f32.mrf.mxu0
      %v621 = vadd.f32 0.0, %v620
      %622 = vmatmul.bf16.gmra.mxu0 %v501
      %v623 = vpop.f32.mrf.mxu0
      %v624 = vadd.f32 0.0, %v623
      %v625 = vpop.f32.mrf.mxu0
      %v626 = vadd.f32 0.0, %v625
      %627 = vmatmul.bf16.gmra.mxu0 %v502
      %v628 = vpop.f32.mrf.mxu0
      %v629 = vadd.f32 0.0, %v628
      %v630 = vpop.f32.mrf.mxu0
      %v631 = vadd.f32 0.0, %v630
      %632 = vmatmul.bf16.gmra.mxu0 %v503
      %v633 = vpop.f32.mrf.mxu0
      %v634 = vadd.f32 0.0, %v633
      %v635 = vpop.f32.mrf.mxu0
      %v636 = vadd.f32 0.0, %v635
      %637 = vmatmul.bf16.gmra.mxu0 %v504
      %v638 = vpop.f32.mrf.mxu0
      %v639 = vadd.f32 0.0, %v638
      %v640 = vpop.f32.mrf.mxu0
      %v641 = vadd.f32 0.0, %v640
      %642 = vmatmul.bf16.gmra.mxu0 %v505
      %v643 = vpop.f32.mrf.mxu0
      %v644 = vadd.f32 0.0, %v643
      %v645 = vpop.f32.mrf.mxu0
      %v646 = vadd.f32 0.0, %v645
      %647 = vmatmul.bf16.gmra.mxu0 %v506
      %v648 = vpop.f32.mrf.mxu0
      %v649 = vadd.f32 0.0, %v648
      %v650 = vpop.f32.mrf.mxu0
      %v651 = vadd.f32 0.0, %v650
      %652 = vmatmul.bf16.gmra.mxu0 %v507
      %v653 = vpop.f32.mrf.mxu0
      %v654 = vadd.f32 0.0, %v653
      %v655 = vpop.f32.mrf.mxu0
      %v656 = vadd.f32 0.0, %v655
      %657 = vmatmul.bf16.gmra.mxu0 %v508
      %v658 = vpop.f32.mrf.mxu0
      %v659 = vadd.f32 0.0, %v658
      %v660 = vpop.f32.mrf.mxu0
      %v661 = vadd.f32 0.0, %v660
      %662 = vmatmul.bf16.gmra.mxu0 %v509
      %v663 = vpop.f32.mrf.mxu0
      %v664 = vadd.f32 0.0, %v663
      %v665 = vpop.f32.mrf.mxu0
      %v666 = vadd.f32 0.0, %v665
      %667 = vmatmul.bf16.gmra.mxu0 %v510
      %v668 = vpop.f32.mrf.mxu0
      %v669 = vadd.f32 0.0, %v668
      %v670 = vpop.f32.mrf.mxu0
      %v671 = vadd.f32 0.0, %v670
      %672 = vmatmul.bf16.gmra.mxu0 %v511
      %v673 = vpop.f32.mrf.mxu0
      %v674 = vadd.f32 0.0, %v673
      %v675 = vpop.f32.mrf.mxu0
      %v676 = vadd.f32 0.0, %v675
      %677 = vmatmul.bf16.gmra.mxu0 %v512
      %v678 = vpop.f32.mrf.mxu0
      %v679 = vadd.f32 0.0, %v678
      %v680 = vpop.f32.mrf.mxu0
      %v681 = vadd.f32 0.0, %v680
      %682 = vmatmul.bf16.gmra.mxu0 %v513
      %v683 = vpop.f32.mrf.mxu0
      %v684 = vadd.f32 0.0, %v683
      %v685 = vpop.f32.mrf.mxu0
      %v686 = vadd.f32 0.0, %v685
      %687 = vmatmul.bf16.gmra.mxu0 %v514
      %v688 = vpop.f32.mrf.mxu0
      %v689 = vadd.f32 0.0, %v688
      %v690 = vpop.f32.mrf.mxu0
      %v691 = vadd.f32 0.0, %v690
      %692 = vdwg.mxu0
      %693 = vmatpush.bf16.msra.mxu0 %v462
      %694 = vmatpush.bf16.msra.mxu0 %v455
      %695 = vmatpush.bf16.msra.mxu0 %v448
      %696 = vmatpush.bf16.msra.mxu0 %v441
      %697 = vmatpush.bf16.msra.mxu0 %v434
      %698 = vmatpush.bf16.msra.mxu0 %v427
      %699 = vmatpush.bf16.msra.mxu0 %v420
      %700 = vmatpush.bf16.msra.mxu0 %v413
      %701 = vmatmul.bf16.gmra.mxu0 %v499
      %v702 = vpop.f32.mrf.mxu0
      %v703 = vadd.f32 0.0, %v702
      %v704 = vpop.f32.mrf.mxu0
      %v705 = vadd.f32 0.0, %v704
      %706 = vmatmul.bf16.gmra.mxu0 %v500
      %v707 = vpop.f32.mrf.mxu0
      %v708 = vadd.f32 0.0, %v707
      %v709 = vpop.f32.mrf.mxu0
      %v710 = vadd.f32 0.0, %v709
      %711 = vmatmul.bf16.gmra.mxu0 %v501
      %v712 = vpop.f32.mrf.mxu0
      %v713 = vadd.f32 0.0, %v712
      %v714 = vpop.f32.mrf.mxu0
      %v715 = vadd.f32 0.0, %v714
      %716 = vmatmul.bf16.gmra.mxu0 %v502
      %v717 = vpop.f32.mrf.mxu0
      %v718 = vadd.f32 0.0, %v717
      %v719 = vpop.f32.mrf.mxu0
      %v720 = vadd.f32 0.0, %v719
      %721 = vmatmul.bf16.gmra.mxu0 %v503
      %v722 = vpop.f32.mrf.mxu0
      %v723 = vadd.f32 0.0, %v722
      %v724 = vpop.f32.mrf.mxu0
      %v725 = vadd.f32 0.0, %v724
      %726 = vmatmul.bf16.gmra.mxu0 %v504
      %v727 = vpop.f32.mrf.mxu0
      %v728 = vadd.f32 0.0, %v727
      %v729 = vpop.f32.mrf.mxu0
      %v730 = vadd.f32 0.0, %v729
      %731 = vmatmul.bf16.gmra.mxu0 %v505
      %v732 = vpop.f32.mrf.mxu0
      %v733 = vadd.f32 0.0, %v732
      %v734 = vpop.f32.mrf.mxu0
      %v735 = vadd.f32 0.0, %v734
      %736 = vmatmul.bf16.gmra.mxu0 %v506
      %v737 = vpop.f32.mrf.mxu0
      %v738 = vadd.f32 0.0, %v737
      %v739 = vpop.f32.mrf.mxu0
      %v740 = vadd.f32 0.0, %v739
      %741 = vmatmul.bf16.gmra.mxu0 %v507
      %v742 = vpop.f32.mrf.mxu0
      %v743 = vadd.f32 0.0, %v742
      %v744 = vpop.f32.mrf.mxu0
      %v745 = vadd.f32 0.0, %v744
      %746 = vmatmul.bf16.gmra.mxu0 %v508
      %v747 = vpop.f32.mrf.mxu0
      %v748 = vadd.f32 0.0, %v747
      %v749 = vpop.f32.mrf.mxu0
      %v750 = vadd.f32 0.0, %v749
      %751 = vmatmul.bf16.gmra.mxu0 %v509
      %v752 = vpop.f32.mrf.mxu0
      %v753 = vadd.f32 0.0, %v752
      %v754 = vpop.f32.mrf.mxu0
      %v755 = vadd.f32 0.0, %v754
      %756 = vmatmul.bf16.gmra.mxu0 %v510
      %v757 = vpop.f32.mrf.mxu0
      %v758 = vadd.f32 0.0, %v757
      %v759 = vpop.f32.mrf.mxu0
      %v760 = vadd.f32 0.0, %v759
      %761 = vmatmul.bf16.gmra.mxu0 %v511
      %v762 = vpop.f32.mrf.mxu0
      %v763 = vadd.f32 0.0, %v762
      %v764 = vpop.f32.mrf.mxu0
      %v765 = vadd.f32 0.0, %v764
      %766 = vmatmul.bf16.gmra.mxu0 %v512
      %v767 = vpop.f32.mrf.mxu0
      %v768 = vadd.f32 0.0, %v767
      %v769 = vpop.f32.mrf.mxu0
      %v770 = vadd.f32 0.0, %v769
      %771 = vmatmul.bf16.gmra.mxu0 %v513
      %v772 = vpop.f32.mrf.mxu0
      %v773 = vadd.f32 0.0, %v772
      %v774 = vpop.f32.mrf.mxu0
      %v775 = vadd.f32 0.0, %v774
      %776 = vmatmul.bf16.gmra.mxu0 %v514
      %v777 = vpop.f32.mrf.mxu0
      %v778 = vadd.f32 0.0, %v777
      %v779 = vpop.f32.mrf.mxu0
      %v780 = vadd.f32 0.0, %v779
      %781 = vdwg.mxu0
      %782 = vmatpush.bf16.msra.mxu0 %v463
      %783 = vmatpush.bf16.msra.mxu0 %v456
      %784 = vmatpush.bf16.msra.mxu0 %v449
      %785 = vmatpush.bf16.msra.mxu0 %v442
      %786 = vmatpush.bf16.msra.mxu0 %v435
      %787 = vmatpush.bf16.msra.mxu0 %v428
      %788 = vmatpush.bf16.msra.mxu0 %v421
      %789 = vmatpush.bf16.msra.mxu0 %v414
      %790 = vmatmul.bf16.gmra.mxu0 %v499
      %v791 = vpop.f32.mrf.mxu0
      %v792 = vadd.f32 0.0, %v791
      %v793 = vpop.f32.mrf.mxu0
      %v794 = vadd.f32 0.0, %v793
      %795 = vmatmul.bf16.gmra.mxu0 %v500
      %v796 = vpop.f32.mrf.mxu0
      %v797 = vadd.f32 0.0, %v796
      %v798 = vpop.f32.mrf.mxu0
      %v799 = vadd.f32 0.0, %v798
      %800 = vmatmul.bf16.gmra.mxu0 %v501
      %v801 = vpop.f32.mrf.mxu0
      %v802 = vadd.f32 0.0, %v801
      %v803 = vpop.f32.mrf.mxu0
      %v804 = vadd.f32 0.0, %v803
      %805 = vmatmul.bf16.gmra.mxu0 %v502
      %v806 = vpop.f32.mrf.mxu0
      %v807 = vadd.f32 0.0, %v806
      %v808 = vpop.f32.mrf.mxu0
      %v809 = vadd.f32 0.0, %v808
      %810 = vmatmul.bf16.gmra.mxu0 %v503
      %v811 = vpop.f32.mrf.mxu0
      %v812 = vadd.f32 0.0, %v811
      %v813 = vpop.f32.mrf.mxu0
      %v814 = vadd.f32 0.0, %v813
      %815 = vmatmul.bf16.gmra.mxu0 %v504
      %v816 = vpop.f32.mrf.mxu0
      %v817 = vadd.f32 0.0, %v816
      %v818 = vpop.f32.mrf.mxu0
      %v819 = vadd.f32 0.0, %v818
      %820 = vmatmul.bf16.gmra.mxu0 %v505
      %v821 = vpop.f32.mrf.mxu0
      %v822 = vadd.f32 0.0, %v821
      %v823 = vpop.f32.mrf.mxu0
      %v824 = vadd.f32 0.0, %v823
      %825 = vmatmul.bf16.gmra.mxu0 %v506
      %v826 = vpop.f32.mrf.mxu0
      %v827 = vadd.f32 0.0, %v826
      %v828 = vpop.f32.mrf.mxu0
      %v829 = vadd.f32 0.0, %v828
      %830 = vmatmul.bf16.gmra.mxu0 %v507
      %v831 = vpop.f32.mrf.mxu0
      %v832 = vadd.f32 0.0, %v831
      %v833 = vpop.f32.mrf.mxu0
      %v834 = vadd.f32 0.0, %v833
      %835 = vmatmul.bf16.gmra.mxu0 %v508
      %v836 = vpop.f32.mrf.mxu0
      %v837 = vadd.f32 0.0, %v836
      %v838 = vpop.f32.mrf.mxu0
      %v839 = vadd.f32 0.0, %v838
      %840 = vmatmul.bf16.gmra.mxu0 %v509
      %v841 = vpop.f32.mrf.mxu0
      %v842 = vadd.f32 0.0, %v841
      %v843 = vpop.f32.mrf.mxu0
      %v844 = vadd.f32 0.0, %v843
      %845 = vmatmul.bf16.gmra.mxu0 %v510
      %v846 = vpop.f32.mrf.mxu0
      %v847 = vadd.f32 0.0, %v846
      %v848 = vpop.f32.mrf.mxu0
      %v849 = vadd.f32 0.0, %v848
      %850 = vmatmul.bf16.gmra.mxu0 %v511
      %v851 = vpop.f32.mrf.mxu0
      %v852 = vadd.f32 0.0, %v851
      %v853 = vpop.f32.mrf.mxu0
      %v854 = vadd.f32 0.0, %v853
      %855 = vmatmul.bf16.gmra.mxu0 %v512
      %v856 = vpop.f32.mrf.mxu0
      %v857 = vadd.f32 0.0, %v856
      %v858 = vpop.f32.mrf.mxu0
      %v859 = vadd.f32 0.0, %v858
      %860 = vmatmul.bf16.gmra.mxu0 %v513
      %v861 = vpop.f32.mrf.mxu0
      %v862 = vadd.f32 0.0, %v861
      %v863 = vpop.f32.mrf.mxu0
      %v864 = vadd.f32 0.0, %v863
      %865 = vmatmul.bf16.gmra.mxu0 %v514
      %v866 = vpop.f32.mrf.mxu0
      %v867 = vadd.f32 0.0, %v866
      %v868 = vpop.f32.mrf.mxu0
      %v869 = vadd.f32 0.0, %v868
      %870 = vdwg.mxu0
      %871 = vmatpush.bf16.msra.mxu0 %v464
      %872 = vmatpush.bf16.msra.mxu0 %v457
      %873 = vmatpush.bf16.msra.mxu0 %v450
      %874 = vmatpush.bf16.msra.mxu0 %v443
      %875 = vmatpush.bf16.msra.mxu0 %v436
      %876 = vmatpush.bf16.msra.mxu0 %v429
      %877 = vmatpush.bf16.msra.mxu0 %v422
      %878 = vmatpush.bf16.msra.mxu0 %v415
      %879 = vmatmul.bf16.gmra.mxu0 %v499
      %v880 = vpop.f32.mrf.mxu0
      %v881 = vadd.f32 0.0, %v880
      %v882 = vpop.f32.mrf.mxu0
      %v883 = vadd.f32 0.0, %v882
      %884 = vmatmul.bf16.gmra.mxu0 %v500
      %v885 = vpop.f32.mrf.mxu0
      %v886 = vadd.f32 0.0, %v885
      %v887 = vpop.f32.mrf.mxu0
      %v888 = vadd.f32 0.0, %v887
      %889 = vmatmul.bf16.gmra.mxu0 %v501
      %v890 = vpop.f32.mrf.mxu0
      %v891 = vadd.f32 0.0, %v890
      %v892 = vpop.f32.mrf.mxu0
      %v893 = vadd.f32 0.0, %v892
      %894 = vmatmul.bf16.gmra.mxu0 %v502
      %v895 = vpop.f32.mrf.mxu0
      %v896 = vadd.f32 0.0, %v895
      %v897 = vpop.f32.mrf.mxu0
      %v898 = vadd.f32 0.0, %v897
      %899 = vmatmul.bf16.gmra.mxu0 %v503
      %v900 = vpop.f32.mrf.mxu0
      %v901 = vadd.f32 0.0, %v900
      %v902 = vpop.f32.mrf.mxu0
      %v903 = vadd.f32 0.0, %v902
      %904 = vmatmul.bf16.gmra.mxu0 %v504
      %v905 = vpop.f32.mrf.mxu0
      %v906 = vadd.f32 0.0, %v905
      %v907 = vpop.f32.mrf.mxu0
      %v908 = vadd.f32 0.0, %v907
      %909 = vmatmul.bf16.gmra.mxu0 %v505
      %v910 = vpop.f32.mrf.mxu0
      %v911 = vadd.f32 0.0, %v910
      %v912 = vpop.f32.mrf.mxu0
      %v913 = vadd.f32 0.0, %v912
      %914 = vmatmul.bf16.gmra.mxu0 %v506
      %v915 = vpop.f32.mrf.mxu0
      %v916 = vadd.f32 0.0, %v915
      %v917 = vpop.f32.mrf.mxu0
      %v918 = vadd.f32 0.0, %v917
      %919 = vmatmul.bf16.gmra.mxu0 %v507
      %v920 = vpop.f32.mrf.mxu0
      %v921 = vadd.f32 0.0, %v920
      %v922 = vpop.f32.mrf.mxu0
      %v923 = vadd.f32 0.0, %v922
      %924 = vmatmul.bf16.gmra.mxu0 %v508
      %v925 = vpop.f32.mrf.mxu0
      %v926 = vadd.f32 0.0, %v925
      %v927 = vpop.f32.mrf.mxu0
      %v928 = vadd.f32 0.0, %v927
      %929 = vmatmul.bf16.gmra.mxu0 %v509
      %v930 = vpop.f32.mrf.mxu0
      %v931 = vadd.f32 0.0, %v930
      %v932 = vpop.f32.mrf.mxu0
      %v933 = vadd.f32 0.0, %v932
      %934 = vmatmul.bf16.gmra.mxu0 %v510
      %v935 = vpop.f32.mrf.mxu0
      %v936 = vadd.f32 0.0, %v935
      %v937 = vpop.f32.mrf.mxu0
      %v938 = vadd.f32 0.0, %v937
      %939 = vmatmul.bf16.gmra.mxu0 %v511
      %v940 = vpop.f32.mrf.mxu0
      %v941 = vadd.f32 0.0, %v940
      %v942 = vpop.f32.mrf.mxu0
      %v943 = vadd.f32 0.0, %v942
      %944 = vmatmul.bf16.gmra.mxu0 %v512
      %v945 = vpop.f32.mrf.mxu0
      %v946 = vadd.f32 0.0, %v945
      %v947 = vpop.f32.mrf.mxu0
      %v948 = vadd.f32 0.0, %v947
      %949 = vmatmul.bf16.gmra.mxu0 %v513
      %v950 = vpop.f32.mrf.mxu0
      %v951 = vadd.f32 0.0, %v950
      %v952 = vpop.f32.mrf.mxu0
      %v953 = vadd.f32 0.0, %v952
      %954 = vmatmul.bf16.gmra.mxu0 %v514
      %v955 = vpop.f32.mrf.mxu0
      %v956 = vadd.f32 0.0, %v955
      %v957 = vpop.f32.mrf.mxu0
      %v958 = vadd.f32 0.0, %v957
      %959 = vdwg.mxu0
      %960 = vmatpush.bf16.msra.mxu0 %v465
      %961 = vmatpush.bf16.msra.mxu0 %v458
      %962 = vmatpush.bf16.msra.mxu0 %v451
      %963 = vmatpush.bf16.msra.mxu0 %v444
      %964 = vmatpush.bf16.msra.mxu0 %v437
      %965 = vmatpush.bf16.msra.mxu0 %v430
      %966 = vmatpush.bf16.msra.mxu0 %v423
      %967 = vmatpush.bf16.msra.mxu0 %v416
      %968 = vmatmul.bf16.gmra.mxu0 %v499
      %v969 = vpop.f32.mrf.mxu0
      %v970 = vadd.f32 0.0, %v969
      %v971 = vpop.f32.mrf.mxu0
      %v972 = vadd.f32 0.0, %v971
      %973 = vmatmul.bf16.gmra.mxu0 %v500
      %v974 = vpop.f32.mrf.mxu0
      %v975 = vadd.f32 0.0, %v974
      %v976 = vpop.f32.mrf.mxu0
      %v977 = vadd.f32 0.0, %v976
      %978 = vmatmul.bf16.gmra.mxu0 %v501
      %v979 = vpop.f32.mrf.mxu0
      %v980 = vadd.f32 0.0, %v979
      %v981 = vpop.f32.mrf.mxu0
      %v982 = vadd.f32 0.0, %v981
      %983 = vmatmul.bf16.gmra.mxu0 %v502
      %v984 = vpop.f32.mrf.mxu0
      %v985 = vadd.f32 0.0, %v984
      %v986 = vpop.f32.mrf.mxu0
      %v987 = vadd.f32 0.0, %v986
      %988 = vmatmul.bf16.gmra.mxu0 %v503
      %v989 = vpop.f32.mrf.mxu0
      %v990 = vadd.f32 0.0, %v989
      %v991 = vpop.f32.mrf.mxu0
      %v992 = vadd.f32 0.0, %v991
      %993 = vmatmul.bf16.gmra.mxu0 %v504
      %v994 = vpop.f32.mrf.mxu0
      %v995 = vadd.f32 0.0, %v994
      %v996 = vpop.f32.mrf.mxu0
      %v997 = vadd.f32 0.0, %v996
      %998 = vmatmul.bf16.gmra.mxu0 %v505
      %v999 = vpop.f32.mrf.mxu0
      %v1000 = vadd.f32 0.0, %v999
      %v1001 = vpop.f32.mrf.mxu0
      %v1002 = vadd.f32 0.0, %v1001
      %1003 = vmatmul.bf16.gmra.mxu0 %v506
      %v1004 = vpop.f32.mrf.mxu0
      %v1005 = vadd.f32 0.0, %v1004
      %v1006 = vpop.f32.mrf.mxu0
      %v1007 = vadd.f32 0.0, %v1006
      %1008 = vmatmul.bf16.gmra.mxu0 %v507
      %v1009 = vpop.f32.mrf.mxu0
      %v1010 = vadd.f32 0.0, %v1009
      %v1011 = vpop.f32.mrf.mxu0
      %v1012 = vadd.f32 0.0, %v1011
      %1013 = vmatmul.bf16.gmra.mxu0 %v508
      %v1014 = vpop.f32.mrf.mxu0
      %v1015 = vadd.f32 0.0, %v1014
      %v1016 = vpop.f32.mrf.mxu0
      %v1017 = vadd.f32 0.0, %v1016
      %1018 = vmatmul.bf16.gmra.mxu0 %v509
      %v1019 = vpop.f32.mrf.mxu0
      %v1020 = vadd.f32 0.0, %v1019
      %v1021 = vpop.f32.mrf.mxu0
      %v1022 = vadd.f32 0.0, %v1021
      %1023 = vmatmul.bf16.gmra.mxu0 %v510
      %v1024 = vpop.f32.mrf.mxu0
      %v1025 = vadd.f32 0.0, %v1024
      %v1026 = vpop.f32.mrf.mxu0
      %v1027 = vadd.f32 0.0, %v1026
      %1028 = vmatmul.bf16.gmra.mxu0 %v511
      %v1029 = vpop.f32.mrf.mxu0
      %v1030 = vadd.f32 0.0, %v1029
      %v1031 = vpop.f32.mrf.mxu0
      %v1032 = vadd.f32 0.0, %v1031
      %1033 = vmatmul.bf16.gmra.mxu0 %v512
      %v1034 = vpop.f32.mrf.mxu0
      %v1035 = vadd.f32 0.0, %v1034
      %v1036 = vpop.f32.mrf.mxu0
      %v1037 = vadd.f32 0.0, %v1036
      %1038 = vmatmul.bf16.gmra.mxu0 %v513
      %v1039 = vpop.f32.mrf.mxu0
      %v1040 = vadd.f32 0.0, %v1039
      %v1041 = vpop.f32.mrf.mxu0
      %v1042 = vadd.f32 0.0, %v1041
      %1043 = vmatmul.bf16.gmra.mxu0 %v514
      %v1044 = vpop.f32.mrf.mxu0
      %v1045 = vadd.f32 0.0, %v1044
      %v1046 = vpop.f32.mrf.mxu0
      %v1047 = vadd.f32 0.0, %v1046
      %1048 = vdwg.mxu0
      %1049 = vmatpush.bf16.msra.mxu0 %v466
      %1050 = vmatpush.bf16.msra.mxu0 %v459
      %1051 = vmatpush.bf16.msra.mxu0 %v452
      %1052 = vmatpush.bf16.msra.mxu0 %v445
      %1053 = vmatpush.bf16.msra.mxu0 %v438
      %1054 = vmatpush.bf16.msra.mxu0 %v431
      %1055 = vmatpush.bf16.msra.mxu0 %v424
      %1056 = vmatpush.bf16.msra.mxu0 %v417
      %1057 = vmatmul.bf16.gmra.mxu0 %v499
      %v1058 = vpop.f32.mrf.mxu0
      %v1059 = vadd.f32 0.0, %v1058
      %v1060 = vpop.f32.mrf.mxu0
      %v1061 = vadd.f32 0.0, %v1060
      %1062 = vmatmul.bf16.gmra.mxu0 %v500
      %v1063 = vpop.f32.mrf.mxu0
      %v1064 = vadd.f32 0.0, %v1063
      %v1065 = vpop.f32.mrf.mxu0
      %v1066 = vadd.f32 0.0, %v1065
      %1067 = vmatmul.bf16.gmra.mxu0 %v501
      %v1068 = vpop.f32.mrf.mxu0
      %v1069 = vadd.f32 0.0, %v1068
      %v1070 = vpop.f32.mrf.mxu0
      %v1071 = vadd.f32 0.0, %v1070
      %1072 = vmatmul.bf16.gmra.mxu0 %v502
      %v1073 = vpop.f32.mrf.mxu0
      %v1074 = vadd.f32 0.0, %v1073
      %v1075 = vpop.f32.mrf.mxu0
      %v1076 = vadd.f32 0.0, %v1075
      %1077 = vmatmul.bf16.gmra.mxu0 %v503
      %v1078 = vpop.f32.mrf.mxu0
      %v1079 = vadd.f32 0.0, %v1078
      %v1080 = vpop.f32.mrf.mxu0
      %v1081 = vadd.f32 0.0, %v1080
      %1082 = vmatmul.bf16.gmra.mxu0 %v504
      %v1083 = vpop.f32.mrf.mxu0
      %v1084 = vadd.f32 0.0, %v1083
      %v1085 = vpop.f32.mrf.mxu0
      %v1086 = vadd.f32 0.0, %v1085
      %1087 = vmatmul.bf16.gmra.mxu0 %v505
      %v1088 = vpop.f32.mrf.mxu0
      %v1089 = vadd.f32 0.0, %v1088
      %v1090 = vpop.f32.mrf.mxu0
      %v1091 = vadd.f32 0.0, %v1090
      %1092 = vmatmul.bf16.gmra.mxu0 %v506
      %v1093 = vpop.f32.mrf.mxu0
      %v1094 = vadd.f32 0.0, %v1093
      %v1095 = vpop.f32.mrf.mxu0
      %v1096 = vadd.f32 0.0, %v1095
      %1097 = vmatmul.bf16.gmra.mxu0 %v507
      %v1098 = vpop.f32.mrf.mxu0
      %v1099 = vadd.f32 0.0, %v1098
      %v1100 = vpop.f32.mrf.mxu0
      %v1101 = vadd.f32 0.0, %v1100
      %1102 = vmatmul.bf16.gmra.mxu0 %v508
      %v1103 = vpop.f32.mrf.mxu0
      %v1104 = vadd.f32 0.0, %v1103
      %v1105 = vpop.f32.mrf.mxu0
      %v1106 = vadd.f32 0.0, %v1105
      %1107 = vmatmul.bf16.gmra.mxu0 %v509
      %v1108 = vpop.f32.mrf.mxu0
      %v1109 = vadd.f32 0.0, %v1108
      %v1110 = vpop.f32.mrf.mxu0
      %v1111 = vadd.f32 0.0, %v1110
      %1112 = vmatmul.bf16.gmra.mxu0 %v510
      %v1113 = vpop.f32.mrf.mxu0
      %v1114 = vadd.f32 0.0, %v1113
      %v1115 = vpop.f32.mrf.mxu0
      %v1116 = vadd.f32 0.0, %v1115
      %1117 = vmatmul.bf16.gmra.mxu0 %v511
      %v1118 = vpop.f32.mrf.mxu0
      %v1119 = vadd.f32 0.0, %v1118
      %v1120 = vpop.f32.mrf.mxu0
      %v1121 = vadd.f32 0.0, %v1120
      %1122 = vmatmul.bf16.gmra.mxu0 %v512
      %v1123 = vpop.f32.mrf.mxu0
      %v1124 = vadd.f32 0.0, %v1123
      %v1125 = vpop.f32.mrf.mxu0
      %v1126 = vadd.f32 0.0, %v1125
      %1127 = vmatmul.bf16.gmra.mxu0 %v513
      %v1128 = vpop.f32.mrf.mxu0
      %v1129 = vadd.f32 0.0, %v1128
      %v1130 = vpop.f32.mrf.mxu0
      %v1131 = vadd.f32 0.0, %v1130
      %1132 = vmatmul.bf16.gmra.mxu0 %v514
      %v1133 = vpop.f32.mrf.mxu0
      %v1134 = vadd.f32 0.0, %v1133
      %v1135 = vpop.f32.mrf.mxu0
      %v1136 = vadd.f32 0.0, %v1135
      %1137 = vdwg.mxu0
      %v1138 = vadd.f32 %v525, %v614
      %v1139 = vadd.f32 %v1138, %v703
      %v1140 = vadd.f32 %v1139, %v792
      %v1141 = vadd.f32 %v1140, %v881
      %v1142 = vadd.f32 %v1141, %v970
      %vm1143 = vcmask 130048
      %v1144 = vsel %vm1143, %v1059, 0.0
      %v1145 = vadd.f32 %v1142, %v1144
      %1146 = vadd.xlane.f32.xlu0 %v1145
      %v1147 = vpop.xlane.xlu0 %1146
      %v1148 = vadd.f32 %v527, %v616
      %v1149 = vadd.f32 %v1148, %v705
      %v1150 = vadd.f32 %v1149, %v794
      %v1151 = vadd.f32 %v1150, %v883
      %v1152 = vadd.f32 %v1151, %v972
      %v1153 = vsel %vm1143, %v1061, 0.0
      %v1154 = vadd.f32 %v1152, %v1153
      %1155 = vadd.xlane.f32.xlu0 %v1154
      %v1156 = vpop.xlane.xlu0 %1155
      %v1157 = vadd.f32 %v530, %v619
      %v1158 = vadd.f32 %v1157, %v708
      %v1159 = vadd.f32 %v1158, %v797
      %v1160 = vadd.f32 %v1159, %v886
      %v1161 = vadd.f32 %v1160, %v975
      %v1162 = vsel %vm1143, %v1064, 0.0
      %v1163 = vadd.f32 %v1161, %v1162
      %1164 = vadd.xlane.f32.xlu0 %v1163
      %v1165 = vpop.xlane.xlu0 %1164
      %v1166 = vadd.f32 %v532, %v621
      %v1167 = vadd.f32 %v1166, %v710
      %v1168 = vadd.f32 %v1167, %v799
      %v1169 = vadd.f32 %v1168, %v888
      %v1170 = vadd.f32 %v1169, %v977
      %v1171 = vsel %vm1143, %v1066, 0.0
      %v1172 = vadd.f32 %v1170, %v1171
      %1173 = vadd.xlane.f32.xlu0 %v1172
      %v1174 = vpop.xlane.xlu0 %1173
      %v1175 = vadd.f32 %v535, %v624
      %v1176 = vadd.f32 %v1175, %v713
      %v1177 = vadd.f32 %v1176, %v802
      %v1178 = vadd.f32 %v1177, %v891
      %v1179 = vadd.f32 %v1178, %v980
      %v1180 = vsel %vm1143, %v1069, 0.0
      %v1181 = vadd.f32 %v1179, %v1180
      %1182 = vadd.xlane.f32.xlu0 %v1181
      %v1183 = vpop.xlane.xlu0 %1182
      %v1184 = vadd.f32 %v537, %v626
      %v1185 = vadd.f32 %v1184, %v715
      %v1186 = vadd.f32 %v1185, %v804
      %v1187 = vadd.f32 %v1186, %v893
      %v1188 = vadd.f32 %v1187, %v982
      %v1189 = vsel %vm1143, %v1071, 0.0
      %v1190 = vadd.f32 %v1188, %v1189
      %1191 = vadd.xlane.f32.xlu0 %v1190
      %v1192 = vpop.xlane.xlu0 %1191
      %v1193 = vadd.f32 %v540, %v629
      %v1194 = vadd.f32 %v1193, %v718
      %v1195 = vadd.f32 %v1194, %v807
      %v1196 = vadd.f32 %v1195, %v896
      %v1197 = vadd.f32 %v1196, %v985
      %v1198 = vsel %vm1143, %v1074, 0.0
      %v1199 = vadd.f32 %v1197, %v1198
      %1200 = vadd.xlane.f32.xlu0 %v1199
      %v1201 = vpop.xlane.xlu0 %1200
      %v1202 = vadd.f32 %v542, %v631
      %v1203 = vadd.f32 %v1202, %v720
      %v1204 = vadd.f32 %v1203, %v809
      %v1205 = vadd.f32 %v1204, %v898
      %v1206 = vadd.f32 %v1205, %v987
      %v1207 = vsel %vm1143, %v1076, 0.0
      %v1208 = vadd.f32 %v1206, %v1207
      %1209 = vadd.xlane.f32.xlu0 %v1208
      %v1210 = vpop.xlane.xlu0 %1209
      %v1211 = vadd.f32 %v545, %v634
      %v1212 = vadd.f32 %v1211, %v723
      %v1213 = vadd.f32 %v1212, %v812
      %v1214 = vadd.f32 %v1213, %v901
      %v1215 = vadd.f32 %v1214, %v990
      %v1216 = vsel %vm1143, %v1079, 0.0
      %v1217 = vadd.f32 %v1215, %v1216
      %1218 = vadd.xlane.f32.xlu0 %v1217
      %v1219 = vpop.xlane.xlu0 %1218
      %v1220 = vadd.f32 %v547, %v636
      %v1221 = vadd.f32 %v1220, %v725
      %v1222 = vadd.f32 %v1221, %v814
      %v1223 = vadd.f32 %v1222, %v903
      %v1224 = vadd.f32 %v1223, %v992
      %v1225 = vsel %vm1143, %v1081, 0.0
      %v1226 = vadd.f32 %v1224, %v1225
      %1227 = vadd.xlane.f32.xlu0 %v1226
      %v1228 = vpop.xlane.xlu0 %1227
      %v1229 = vadd.f32 %v550, %v639
      %v1230 = vadd.f32 %v1229, %v728
      %v1231 = vadd.f32 %v1230, %v817
      %v1232 = vadd.f32 %v1231, %v906
      %v1233 = vadd.f32 %v1232, %v995
      %v1234 = vsel %vm1143, %v1084, 0.0
      %v1235 = vadd.f32 %v1233, %v1234
      %1236 = vadd.xlane.f32.xlu0 %v1235
      %v1237 = vpop.xlane.xlu0 %1236
      %v1238 = vadd.f32 %v552, %v641
      %v1239 = vadd.f32 %v1238, %v730
      %v1240 = vadd.f32 %v1239, %v819
      %v1241 = vadd.f32 %v1240, %v908
      %v1242 = vadd.f32 %v1241, %v997
      %v1243 = vsel %vm1143, %v1086, 0.0
      %v1244 = vadd.f32 %v1242, %v1243
      %1245 = vadd.xlane.f32.xlu0 %v1244
      %v1246 = vpop.xlane.xlu0 %1245
      %v1247 = vadd.f32 %v555, %v644
      %v1248 = vadd.f32 %v1247, %v733
      %v1249 = vadd.f32 %v1248, %v822
      %v1250 = vadd.f32 %v1249, %v911
      %v1251 = vadd.f32 %v1250, %v1000
      %v1252 = vsel %vm1143, %v1089, 0.0
      %v1253 = vadd.f32 %v1251, %v1252
      %1254 = vadd.xlane.f32.xlu0 %v1253
      %v1255 = vpop.xlane.xlu0 %1254
      %v1256 = vadd.f32 %v557, %v646
      %v1257 = vadd.f32 %v1256, %v735
      %v1258 = vadd.f32 %v1257, %v824
      %v1259 = vadd.f32 %v1258, %v913
      %v1260 = vadd.f32 %v1259, %v1002
      %v1261 = vsel %vm1143, %v1091, 0.0
      %v1262 = vadd.f32 %v1260, %v1261
      %1263 = vadd.xlane.f32.xlu0 %v1262
      %v1264 = vpop.xlane.xlu0 %1263
      %v1265 = vadd.f32 %v560, %v649
      %v1266 = vadd.f32 %v1265, %v738
      %v1267 = vadd.f32 %v1266, %v827
      %v1268 = vadd.f32 %v1267, %v916
      %v1269 = vadd.f32 %v1268, %v1005
      %v1270 = vsel %vm1143, %v1094, 0.0
      %v1271 = vadd.f32 %v1269, %v1270
      %1272 = vadd.xlane.f32.xlu0 %v1271
      %v1273 = vpop.xlane.xlu0 %1272
      %v1274 = vadd.f32 %v562, %v651
      %v1275 = vadd.f32 %v1274, %v740
      %v1276 = vadd.f32 %v1275, %v829
      %v1277 = vadd.f32 %v1276, %v918
      %v1278 = vadd.f32 %v1277, %v1007
      %v1279 = vsel %vm1143, %v1096, 0.0
      %v1280 = vadd.f32 %v1278, %v1279
      %1281 = vadd.xlane.f32.xlu0 %v1280
      %v1282 = vpop.xlane.xlu0 %1281
      %v1283 = vadd.f32 %v565, %v654
      %v1284 = vadd.f32 %v1283, %v743
      %v1285 = vadd.f32 %v1284, %v832
      %v1286 = vadd.f32 %v1285, %v921
      %v1287 = vadd.f32 %v1286, %v1010
      %v1288 = vsel %vm1143, %v1099, 0.0
      %v1289 = vadd.f32 %v1287, %v1288
      %1290 = vadd.xlane.f32.xlu0 %v1289
      %v1291 = vpop.xlane.xlu0 %1290
      %v1292 = vadd.f32 %v567, %v656
      %v1293 = vadd.f32 %v1292, %v745
      %v1294 = vadd.f32 %v1293, %v834
      %v1295 = vadd.f32 %v1294, %v923
      %v1296 = vadd.f32 %v1295, %v1012
      %v1297 = vsel %vm1143, %v1101, 0.0
      %v1298 = vadd.f32 %v1296, %v1297
      %1299 = vadd.xlane.f32.xlu0 %v1298
      %v1300 = vpop.xlane.xlu0 %1299
      %v1301 = vadd.f32 %v570, %v659
      %v1302 = vadd.f32 %v1301, %v748
      %v1303 = vadd.f32 %v1302, %v837
      %v1304 = vadd.f32 %v1303, %v926
      %v1305 = vadd.f32 %v1304, %v1015
      %v1306 = vsel %vm1143, %v1104, 0.0
      %v1307 = vadd.f32 %v1305, %v1306
      %1308 = vadd.xlane.f32.xlu0 %v1307
      %v1309 = vpop.xlane.xlu0 %1308
      %v1310 = vadd.f32 %v572, %v661
      %v1311 = vadd.f32 %v1310, %v750
      %v1312 = vadd.f32 %v1311, %v839
      %v1313 = vadd.f32 %v1312, %v928
      %v1314 = vadd.f32 %v1313, %v1017
      %v1315 = vsel %vm1143, %v1106, 0.0
      %v1316 = vadd.f32 %v1314, %v1315
      %1317 = vadd.xlane.f32.xlu0 %v1316
      %v1318 = vpop.xlane.xlu0 %1317
      %v1319 = vadd.f32 %v575, %v664
      %v1320 = vadd.f32 %v1319, %v753
      %v1321 = vadd.f32 %v1320, %v842
      %v1322 = vadd.f32 %v1321, %v931
      %v1323 = vadd.f32 %v1322, %v1020
      %v1324 = vsel %vm1143, %v1109, 0.0
      %v1325 = vadd.f32 %v1323, %v1324
      %1326 = vadd.xlane.f32.xlu0 %v1325
      %v1327 = vpop.xlane.xlu0 %1326
      %v1328 = vadd.f32 %v577, %v666
      %v1329 = vadd.f32 %v1328, %v755
      %v1330 = vadd.f32 %v1329, %v844
      %v1331 = vadd.f32 %v1330, %v933
      %v1332 = vadd.f32 %v1331, %v1022
      %v1333 = vsel %vm1143, %v1111, 0.0
      %v1334 = vadd.f32 %v1332, %v1333
      %1335 = vadd.xlane.f32.xlu0 %v1334
      %v1336 = vpop.xlane.xlu0 %1335
      %v1337 = vadd.f32 %v580, %v669
      %v1338 = vadd.f32 %v1337, %v758
      %v1339 = vadd.f32 %v1338, %v847
      %v1340 = vadd.f32 %v1339, %v936
      %v1341 = vadd.f32 %v1340, %v1025
      %v1342 = vsel %vm1143, %v1114, 0.0
      %v1343 = vadd.f32 %v1341, %v1342
      %1344 = vadd.xlane.f32.xlu0 %v1343
      %v1345 = vpop.xlane.xlu0 %1344
      %v1346 = vadd.f32 %v582, %v671
      %v1347 = vadd.f32 %v1346, %v760
      %v1348 = vadd.f32 %v1347, %v849
      %v1349 = vadd.f32 %v1348, %v938
      %v1350 = vadd.f32 %v1349, %v1027
      %v1351 = vsel %vm1143, %v1116, 0.0
      %v1352 = vadd.f32 %v1350, %v1351
      %1353 = vadd.xlane.f32.xlu0 %v1352
      %v1354 = vpop.xlane.xlu0 %1353
      %v1355 = vadd.f32 %v585, %v674
      %v1356 = vadd.f32 %v1355, %v763
      %v1357 = vadd.f32 %v1356, %v852
      %v1358 = vadd.f32 %v1357, %v941
      %v1359 = vadd.f32 %v1358, %v1030
      %v1360 = vsel %vm1143, %v1119, 0.0
      %v1361 = vadd.f32 %v1359, %v1360
      %1362 = vadd.xlane.f32.xlu0 %v1361
      %v1363 = vpop.xlane.xlu0 %1362
      %v1364 = vadd.f32 %v587, %v676
      %v1365 = vadd.f32 %v1364, %v765
      %v1366 = vadd.f32 %v1365, %v854
      %v1367 = vadd.f32 %v1366, %v943
      %v1368 = vadd.f32 %v1367, %v1032
      %v1369 = vsel %vm1143, %v1121, 0.0
      %v1370 = vadd.f32 %v1368, %v1369
      %1371 = vadd.xlane.f32.xlu0 %v1370
      %v1372 = vpop.xlane.xlu0 %1371
      %v1373 = vadd.f32 %v590, %v679
      %v1374 = vadd.f32 %v1373, %v768
      %v1375 = vadd.f32 %v1374, %v857
      %v1376 = vadd.f32 %v1375, %v946
      %v1377 = vadd.f32 %v1376, %v1035
      %v1378 = vsel %vm1143, %v1124, 0.0
      %v1379 = vadd.f32 %v1377, %v1378
      %1380 = vadd.xlane.f32.xlu0 %v1379
      %v1381 = vpop.xlane.xlu0 %1380
      %v1382 = vadd.f32 %v592, %v681
      %v1383 = vadd.f32 %v1382, %v770
      %v1384 = vadd.f32 %v1383, %v859
      %v1385 = vadd.f32 %v1384, %v948
      %v1386 = vadd.f32 %v1385, %v1037
      %v1387 = vsel %vm1143, %v1126, 0.0
      %v1388 = vadd.f32 %v1386, %v1387
      %1389 = vadd.xlane.f32.xlu0 %v1388
      %v1390 = vpop.xlane.xlu0 %1389
      %v1391 = vadd.f32 %v595, %v684
      %v1392 = vadd.f32 %v1391, %v773
      %v1393 = vadd.f32 %v1392, %v862
      %v1394 = vadd.f32 %v1393, %v951
      %v1395 = vadd.f32 %v1394, %v1040
      %v1396 = vsel %vm1143, %v1129, 0.0
      %v1397 = vadd.f32 %v1395, %v1396
      %1398 = vadd.xlane.f32.xlu0 %v1397
      %v1399 = vpop.xlane.xlu0 %1398
      %v1400 = vadd.f32 %v597, %v686
      %v1401 = vadd.f32 %v1400, %v775
      %v1402 = vadd.f32 %v1401, %v864
      %v1403 = vadd.f32 %v1402, %v953
      %v1404 = vadd.f32 %v1403, %v1042
      %v1405 = vsel %vm1143, %v1131, 0.0
      %v1406 = vadd.f32 %v1404, %v1405
      %1407 = vadd.xlane.f32.xlu0 %v1406
      %v1408 = vpop.xlane.xlu0 %1407
      %v1409 = vadd.f32 %v600, %v689
      %v1410 = vadd.f32 %v1409, %v778
      %v1411 = vadd.f32 %v1410, %v867
      %v1412 = vadd.f32 %v1411, %v956
      %v1413 = vadd.f32 %v1412, %v1045
      %v1414 = vsel %vm1143, %v1134, 0.0
      %v1415 = vadd.f32 %v1413, %v1414
      %1416 = vadd.xlane.f32.xlu0 %v1415
      %v1417 = vpop.xlane.xlu0 %1416
      %v1418 = vadd.f32 %v602, %v691
      %v1419 = vadd.f32 %v1418, %v780
      %v1420 = vadd.f32 %v1419, %v869
      %v1421 = vadd.f32 %v1420, %v958
      %v1422 = vadd.f32 %v1421, %v1047
      %v1423 = vsel %vm1143, %v1136, 0.0
      %v1424 = vadd.f32 %v1422, %v1423
      %1425 = vadd.xlane.f32.xlu0 %v1424
      %v1426 = vpop.xlane.xlu0 %1425
      %v1427 = vrcp.pop 784.0
      %v1428 = vmul.f32 784.0, %v1427
      %v1429 = vsub.f32 1.0, %v1428
      %v1430 = vmul.f32 %v1427, %v1429
      %v1431 = vadd.f32 %v1427, %v1430
      %vm1432 = vweird.f32 %v1427
      %v1433 = vsel %vm1432, %v1427, %v1431
      %v1434 = vmul.f32 %v1147, %v1433
      %v1435 = vmul.f32 %v1156, %v1433
      %v1436 = vmul.f32 %v1165, %v1433
      %v1437 = vmul.f32 %v1174, %v1433
      %v1438 = vmul.f32 %v1183, %v1433
      %v1439 = vmul.f32 %v1192, %v1433
      %v1440 = vmul.f32 %v1201, %v1433
      %v1441 = vmul.f32 %v1210, %v1433
      %v1442 = vmul.f32 %v1219, %v1433
      %v1443 = vmul.f32 %v1228, %v1433
      %v1444 = vmul.f32 %v1237, %v1433
      %v1445 = vmul.f32 %v1246, %v1433
      %v1446 = vmul.f32 %v1255, %v1433
      %v1447 = vmul.f32 %v1264, %v1433
      %v1448 = vmul.f32 %v1273, %v1433
      %v1449 = vmul.f32 %v1282, %v1433
      %v1450 = vmul.f32 %v1291, %v1433
      %v1451 = vmul.f32 %v1300, %v1433
      %v1452 = vmul.f32 %v1309, %v1433
      %v1453 = vmul.f32 %v1318, %v1433
      %v1454 = vmul.f32 %v1327, %v1433
      %v1455 = vmul.f32 %v1336, %v1433
      %v1456 = vmul.f32 %v1345, %v1433
      %v1457 = vmul.f32 %v1354, %v1433
      %v1458 = vmul.f32 %v1363, %v1433
      %v1459 = vmul.f32 %v1372, %v1433
      %v1460 = vmul.f32 %v1381, %v1433
      %v1461 = vmul.f32 %v1390, %v1433
      %v1462 = vmul.f32 %v1399, %v1433
      %v1463 = vmul.f32 %v1408, %v1433
      %v1464 = vmul.f32 %v1417, %v1433
      %v1465 = vmul.f32 %v1426, %v1433
      %v1466 = vsub.f32 %v525, %v1434
      %v1467 = vsub.f32 %v614, %v1434
      %v1468 = vsub.f32 %v703, %v1434
      %v1469 = vsub.f32 %v792, %v1434
      %v1470 = vsub.f32 %v881, %v1434
      %v1471 = vsub.f32 %v970, %v1434
      %v1472 = vsub.f32 %v1059, %v1434
      %v1473 = vsub.f32 %v527, %v1435
      %v1474 = vsub.f32 %v616, %v1435
      %v1475 = vsub.f32 %v705, %v1435
      %v1476 = vsub.f32 %v794, %v1435
      %v1477 = vsub.f32 %v883, %v1435
      %v1478 = vsub.f32 %v972, %v1435
      %v1479 = vsub.f32 %v1061, %v1435
      %v1480 = vsub.f32 %v530, %v1436
      %v1481 = vsub.f32 %v619, %v1436
      %v1482 = vsub.f32 %v708, %v1436
      %v1483 = vsub.f32 %v797, %v1436
      %v1484 = vsub.f32 %v886, %v1436
      %v1485 = vsub.f32 %v975, %v1436
      %v1486 = vsub.f32 %v1064, %v1436
      %v1487 = vsub.f32 %v532, %v1437
      %v1488 = vsub.f32 %v621, %v1437
      %v1489 = vsub.f32 %v710, %v1437
      %v1490 = vsub.f32 %v799, %v1437
      %v1491 = vsub.f32 %v888, %v1437
      %v1492 = vsub.f32 %v977, %v1437
      %v1493 = vsub.f32 %v1066, %v1437
      %v1494 = vsub.f32 %v535, %v1438
      %v1495 = vsub.f32 %v624, %v1438
      %v1496 = vsub.f32 %v713, %v1438
      %v1497 = vsub.f32 %v802, %v1438
      %v1498 = vsub.f32 %v891, %v1438
      %v1499 = vsub.f32 %v980, %v1438
      %v1500 = vsub.f32 %v1069, %v1438
      %v1501 = vsub.f32 %v537, %v1439
      %v1502 = vsub.f32 %v626, %v1439
      %v1503 = vsub.f32 %v715, %v1439
      %v1504 = vsub.f32 %v804, %v1439
      %v1505 = vsub.f32 %v893, %v1439
      %v1506 = vsub.f32 %v982, %v1439
      %v1507 = vsub.f32 %v1071, %v1439
      %v1508 = vsub.f32 %v540, %v1440
      %v1509 = vsub.f32 %v629, %v1440
      %v1510 = vsub.f32 %v718, %v1440
      %v1511 = vsub.f32 %v807, %v1440
      %v1512 = vsub.f32 %v896, %v1440
      %v1513 = vsub.f32 %v985, %v1440
      %v1514 = vsub.f32 %v1074, %v1440
      %v1515 = vsub.f32 %v542, %v1441
      %v1516 = vsub.f32 %v631, %v1441
      %v1517 = vsub.f32 %v720, %v1441
      %v1518 = vsub.f32 %v809, %v1441
      %v1519 = vsub.f32 %v898, %v1441
      %v1520 = vsub.f32 %v987, %v1441
      %v1521 = vsub.f32 %v1076, %v1441
      %v1522 = vsub.f32 %v545, %v1442
      %v1523 = vsub.f32 %v634, %v1442
      %v1524 = vsub.f32 %v723, %v1442
      %v1525 = vsub.f32 %v812, %v1442
      %v1526 = vsub.f32 %v901, %v1442
      %v1527 = vsub.f32 %v990, %v1442
      %v1528 = vsub.f32 %v1079, %v1442
      %v1529 = vsub.f32 %v547, %v1443
      %v1530 = vsub.f32 %v636, %v1443
      %v1531 = vsub.f32 %v725, %v1443
      %v1532 = vsub.f32 %v814, %v1443
      %v1533 = vsub.f32 %v903, %v1443
      %v1534 = vsub.f32 %v992, %v1443
      %v1535 = vsub.f32 %v1081, %v1443
      %v1536 = vsub.f32 %v550, %v1444
      %v1537 = vsub.f32 %v639, %v1444
      %v1538 = vsub.f32 %v728, %v1444
      %v1539 = vsub.f32 %v817, %v1444
      %v1540 = vsub.f32 %v906, %v1444
      %v1541 = vsub.f32 %v995, %v1444
      %v1542 = vsub.f32 %v1084, %v1444
      %v1543 = vsub.f32 %v552, %v1445
      %v1544 = vsub.f32 %v641, %v1445
      %v1545 = vsub.f32 %v730, %v1445
      %v1546 = vsub.f32 %v819, %v1445
      %v1547 = vsub.f32 %v908, %v1445
      %v1548 = vsub.f32 %v997, %v1445
      %v1549 = vsub.f32 %v1086, %v1445
      %v1550 = vsub.f32 %v555, %v1446
      %v1551 = vsub.f32 %v644, %v1446
      %v1552 = vsub.f32 %v733, %v1446
      %v1553 = vsub.f32 %v822, %v1446
      %v1554 = vsub.f32 %v911, %v1446
      %v1555 = vsub.f32 %v1000, %v1446
      %v1556 = vsub.f32 %v1089, %v1446
      %v1557 = vsub.f32 %v557, %v1447
      %v1558 = vsub.f32 %v646, %v1447
      %v1559 = vsub.f32 %v735, %v1447
      %v1560 = vsub.f32 %v824, %v1447
      %v1561 = vsub.f32 %v913, %v1447
      %v1562 = vsub.f32 %v1002, %v1447
      %v1563 = vsub.f32 %v1091, %v1447
      %v1564 = vsub.f32 %v560, %v1448
      %v1565 = vsub.f32 %v649, %v1448
      %v1566 = vsub.f32 %v738, %v1448
      %v1567 = vsub.f32 %v827, %v1448
      %v1568 = vsub.f32 %v916, %v1448
      %v1569 = vsub.f32 %v1005, %v1448
      %v1570 = vsub.f32 %v1094, %v1448
      %v1571 = vsub.f32 %v562, %v1449
      %v1572 = vsub.f32 %v651, %v1449
      %v1573 = vsub.f32 %v740, %v1449
      %v1574 = vsub.f32 %v829, %v1449
      %v1575 = vsub.f32 %v918, %v1449
      %v1576 = vsub.f32 %v1007, %v1449
      %v1577 = vsub.f32 %v1096, %v1449
      %v1578 = vsub.f32 %v565, %v1450
      %v1579 = vsub.f32 %v654, %v1450
      %v1580 = vsub.f32 %v743, %v1450
      %v1581 = vsub.f32 %v832, %v1450
      %v1582 = vsub.f32 %v921, %v1450
      %v1583 = vsub.f32 %v1010, %v1450
      %v1584 = vsub.f32 %v1099, %v1450
      %v1585 = vsub.f32 %v567, %v1451
      %v1586 = vsub.f32 %v656, %v1451
      %v1587 = vsub.f32 %v745, %v1451
      %v1588 = vsub.f32 %v834, %v1451
      %v1589 = vsub.f32 %v923, %v1451
      %v1590 = vsub.f32 %v1012, %v1451
      %v1591 = vsub.f32 %v1101, %v1451
      %v1592 = vsub.f32 %v570, %v1452
      %v1593 = vsub.f32 %v659, %v1452
      %v1594 = vsub.f32 %v748, %v1452
      %v1595 = vsub.f32 %v837, %v1452
      %v1596 = vsub.f32 %v926, %v1452
      %v1597 = vsub.f32 %v1015, %v1452
      %v1598 = vsub.f32 %v1104, %v1452
      %v1599 = vsub.f32 %v572, %v1453
      %v1600 = vsub.f32 %v661, %v1453
      %v1601 = vsub.f32 %v750, %v1453
      %v1602 = vsub.f32 %v839, %v1453
      %v1603 = vsub.f32 %v928, %v1453
      %v1604 = vsub.f32 %v1017, %v1453
      %v1605 = vsub.f32 %v1106, %v1453
      %v1606 = vsub.f32 %v575, %v1454
      %v1607 = vsub.f32 %v664, %v1454
      %v1608 = vsub.f32 %v753, %v1454
      %v1609 = vsub.f32 %v842, %v1454
      %v1610 = vsub.f32 %v931, %v1454
      %v1611 = vsub.f32 %v1020, %v1454
      %v1612 = vsub.f32 %v1109, %v1454
      %v1613 = vsub.f32 %v577, %v1455
      %v1614 = vsub.f32 %v666, %v1455
      %v1615 = vsub.f32 %v755, %v1455
      %v1616 = vsub.f32 %v844, %v1455
      %v1617 = vsub.f32 %v933, %v1455
      %v1618 = vsub.f32 %v1022, %v1455
      %v1619 = vsub.f32 %v1111, %v1455
      %v1620 = vsub.f32 %v580, %v1456
      %v1621 = vsub.f32 %v669, %v1456
      %v1622 = vsub.f32 %v758, %v1456
      %v1623 = vsub.f32 %v847, %v1456
      %v1624 = vsub.f32 %v936, %v1456
      %v1625 = vsub.f32 %v1025, %v1456
      %v1626 = vsub.f32 %v1114, %v1456
      %v1627 = vsub.f32 %v582, %v1457
      %v1628 = vsub.f32 %v671, %v1457
      %v1629 = vsub.f32 %v760, %v1457
      %v1630 = vsub.f32 %v849, %v1457
      %v1631 = vsub.f32 %v938, %v1457
      %v1632 = vsub.f32 %v1027, %v1457
      %v1633 = vsub.f32 %v1116, %v1457
      %v1634 = vsub.f32 %v585, %v1458
      %v1635 = vsub.f32 %v674, %v1458
      %v1636 = vsub.f32 %v763, %v1458
      %v1637 = vsub.f32 %v852, %v1458
      %v1638 = vsub.f32 %v941, %v1458
      %v1639 = vsub.f32 %v1030, %v1458
      %v1640 = vsub.f32 %v1119, %v1458
      %v1641 = vsub.f32 %v587, %v1459
      %v1642 = vsub.f32 %v676, %v1459
      %v1643 = vsub.f32 %v765, %v1459
      %v1644 = vsub.f32 %v854, %v1459
      %v1645 = vsub.f32 %v943, %v1459
      %v1646 = vsub.f32 %v1032, %v1459
      %v1647 = vsub.f32 %v1121, %v1459
      %v1648 = vsub.f32 %v590, %v1460
      %v1649 = vsub.f32 %v679, %v1460
      %v1650 = vsub.f32 %v768, %v1460
      %v1651 = vsub.f32 %v857, %v1460
      %v1652 = vsub.f32 %v946, %v1460
      %v1653 = vsub.f32 %v1035, %v1460
      %v1654 = vsub.f32 %v1124, %v1460
      %v1655 = vsub.f32 %v592, %v1461
      %v1656 = vsub.f32 %v681, %v1461
      %v1657 = vsub.f32 %v770, %v1461
      %v1658 = vsub.f32 %v859, %v1461
      %v1659 = vsub.f32 %v948, %v1461
      %v1660 = vsub.f32 %v1037, %v1461
      %v1661 = vsub.f32 %v1126, %v1461
      %v1662 = vsub.f32 %v595, %v1462
      %v1663 = vsub.f32 %v684, %v1462
      %v1664 = vsub.f32 %v773, %v1462
      %v1665 = vsub.f32 %v862, %v1462
      %v1666 = vsub.f32 %v951, %v1462
      %v1667 = vsub.f32 %v1040, %v1462
      %v1668 = vsub.f32 %v1129, %v1462
      %v1669 = vsub.f32 %v597, %v1463
      %v1670 = vsub.f32 %v686, %v1463
      %v1671 = vsub.f32 %v775, %v1463
      %v1672 = vsub.f32 %v864, %v1463
      %v1673 = vsub.f32 %v953, %v1463
      %v1674 = vsub.f32 %v1042, %v1463
      %v1675 = vsub.f32 %v1131, %v1463
      %v1676 = vsub.f32 %v600, %v1464
      %v1677 = vsub.f32 %v689, %v1464
      %v1678 = vsub.f32 %v778, %v1464
      %v1679 = vsub.f32 %v867, %v1464
      %v1680 = vsub.f32 %v956, %v1464
      %v1681 = vsub.f32 %v1045, %v1464
      %v1682 = vsub.f32 %v1134, %v1464
      %v1683 = vsub.f32 %v602, %v1465
      %v1684 = vsub.f32 %v691, %v1465
      %v1685 = vsub.f32 %v780, %v1465
      %v1686 = vsub.f32 %v869, %v1465
      %v1687 = vsub.f32 %v958, %v1465
      %v1688 = vsub.f32 %v1047, %v1465
      %v1689 = vsub.f32 %v1136, %v1465
      %v1690 = vmul.f32 %v1466, %v1466
      %v1691 = vmul.f32 %v1467, %v1467
      %v1692 = vmul.f32 %v1468, %v1468
      %v1693 = vmul.f32 %v1469, %v1469
      %v1694 = vmul.f32 %v1470, %v1470
      %v1695 = vmul.f32 %v1471, %v1471
      %v1696 = vmul.f32 %v1472, %v1472
      %v1697 = vmul.f32 %v1473, %v1473
      %v1698 = vmul.f32 %v1474, %v1474
      %v1699 = vmul.f32 %v1475, %v1475
      %v1700 = vmul.f32 %v1476, %v1476
      %v1701 = vmul.f32 %v1477, %v1477
      %v1702 = vmul.f32 %v1478, %v1478
      %v1703 = vmul.f32 %v1479, %v1479
      %v1704 = vmul.f32 %v1480, %v1480
      %v1705 = vmul.f32 %v1481, %v1481
      %v1706 = vmul.f32 %v1482, %v1482
      %v1707 = vmul.f32 %v1483, %v1483
      %v1708 = vmul.f32 %v1484, %v1484
      %v1709 = vmul.f32 %v1485, %v1485
      %v1710 = vmul.f32 %v1486, %v1486
      %v1711 = vmul.f32 %v1487, %v1487
      %v1712 = vmul.f32 %v1488, %v1488
      %v1713 = vmul.f32 %v1489, %v1489
      %v1714 = vmul.f32 %v1490, %v1490
      %v1715 = vmul.f32 %v1491, %v1491
      %v1716 = vmul.f32 %v1492, %v1492
      %v1717 = vmul.f32 %v1493, %v1493
      %v1718 = vmul.f32 %v1494, %v1494
      %v1719 = vmul.f32 %v1495, %v1495
      %v1720 = vmul.f32 %v1496, %v1496
      %v1721 = vmul.f32 %v1497, %v1497
      %v1722 = vmul.f32 %v1498, %v1498
      %v1723 = vmul.f32 %v1499, %v1499
      %v1724 = vmul.f32 %v1500, %v1500
      %v1725 = vmul.f32 %v1501, %v1501
      %v1726 = vmul.f32 %v1502, %v1502
      %v1727 = vmul.f32 %v1503, %v1503
      %v1728 = vmul.f32 %v1504, %v1504
      %v1729 = vmul.f32 %v1505, %v1505
      %v1730 = vmul.f32 %v1506, %v1506
      %v1731 = vmul.f32 %v1507, %v1507
      %v1732 = vmul.f32 %v1508, %v1508
      %v1733 = vmul.f32 %v1509, %v1509
      %v1734 = vmul.f32 %v1510, %v1510
      %v1735 = vmul.f32 %v1511, %v1511
      %v1736 = vmul.f32 %v1512, %v1512
      %v1737 = vmul.f32 %v1513, %v1513
      %v1738 = vmul.f32 %v1514, %v1514
      %v1739 = vmul.f32 %v1515, %v1515
      %v1740 = vmul.f32 %v1516, %v1516
      %v1741 = vmul.f32 %v1517, %v1517
      %v1742 = vmul.f32 %v1518, %v1518
      %v1743 = vmul.f32 %v1519, %v1519
      %v1744 = vmul.f32 %v1520, %v1520
      %v1745 = vmul.f32 %v1521, %v1521
      %v1746 = vmul.f32 %v1522, %v1522
      %v1747 = vmul.f32 %v1523, %v1523
      %v1748 = vmul.f32 %v1524, %v1524
      %v1749 = vmul.f32 %v1525, %v1525
      %v1750 = vmul.f32 %v1526, %v1526
      %v1751 = vmul.f32 %v1527, %v1527
      %v1752 = vmul.f32 %v1528, %v1528
      %v1753 = vmul.f32 %v1529, %v1529
      %v1754 = vmul.f32 %v1530, %v1530
      %v1755 = vmul.f32 %v1531, %v1531
      %v1756 = vmul.f32 %v1532, %v1532
      %v1757 = vmul.f32 %v1533, %v1533
      %v1758 = vmul.f32 %v1534, %v1534
      %v1759 = vmul.f32 %v1535, %v1535
      %v1760 = vmul.f32 %v1536, %v1536
      %v1761 = vmul.f32 %v1537, %v1537
      %v1762 = vmul.f32 %v1538, %v1538
      %v1763 = vmul.f32 %v1539, %v1539
      %v1764 = vmul.f32 %v1540, %v1540
      %v1765 = vmul.f32 %v1541, %v1541
      %v1766 = vmul.f32 %v1542, %v1542
      %v1767 = vmul.f32 %v1543, %v1543
      %v1768 = vmul.f32 %v1544, %v1544
      %v1769 = vmul.f32 %v1545, %v1545
      %v1770 = vmul.f32 %v1546, %v1546
      %v1771 = vmul.f32 %v1547, %v1547
      %v1772 = vmul.f32 %v1548, %v1548
      %v1773 = vmul.f32 %v1549, %v1549
      %v1774 = vmul.f32 %v1550, %v1550
      %v1775 = vmul.f32 %v1551, %v1551
      %v1776 = vmul.f32 %v1552, %v1552
      %v1777 = vmul.f32 %v1553, %v1553
      %v1778 = vmul.f32 %v1554, %v1554
      %v1779 = vmul.f32 %v1555, %v1555
      %v1780 = vmul.f32 %v1556, %v1556
      %v1781 = vmul.f32 %v1557, %v1557
      %v1782 = vmul.f32 %v1558, %v1558
      %v1783 = vmul.f32 %v1559, %v1559
      %v1784 = vmul.f32 %v1560, %v1560
      %v1785 = vmul.f32 %v1561, %v1561
      %v1786 = vmul.f32 %v1562, %v1562
      %v1787 = vmul.f32 %v1563, %v1563
      %v1788 = vmul.f32 %v1564, %v1564
      %v1789 = vmul.f32 %v1565, %v1565
      %v1790 = vmul.f32 %v1566, %v1566
      %v1791 = vmul.f32 %v1567, %v1567
      %v1792 = vmul.f32 %v1568, %v1568
      %v1793 = vmul.f32 %v1569, %v1569
      %v1794 = vmul.f32 %v1570, %v1570
      %v1795 = vmul.f32 %v1571, %v1571
      %v1796 = vmul.f32 %v1572, %v1572
      %v1797 = vmul.f32 %v1573, %v1573
      %v1798 = vmul.f32 %v1574, %v1574
      %v1799 = vmul.f32 %v1575, %v1575
      %v1800 = vmul.f32 %v1576, %v1576
      %v1801 = vmul.f32 %v1577, %v1577
      %v1802 = vmul.f32 %v1578, %v1578
      %v1803 = vmul.f32 %v1579, %v1579
      %v1804 = vmul.f32 %v1580, %v1580
      %v1805 = vmul.f32 %v1581, %v1581
      %v1806 = vmul.f32 %v1582, %v1582
      %v1807 = vmul.f32 %v1583, %v1583
      %v1808 = vmul.f32 %v1584, %v1584
      %v1809 = vmul.f32 %v1585, %v1585
      %v1810 = vmul.f32 %v1586, %v1586
      %v1811 = vmul.f32 %v1587, %v1587
      %v1812 = vmul.f32 %v1588, %v1588
      %v1813 = vmul.f32 %v1589, %v1589
      %v1814 = vmul.f32 %v1590, %v1590
      %v1815 = vmul.f32 %v1591, %v1591
      %v1816 = vmul.f32 %v1592, %v1592
      %v1817 = vmul.f32 %v1593, %v1593
      %v1818 = vmul.f32 %v1594, %v1594
      %v1819 = vmul.f32 %v1595, %v1595
      %v1820 = vmul.f32 %v1596, %v1596
      %v1821 = vmul.f32 %v1597, %v1597
      %v1822 = vmul.f32 %v1598, %v1598
      %v1823 = vmul.f32 %v1599, %v1599
      %v1824 = vmul.f32 %v1600, %v1600
      %v1825 = vmul.f32 %v1601, %v1601
      %v1826 = vmul.f32 %v1602, %v1602
      %v1827 = vmul.f32 %v1603, %v1603
      %v1828 = vmul.f32 %v1604, %v1604
      %v1829 = vmul.f32 %v1605, %v1605
      %v1830 = vmul.f32 %v1606, %v1606
      %v1831 = vmul.f32 %v1607, %v1607
      %v1832 = vmul.f32 %v1608, %v1608
      %v1833 = vmul.f32 %v1609, %v1609
      %v1834 = vmul.f32 %v1610, %v1610
      %v1835 = vmul.f32 %v1611, %v1611
      %v1836 = vmul.f32 %v1612, %v1612
      %v1837 = vmul.f32 %v1613, %v1613
      %v1838 = vmul.f32 %v1614, %v1614
      %v1839 = vmul.f32 %v1615, %v1615
      %v1840 = vmul.f32 %v1616, %v1616
      %v1841 = vmul.f32 %v1617, %v1617
      %v1842 = vmul.f32 %v1618, %v1618
      %v1843 = vmul.f32 %v1619, %v1619
      %v1844 = vmul.f32 %v1620, %v1620
      %v1845 = vmul.f32 %v1621, %v1621
      %v1846 = vmul.f32 %v1622, %v1622
      %v1847 = vmul.f32 %v1623, %v1623
      %v1848 = vmul.f32 %v1624, %v1624
      %v1849 = vmul.f32 %v1625, %v1625
      %v1850 = vmul.f32 %v1626, %v1626
      %v1851 = vmul.f32 %v1627, %v1627
      %v1852 = vmul.f32 %v1628, %v1628
      %v1853 = vmul.f32 %v1629, %v1629
      %v1854 = vmul.f32 %v1630, %v1630
      %v1855 = vmul.f32 %v1631, %v1631
      %v1856 = vmul.f32 %v1632, %v1632
      %v1857 = vmul.f32 %v1633, %v1633
      %v1858 = vmul.f32 %v1634, %v1634
      %v1859 = vmul.f32 %v1635, %v1635
      %v1860 = vmul.f32 %v1636, %v1636
      %v1861 = vmul.f32 %v1637, %v1637
      %v1862 = vmul.f32 %v1638, %v1638
      %v1863 = vmul.f32 %v1639, %v1639
      %v1864 = vmul.f32 %v1640, %v1640
      %v1865 = vmul.f32 %v1641, %v1641
      %v1866 = vmul.f32 %v1642, %v1642
      %v1867 = vmul.f32 %v1643, %v1643
      %v1868 = vmul.f32 %v1644, %v1644
      %v1869 = vmul.f32 %v1645, %v1645
      %v1870 = vmul.f32 %v1646, %v1646
      %v1871 = vmul.f32 %v1647, %v1647
      %v1872 = vmul.f32 %v1648, %v1648
      %v1873 = vmul.f32 %v1649, %v1649
      %v1874 = vmul.f32 %v1650, %v1650
      %v1875 = vmul.f32 %v1651, %v1651
      %v1876 = vmul.f32 %v1652, %v1652
      %v1877 = vmul.f32 %v1653, %v1653
      %v1878 = vmul.f32 %v1654, %v1654
      %v1879 = vmul.f32 %v1655, %v1655
      %v1880 = vmul.f32 %v1656, %v1656
      %v1881 = vmul.f32 %v1657, %v1657
      %v1882 = vmul.f32 %v1658, %v1658
      %v1883 = vmul.f32 %v1659, %v1659
      %v1884 = vmul.f32 %v1660, %v1660
      %v1885 = vmul.f32 %v1661, %v1661
      %v1886 = vmul.f32 %v1662, %v1662
      %v1887 = vmul.f32 %v1663, %v1663
      %v1888 = vmul.f32 %v1664, %v1664
      %v1889 = vmul.f32 %v1665, %v1665
      %v1890 = vmul.f32 %v1666, %v1666
      %v1891 = vmul.f32 %v1667, %v1667
      %v1892 = vmul.f32 %v1668, %v1668
      %v1893 = vmul.f32 %v1669, %v1669
      %v1894 = vmul.f32 %v1670, %v1670
      %v1895 = vmul.f32 %v1671, %v1671
      %v1896 = vmul.f32 %v1672, %v1672
      %v1897 = vmul.f32 %v1673, %v1673
      %v1898 = vmul.f32 %v1674, %v1674
      %v1899 = vmul.f32 %v1675, %v1675
      %v1900 = vmul.f32 %v1676, %v1676
      %v1901 = vmul.f32 %v1677, %v1677
      %v1902 = vmul.f32 %v1678, %v1678
      %v1903 = vmul.f32 %v1679, %v1679
      %v1904 = vmul.f32 %v1680, %v1680
      %v1905 = vmul.f32 %v1681, %v1681
      %v1906 = vmul.f32 %v1682, %v1682
      %v1907 = vmul.f32 %v1683, %v1683
      %v1908 = vmul.f32 %v1684, %v1684
      %v1909 = vmul.f32 %v1685, %v1685
      %v1910 = vmul.f32 %v1686, %v1686
      %v1911 = vmul.f32 %v1687, %v1687
      %v1912 = vmul.f32 %v1688, %v1688
      %v1913 = vmul.f32 %v1689, %v1689
      %v1914 = vadd.f32 %v1690, %v1691
      %v1915 = vadd.f32 %v1914, %v1692
      %v1916 = vadd.f32 %v1915, %v1693
      %v1917 = vadd.f32 %v1916, %v1694
      %v1918 = vadd.f32 %v1917, %v1695
      %v1919 = vsel %vm1143, %v1696, 0.0
      %v1920 = vadd.f32 %v1918, %v1919
      %1921 = vadd.xlane.f32.xlu0 %v1920
      %v1922 = vpop.xlane.xlu0 %1921
      %v1923 = vadd.f32 %v1697, %v1698
      %v1924 = vadd.f32 %v1923, %v1699
      %v1925 = vadd.f32 %v1924, %v1700
      %v1926 = vadd.f32 %v1925, %v1701
      %v1927 = vadd.f32 %v1926, %v1702
      %v1928 = vsel %vm1143, %v1703, 0.0
      %v1929 = vadd.f32 %v1927, %v1928
      %1930 = vadd.xlane.f32.xlu0 %v1929
      %v1931 = vpop.xlane.xlu0 %1930
      %v1932 = vadd.f32 %v1704, %v1705
      %v1933 = vadd.f32 %v1932, %v1706
      %v1934 = vadd.f32 %v1933, %v1707
      %v1935 = vadd.f32 %v1934, %v1708
      %v1936 = vadd.f32 %v1935, %v1709
      %v1937 = vsel %vm1143, %v1710, 0.0
      %v1938 = vadd.f32 %v1936, %v1937
      %1939 = vadd.xlane.f32.xlu0 %v1938
      %v1940 = vpop.xlane.xlu0 %1939
      %v1941 = vadd.f32 %v1711, %v1712
      %v1942 = vadd.f32 %v1941, %v1713
      %v1943 = vadd.f32 %v1942, %v1714
      %v1944 = vadd.f32 %v1943, %v1715
      %v1945 = vadd.f32 %v1944, %v1716
      %v1946 = vsel %vm1143, %v1717, 0.0
      %v1947 = vadd.f32 %v1945, %v1946
      %1948 = vadd.xlane.f32.xlu0 %v1947
      %v1949 = vpop.xlane.xlu0 %1948
      %v1950 = vadd.f32 %v1718, %v1719
      %v1951 = vadd.f32 %v1950, %v1720
      %v1952 = vadd.f32 %v1951, %v1721
      %v1953 = vadd.f32 %v1952, %v1722
      %v1954 = vadd.f32 %v1953, %v1723
      %v1955 = vsel %vm1143, %v1724, 0.0
      %v1956 = vadd.f32 %v1954, %v1955
      %1957 = vadd.xlane.f32.xlu0 %v1956
      %v1958 = vpop.xlane.xlu0 %1957
      %v1959 = vadd.f32 %v1725, %v1726
      %v1960 = vadd.f32 %v1959, %v1727
      %v1961 = vadd.f32 %v1960, %v1728
      %v1962 = vadd.f32 %v1961, %v1729
      %v1963 = vadd.f32 %v1962, %v1730
      %v1964 = vsel %vm1143, %v1731, 0.0
      %v1965 = vadd.f32 %v1963, %v1964
      %1966 = vadd.xlane.f32.xlu0 %v1965
      %v1967 = vpop.xlane.xlu0 %1966
      %v1968 = vadd.f32 %v1732, %v1733
      %v1969 = vadd.f32 %v1968, %v1734
      %v1970 = vadd.f32 %v1969, %v1735
      %v1971 = vadd.f32 %v1970, %v1736
      %v1972 = vadd.f32 %v1971, %v1737
      %v1973 = vsel %vm1143, %v1738, 0.0
      %v1974 = vadd.f32 %v1972, %v1973
      %1975 = vadd.xlane.f32.xlu0 %v1974
      %v1976 = vpop.xlane.xlu0 %1975
      %v1977 = vadd.f32 %v1739, %v1740
      %v1978 = vadd.f32 %v1977, %v1741
      %v1979 = vadd.f32 %v1978, %v1742
      %v1980 = vadd.f32 %v1979, %v1743
      %v1981 = vadd.f32 %v1980, %v1744
      %v1982 = vsel %vm1143, %v1745, 0.0
      %v1983 = vadd.f32 %v1981, %v1982
      %1984 = vadd.xlane.f32.xlu0 %v1983
      %v1985 = vpop.xlane.xlu0 %1984
      %v1986 = vadd.f32 %v1746, %v1747
      %v1987 = vadd.f32 %v1986, %v1748
      %v1988 = vadd.f32 %v1987, %v1749
      %v1989 = vadd.f32 %v1988, %v1750
      %v1990 = vadd.f32 %v1989, %v1751
      %v1991 = vsel %vm1143, %v1752, 0.0
      %v1992 = vadd.f32 %v1990, %v1991
      %1993 = vadd.xlane.f32.xlu0 %v1992
      %v1994 = vpop.xlane.xlu0 %1993
      %v1995 = vadd.f32 %v1753, %v1754
      %v1996 = vadd.f32 %v1995, %v1755
      %v1997 = vadd.f32 %v1996, %v1756
      %v1998 = vadd.f32 %v1997, %v1757
      %v1999 = vadd.f32 %v1998, %v1758
      %v2000 = vsel %vm1143, %v1759, 0.0
      %v2001 = vadd.f32 %v1999, %v2000
      %2002 = vadd.xlane.f32.xlu0 %v2001
      %v2003 = vpop.xlane.xlu0 %2002
      %v2004 = vadd.f32 %v1760, %v1761
      %v2005 = vadd.f32 %v2004, %v1762
      %v2006 = vadd.f32 %v2005, %v1763
      %v2007 = vadd.f32 %v2006, %v1764
      %v2008 = vadd.f32 %v2007, %v1765
      %v2009 = vsel %vm1143, %v1766, 0.0
      %v2010 = vadd.f32 %v2008, %v2009
      %2011 = vadd.xlane.f32.xlu0 %v2010
      %v2012 = vpop.xlane.xlu0 %2011
      %v2013 = vadd.f32 %v1767, %v1768
      %v2014 = vadd.f32 %v2013, %v1769
      %v2015 = vadd.f32 %v2014, %v1770
      %v2016 = vadd.f32 %v2015, %v1771
      %v2017 = vadd.f32 %v2016, %v1772
      %v2018 = vsel %vm1143, %v1773, 0.0
      %v2019 = vadd.f32 %v2017, %v2018
      %2020 = vadd.xlane.f32.xlu0 %v2019
      %v2021 = vpop.xlane.xlu0 %2020
      %v2022 = vadd.f32 %v1774, %v1775
      %v2023 = vadd.f32 %v2022, %v1776
      %v2024 = vadd.f32 %v2023, %v1777
      %v2025 = vadd.f32 %v2024, %v1778
      %v2026 = vadd.f32 %v2025, %v1779
      %v2027 = vsel %vm1143, %v1780, 0.0
      %v2028 = vadd.f32 %v2026, %v2027
      %2029 = vadd.xlane.f32.xlu0 %v2028
      %v2030 = vpop.xlane.xlu0 %2029
      %v2031 = vadd.f32 %v1781, %v1782
      %v2032 = vadd.f32 %v2031, %v1783
      %v2033 = vadd.f32 %v2032, %v1784
      %v2034 = vadd.f32 %v2033, %v1785
      %v2035 = vadd.f32 %v2034, %v1786
      %v2036 = vsel %vm1143, %v1787, 0.0
      %v2037 = vadd.f32 %v2035, %v2036
      %2038 = vadd.xlane.f32.xlu0 %v2037
      %v2039 = vpop.xlane.xlu0 %2038
      %v2040 = vadd.f32 %v1788, %v1789
      %v2041 = vadd.f32 %v2040, %v1790
      %v2042 = vadd.f32 %v2041, %v1791
      %v2043 = vadd.f32 %v2042, %v1792
      %v2044 = vadd.f32 %v2043, %v1793
      %v2045 = vsel %vm1143, %v1794, 0.0
      %v2046 = vadd.f32 %v2044, %v2045
      %2047 = vadd.xlane.f32.xlu0 %v2046
      %v2048 = vpop.xlane.xlu0 %2047
      %v2049 = vadd.f32 %v1795, %v1796
      %v2050 = vadd.f32 %v2049, %v1797
      %v2051 = vadd.f32 %v2050, %v1798
      %v2052 = vadd.f32 %v2051, %v1799
      %v2053 = vadd.f32 %v2052, %v1800
      %v2054 = vsel %vm1143, %v1801, 0.0
      %v2055 = vadd.f32 %v2053, %v2054
      %2056 = vadd.xlane.f32.xlu0 %v2055
      %v2057 = vpop.xlane.xlu0 %2056
      %v2058 = vadd.f32 %v1802, %v1803
      %v2059 = vadd.f32 %v2058, %v1804
      %v2060 = vadd.f32 %v2059, %v1805
      %v2061 = vadd.f32 %v2060, %v1806
      %v2062 = vadd.f32 %v2061, %v1807
      %v2063 = vsel %vm1143, %v1808, 0.0
      %v2064 = vadd.f32 %v2062, %v2063
      %2065 = vadd.xlane.f32.xlu0 %v2064
      %v2066 = vpop.xlane.xlu0 %2065
      %v2067 = vadd.f32 %v1809, %v1810
      %v2068 = vadd.f32 %v2067, %v1811
      %v2069 = vadd.f32 %v2068, %v1812
      %v2070 = vadd.f32 %v2069, %v1813
      %v2071 = vadd.f32 %v2070, %v1814
      %v2072 = vsel %vm1143, %v1815, 0.0
      %v2073 = vadd.f32 %v2071, %v2072
      %2074 = vadd.xlane.f32.xlu0 %v2073
      %v2075 = vpop.xlane.xlu0 %2074
      %v2076 = vadd.f32 %v1816, %v1817
      %v2077 = vadd.f32 %v2076, %v1818
      %v2078 = vadd.f32 %v2077, %v1819
      %v2079 = vadd.f32 %v2078, %v1820
      %v2080 = vadd.f32 %v2079, %v1821
      %v2081 = vsel %vm1143, %v1822, 0.0
      %v2082 = vadd.f32 %v2080, %v2081
      %2083 = vadd.xlane.f32.xlu0 %v2082
      %v2084 = vpop.xlane.xlu0 %2083
      %v2085 = vadd.f32 %v1823, %v1824
      %v2086 = vadd.f32 %v2085, %v1825
      %v2087 = vadd.f32 %v2086, %v1826
      %v2088 = vadd.f32 %v2087, %v1827
      %v2089 = vadd.f32 %v2088, %v1828
      %v2090 = vsel %vm1143, %v1829, 0.0
      %v2091 = vadd.f32 %v2089, %v2090
      %2092 = vadd.xlane.f32.xlu0 %v2091
      %v2093 = vpop.xlane.xlu0 %2092
      %v2094 = vadd.f32 %v1830, %v1831
      %v2095 = vadd.f32 %v2094, %v1832
      %v2096 = vadd.f32 %v2095, %v1833
      %v2097 = vadd.f32 %v2096, %v1834
      %v2098 = vadd.f32 %v2097, %v1835
      %v2099 = vsel %vm1143, %v1836, 0.0
      %v2100 = vadd.f32 %v2098, %v2099
      %2101 = vadd.xlane.f32.xlu0 %v2100
      %v2102 = vpop.xlane.xlu0 %2101
      %v2103 = vadd.f32 %v1837, %v1838
      %v2104 = vadd.f32 %v2103, %v1839
      %v2105 = vadd.f32 %v2104, %v1840
      %v2106 = vadd.f32 %v2105, %v1841
      %v2107 = vadd.f32 %v2106, %v1842
      %v2108 = vsel %vm1143, %v1843, 0.0
      %v2109 = vadd.f32 %v2107, %v2108
      %2110 = vadd.xlane.f32.xlu0 %v2109
      %v2111 = vpop.xlane.xlu0 %2110
      %v2112 = vadd.f32 %v1844, %v1845
      %v2113 = vadd.f32 %v2112, %v1846
      %v2114 = vadd.f32 %v2113, %v1847
      %v2115 = vadd.f32 %v2114, %v1848
      %v2116 = vadd.f32 %v2115, %v1849
      %v2117 = vsel %vm1143, %v1850, 0.0
      %v2118 = vadd.f32 %v2116, %v2117
      %2119 = vadd.xlane.f32.xlu0 %v2118
      %v2120 = vpop.xlane.xlu0 %2119
      %v2121 = vadd.f32 %v1851, %v1852
      %v2122 = vadd.f32 %v2121, %v1853
      %v2123 = vadd.f32 %v2122, %v1854
      %v2124 = vadd.f32 %v2123, %v1855
      %v2125 = vadd.f32 %v2124, %v1856
      %v2126 = vsel %vm1143, %v1857, 0.0
      %v2127 = vadd.f32 %v2125, %v2126
      %2128 = vadd.xlane.f32.xlu0 %v2127
      %v2129 = vpop.xlane.xlu0 %2128
      %v2130 = vadd.f32 %v1858, %v1859
      %v2131 = vadd.f32 %v2130, %v1860
      %v2132 = vadd.f32 %v2131, %v1861
      %v2133 = vadd.f32 %v2132, %v1862
      %v2134 = vadd.f32 %v2133, %v1863
      %v2135 = vsel %vm1143, %v1864, 0.0
      %v2136 = vadd.f32 %v2134, %v2135
      %2137 = vadd.xlane.f32.xlu0 %v2136
      %v2138 = vpop.xlane.xlu0 %2137
      %v2139 = vadd.f32 %v1865, %v1866
      %v2140 = vadd.f32 %v2139, %v1867
      %v2141 = vadd.f32 %v2140, %v1868
      %v2142 = vadd.f32 %v2141, %v1869
      %v2143 = vadd.f32 %v2142, %v1870
      %v2144 = vsel %vm1143, %v1871, 0.0
      %v2145 = vadd.f32 %v2143, %v2144
      %2146 = vadd.xlane.f32.xlu0 %v2145
      %v2147 = vpop.xlane.xlu0 %2146
      %v2148 = vadd.f32 %v1872, %v1873
      %v2149 = vadd.f32 %v2148, %v1874
      %v2150 = vadd.f32 %v2149, %v1875
      %v2151 = vadd.f32 %v2150, %v1876
      %v2152 = vadd.f32 %v2151, %v1877
      %v2153 = vsel %vm1143, %v1878, 0.0
      %v2154 = vadd.f32 %v2152, %v2153
      %2155 = vadd.xlane.f32.xlu0 %v2154
      %v2156 = vpop.xlane.xlu0 %2155
      %v2157 = vadd.f32 %v1879, %v1880
      %v2158 = vadd.f32 %v2157, %v1881
      %v2159 = vadd.f32 %v2158, %v1882
      %v2160 = vadd.f32 %v2159, %v1883
      %v2161 = vadd.f32 %v2160, %v1884
      %v2162 = vsel %vm1143, %v1885, 0.0
      %v2163 = vadd.f32 %v2161, %v2162
      %2164 = vadd.xlane.f32.xlu0 %v2163
      %v2165 = vpop.xlane.xlu0 %2164
      %v2166 = vadd.f32 %v1886, %v1887
      %v2167 = vadd.f32 %v2166, %v1888
      %v2168 = vadd.f32 %v2167, %v1889
      %v2169 = vadd.f32 %v2168, %v1890
      %v2170 = vadd.f32 %v2169, %v1891
      %v2171 = vsel %vm1143, %v1892, 0.0
      %v2172 = vadd.f32 %v2170, %v2171
      %2173 = vadd.xlane.f32.xlu0 %v2172
      %v2174 = vpop.xlane.xlu0 %2173
      %v2175 = vadd.f32 %v1893, %v1894
      %v2176 = vadd.f32 %v2175, %v1895
      %v2177 = vadd.f32 %v2176, %v1896
      %v2178 = vadd.f32 %v2177, %v1897
      %v2179 = vadd.f32 %v2178, %v1898
      %v2180 = vsel %vm1143, %v1899, 0.0
      %v2181 = vadd.f32 %v2179, %v2180
      %2182 = vadd.xlane.f32.xlu0 %v2181
      %v2183 = vpop.xlane.xlu0 %2182
      %v2184 = vadd.f32 %v1900, %v1901
      %v2185 = vadd.f32 %v2184, %v1902
      %v2186 = vadd.f32 %v2185, %v1903
      %v2187 = vadd.f32 %v2186, %v1904
      %v2188 = vadd.f32 %v2187, %v1905
      %v2189 = vsel %vm1143, %v1906, 0.0
      %v2190 = vadd.f32 %v2188, %v2189
      %2191 = vadd.xlane.f32.xlu0 %v2190
      %v2192 = vpop.xlane.xlu0 %2191
      %v2193 = vadd.f32 %v1907, %v1908
      %v2194 = vadd.f32 %v2193, %v1909
      %v2195 = vadd.f32 %v2194, %v1910
      %v2196 = vadd.f32 %v2195, %v1911
      %v2197 = vadd.f32 %v2196, %v1912
      %v2198 = vsel %vm1143, %v1913, 0.0
      %v2199 = vadd.f32 %v2197, %v2198
      %2200 = vadd.xlane.f32.xlu0 %v2199
      %v2201 = vpop.xlane.xlu0 %2200
      %v2202 = vmul.f32 %v1922, %v1433
      %v2203 = vmul.f32 %v1931, %v1433
      %v2204 = vmul.f32 %v1940, %v1433
      %v2205 = vmul.f32 %v1949, %v1433
      %v2206 = vmul.f32 %v1958, %v1433
      %v2207 = vmul.f32 %v1967, %v1433
      %v2208 = vmul.f32 %v1976, %v1433
      %v2209 = vmul.f32 %v1985, %v1433
      %v2210 = vmul.f32 %v1994, %v1433
      %v2211 = vmul.f32 %v2003, %v1433
      %v2212 = vmul.f32 %v2012, %v1433
      %v2213 = vmul.f32 %v2021, %v1433
      %v2214 = vmul.f32 %v2030, %v1433
      %v2215 = vmul.f32 %v2039, %v1433
      %v2216 = vmul.f32 %v2048, %v1433
      %v2217 = vmul.f32 %v2057, %v1433
      %v2218 = vmul.f32 %v2066, %v1433
      %v2219 = vmul.f32 %v2075, %v1433
      %v2220 = vmul.f32 %v2084, %v1433
      %v2221 = vmul.f32 %v2093, %v1433
      %v2222 = vmul.f32 %v2102, %v1433
      %v2223 = vmul.f32 %v2111, %v1433
      %v2224 = vmul.f32 %v2120, %v1433
      %v2225 = vmul.f32 %v2129, %v1433
      %v2226 = vmul.f32 %v2138, %v1433
      %v2227 = vmul.f32 %v2147, %v1433
      %v2228 = vmul.f32 %v2156, %v1433
      %v2229 = vmul.f32 %v2165, %v1433
      %v2230 = vmul.f32 %v2174, %v1433
      %v2231 = vmul.f32 %v2183, %v1433
      %v2232 = vmul.f32 %v2192, %v1433
      %v2233 = vmul.f32 %v2201, %v1433
      %v2234 = vadd.f32 %v2202, 1e-05
      %v2235 = vadd.f32 %v2203, 1e-05
      %v2236 = vadd.f32 %v2204, 1e-05
      %v2237 = vadd.f32 %v2205, 1e-05
      %v2238 = vadd.f32 %v2206, 1e-05
      %v2239 = vadd.f32 %v2207, 1e-05
      %v2240 = vadd.f32 %v2208, 1e-05
      %v2241 = vadd.f32 %v2209, 1e-05
      %v2242 = vadd.f32 %v2210, 1e-05
      %v2243 = vadd.f32 %v2211, 1e-05
      %v2244 = vadd.f32 %v2212, 1e-05
      %v2245 = vadd.f32 %v2213, 1e-05
      %v2246 = vadd.f32 %v2214, 1e-05
      %v2247 = vadd.f32 %v2215, 1e-05
      %v2248 = vadd.f32 %v2216, 1e-05
      %v2249 = vadd.f32 %v2217, 1e-05
      %v2250 = vadd.f32 %v2218, 1e-05
      %v2251 = vadd.f32 %v2219, 1e-05
      %v2252 = vadd.f32 %v2220, 1e-05
      %v2253 = vadd.f32 %v2221, 1e-05
      %v2254 = vadd.f32 %v2222, 1e-05
      %v2255 = vadd.f32 %v2223, 1e-05
      %v2256 = vadd.f32 %v2224, 1e-05
      %v2257 = vadd.f32 %v2225, 1e-05
      %v2258 = vadd.f32 %v2226, 1e-05
      %v2259 = vadd.f32 %v2227, 1e-05
      %v2260 = vadd.f32 %v2228, 1e-05
      %v2261 = vadd.f32 %v2229, 1e-05
      %v2262 = vadd.f32 %v2230, 1e-05
      %v2263 = vadd.f32 %v2231, 1e-05
      %v2264 = vadd.f32 %v2232, 1e-05
      %v2265 = vadd.f32 %v2233, 1e-05
      %v2266 = vrsqrt.pop %v2234
      %v2267 = vmul.f32 %v2266, %v2234
      %v2268 = vmul.f32 %v2267, %v2266
      %v2269 = vmul.f32 0.5, %v2268
      %v2270 = vsub.f32 1.5, %v2269
      %v2271 = vmul.f32 %v2266, %v2270
      %vm2272 = vweird.f32 %v2234
      %vm2273 = vweird.f32 %v2266
      %vm2274 = vmor %vm2272, %vm2273
      %v2275 = vsel %vm2274, %v2266, %v2271
      %v2276 = vrsqrt.pop %v2235
      %v2277 = vmul.f32 %v2276, %v2235
      %v2278 = vmul.f32 %v2277, %v2276
      %v2279 = vmul.f32 0.5, %v2278
      %v2280 = vsub.f32 1.5, %v2279
      %v2281 = vmul.f32 %v2276, %v2280
      %vm2282 = vweird.f32 %v2235
      %vm2283 = vweird.f32 %v2276
      %vm2284 = vmor %vm2282, %vm2283
      %v2285 = vsel %vm2284, %v2276, %v2281
      %v2286 = vrsqrt.pop %v2236
      %v2287 = vmul.f32 %v2286, %v2236
      %v2288 = vmul.f32 %v2287, %v2286
      %v2289 = vmul.f32 0.5, %v2288
      %v2290 = vsub.f32 1.5, %v2289
      %v2291 = vmul.f32 %v2286, %v2290
      %vm2292 = vweird.f32 %v2236
      %vm2293 = vweird.f32 %v2286
      %vm2294 = vmor %vm2292, %vm2293
      %v2295 = vsel %vm2294, %v2286, %v2291
      %v2296 = vrsqrt.pop %v2237
      %v2297 = vmul.f32 %v2296, %v2237
      %v2298 = vmul.f32 %v2297, %v2296
      %v2299 = vmul.f32 0.5, %v2298
      %v2300 = vsub.f32 1.5, %v2299
      %v2301 = vmul.f32 %v2296, %v2300
      %vm2302 = vweird.f32 %v2237
      %vm2303 = vweird.f32 %v2296
      %vm2304 = vmor %vm2302, %vm2303
      %v2305 = vsel %vm2304, %v2296, %v2301
      %v2306 = vrsqrt.pop %v2238
      %v2307 = vmul.f32 %v2306, %v2238
      %v2308 = vmul.f32 %v2307, %v2306
      %v2309 = vmul.f32 0.5, %v2308
      %v2310 = vsub.f32 1.5, %v2309
      %v2311 = vmul.f32 %v2306, %v2310
      %vm2312 = vweird.f32 %v2238
      %vm2313 = vweird.f32 %v2306
      %vm2314 = vmor %vm2312, %vm2313
      %v2315 = vsel %vm2314, %v2306, %v2311
      %v2316 = vrsqrt.pop %v2239
      %v2317 = vmul.f32 %v2316, %v2239
      %v2318 = vmul.f32 %v2317, %v2316
      %v2319 = vmul.f32 0.5, %v2318
      %v2320 = vsub.f32 1.5, %v2319
      %v2321 = vmul.f32 %v2316, %v2320
      %vm2322 = vweird.f32 %v2239
      %vm2323 = vweird.f32 %v2316
      %vm2324 = vmor %vm2322, %vm2323
      %v2325 = vsel %vm2324, %v2316, %v2321
      %v2326 = vrsqrt.pop %v2240
      %v2327 = vmul.f32 %v2326, %v2240
      %v2328 = vmul.f32 %v2327, %v2326
      %v2329 = vmul.f32 0.5, %v2328
      %v2330 = vsub.f32 1.5, %v2329
      %v2331 = vmul.f32 %v2326, %v2330
      %vm2332 = vweird.f32 %v2240
      %vm2333 = vweird.f32 %v2326
      %vm2334 = vmor %vm2332, %vm2333
      %v2335 = vsel %vm2334, %v2326, %v2331
      %v2336 = vrsqrt.pop %v2241
      %v2337 = vmul.f32 %v2336, %v2241
      %v2338 = vmul.f32 %v2337, %v2336
      %v2339 = vmul.f32 0.5, %v2338
      %v2340 = vsub.f32 1.5, %v2339
      %v2341 = vmul.f32 %v2336, %v2340
      %vm2342 = vweird.f32 %v2241
      %vm2343 = vweird.f32 %v2336
      %vm2344 = vmor %vm2342, %vm2343
      %v2345 = vsel %vm2344, %v2336, %v2341
      %v2346 = vrsqrt.pop %v2242
      %v2347 = vmul.f32 %v2346, %v2242
      %v2348 = vmul.f32 %v2347, %v2346
      %v2349 = vmul.f32 0.5, %v2348
      %v2350 = vsub.f32 1.5, %v2349
      %v2351 = vmul.f32 %v2346, %v2350
      %vm2352 = vweird.f32 %v2242
      %vm2353 = vweird.f32 %v2346
      %vm2354 = vmor %vm2352, %vm2353
      %v2355 = vsel %vm2354, %v2346, %v2351
      %v2356 = vrsqrt.pop %v2243
      %v2357 = vmul.f32 %v2356, %v2243
      %v2358 = vmul.f32 %v2357, %v2356
      %v2359 = vmul.f32 0.5, %v2358
      %v2360 = vsub.f32 1.5, %v2359
      %v2361 = vmul.f32 %v2356, %v2360
      %vm2362 = vweird.f32 %v2243
      %vm2363 = vweird.f32 %v2356
      %vm2364 = vmor %vm2362, %vm2363
      %v2365 = vsel %vm2364, %v2356, %v2361
      %v2366 = vrsqrt.pop %v2244
      %v2367 = vmul.f32 %v2366, %v2244
      %v2368 = vmul.f32 %v2367, %v2366
      %v2369 = vmul.f32 0.5, %v2368
      %v2370 = vsub.f32 1.5, %v2369
      %v2371 = vmul.f32 %v2366, %v2370
      %vm2372 = vweird.f32 %v2244
      %vm2373 = vweird.f32 %v2366
      %vm2374 = vmor %vm2372, %vm2373
      %v2375 = vsel %vm2374, %v2366, %v2371
      %v2376 = vrsqrt.pop %v2245
      %v2377 = vmul.f32 %v2376, %v2245
      %v2378 = vmul.f32 %v2377, %v2376
      %v2379 = vmul.f32 0.5, %v2378
      %v2380 = vsub.f32 1.5, %v2379
      %v2381 = vmul.f32 %v2376, %v2380
      %vm2382 = vweird.f32 %v2245
      %vm2383 = vweird.f32 %v2376
      %vm2384 = vmor %vm2382, %vm2383
      %v2385 = vsel %vm2384, %v2376, %v2381
      %v2386 = vrsqrt.pop %v2246
      %v2387 = vmul.f32 %v2386, %v2246
      %v2388 = vmul.f32 %v2387, %v2386
      %v2389 = vmul.f32 0.5, %v2388
      %v2390 = vsub.f32 1.5, %v2389
      %v2391 = vmul.f32 %v2386, %v2390
      %vm2392 = vweird.f32 %v2246
      %vm2393 = vweird.f32 %v2386
      %vm2394 = vmor %vm2392, %vm2393
      %v2395 = vsel %vm2394, %v2386, %v2391
      %v2396 = vrsqrt.pop %v2247
      %v2397 = vmul.f32 %v2396, %v2247
      %v2398 = vmul.f32 %v2397, %v2396
      %v2399 = vmul.f32 0.5, %v2398
      %v2400 = vsub.f32 1.5, %v2399
      %v2401 = vmul.f32 %v2396, %v2400
      %vm2402 = vweird.f32 %v2247
      %vm2403 = vweird.f32 %v2396
      %vm2404 = vmor %vm2402, %vm2403
      %v2405 = vsel %vm2404, %v2396, %v2401
      %v2406 = vrsqrt.pop %v2248
      %v2407 = vmul.f32 %v2406, %v2248
      %v2408 = vmul.f32 %v2407, %v2406
      %v2409 = vmul.f32 0.5, %v2408
      %v2410 = vsub.f32 1.5, %v2409
      %v2411 = vmul.f32 %v2406, %v2410
      %vm2412 = vweird.f32 %v2248
      %vm2413 = vweird.f32 %v2406
      %vm2414 = vmor %vm2412, %vm2413
      %v2415 = vsel %vm2414, %v2406, %v2411
      %v2416 = vrsqrt.pop %v2249
      %v2417 = vmul.f32 %v2416, %v2249
      %v2418 = vmul.f32 %v2417, %v2416
      %v2419 = vmul.f32 0.5, %v2418
      %v2420 = vsub.f32 1.5, %v2419
      %v2421 = vmul.f32 %v2416, %v2420
      %vm2422 = vweird.f32 %v2249
      %vm2423 = vweird.f32 %v2416
      %vm2424 = vmor %vm2422, %vm2423
      %v2425 = vsel %vm2424, %v2416, %v2421
      %v2426 = vrsqrt.pop %v2250
      %v2427 = vmul.f32 %v2426, %v2250
      %v2428 = vmul.f32 %v2427, %v2426
      %v2429 = vmul.f32 0.5, %v2428
      %v2430 = vsub.f32 1.5, %v2429
      %v2431 = vmul.f32 %v2426, %v2430
      %vm2432 = vweird.f32 %v2250
      %vm2433 = vweird.f32 %v2426
      %vm2434 = vmor %vm2432, %vm2433
      %v2435 = vsel %vm2434, %v2426, %v2431
      %v2436 = vrsqrt.pop %v2251
      %v2437 = vmul.f32 %v2436, %v2251
      %v2438 = vmul.f32 %v2437, %v2436
      %v2439 = vmul.f32 0.5, %v2438
      %v2440 = vsub.f32 1.5, %v2439
      %v2441 = vmul.f32 %v2436, %v2440
      %vm2442 = vweird.f32 %v2251
      %vm2443 = vweird.f32 %v2436
      %vm2444 = vmor %vm2442, %vm2443
      %v2445 = vsel %vm2444, %v2436, %v2441
      %v2446 = vrsqrt.pop %v2252
      %v2447 = vmul.f32 %v2446, %v2252
      %v2448 = vmul.f32 %v2447, %v2446
      %v2449 = vmul.f32 0.5, %v2448
      %v2450 = vsub.f32 1.5, %v2449
      %v2451 = vmul.f32 %v2446, %v2450
      %vm2452 = vweird.f32 %v2252
      %vm2453 = vweird.f32 %v2446
      %vm2454 = vmor %vm2452, %vm2453
      %v2455 = vsel %vm2454, %v2446, %v2451
      %v2456 = vrsqrt.pop %v2253
      %v2457 = vmul.f32 %v2456, %v2253
      %v2458 = vmul.f32 %v2457, %v2456
      %v2459 = vmul.f32 0.5, %v2458
      %v2460 = vsub.f32 1.5, %v2459
      %v2461 = vmul.f32 %v2456, %v2460
      %vm2462 = vweird.f32 %v2253
      %vm2463 = vweird.f32 %v2456
      %vm2464 = vmor %vm2462, %vm2463
      %v2465 = vsel %vm2464, %v2456, %v2461
      %v2466 = vrsqrt.pop %v2254
      %v2467 = vmul.f32 %v2466, %v2254
      %v2468 = vmul.f32 %v2467, %v2466
      %v2469 = vmul.f32 0.5, %v2468
      %v2470 = vsub.f32 1.5, %v2469
      %v2471 = vmul.f32 %v2466, %v2470
      %vm2472 = vweird.f32 %v2254
      %vm2473 = vweird.f32 %v2466
      %vm2474 = vmor %vm2472, %vm2473
      %v2475 = vsel %vm2474, %v2466, %v2471
      %v2476 = vrsqrt.pop %v2255
      %v2477 = vmul.f32 %v2476, %v2255
      %v2478 = vmul.f32 %v2477, %v2476
      %v2479 = vmul.f32 0.5, %v2478
      %v2480 = vsub.f32 1.5, %v2479
      %v2481 = vmul.f32 %v2476, %v2480
      %vm2482 = vweird.f32 %v2255
      %vm2483 = vweird.f32 %v2476
      %vm2484 = vmor %vm2482, %vm2483
      %v2485 = vsel %vm2484, %v2476, %v2481
      %v2486 = vrsqrt.pop %v2256
      %v2487 = vmul.f32 %v2486, %v2256
      %v2488 = vmul.f32 %v2487, %v2486
      %v2489 = vmul.f32 0.5, %v2488
      %v2490 = vsub.f32 1.5, %v2489
      %v2491 = vmul.f32 %v2486, %v2490
      %vm2492 = vweird.f32 %v2256
      %vm2493 = vweird.f32 %v2486
      %vm2494 = vmor %vm2492, %vm2493
      %v2495 = vsel %vm2494, %v2486, %v2491
      %v2496 = vrsqrt.pop %v2257
      %v2497 = vmul.f32 %v2496, %v2257
      %v2498 = vmul.f32 %v2497, %v2496
      %v2499 = vmul.f32 0.5, %v2498
      %v2500 = vsub.f32 1.5, %v2499
      %v2501 = vmul.f32 %v2496, %v2500
      %vm2502 = vweird.f32 %v2257
      %vm2503 = vweird.f32 %v2496
      %vm2504 = vmor %vm2502, %vm2503
      %v2505 = vsel %vm2504, %v2496, %v2501
      %v2506 = vrsqrt.pop %v2258
      %v2507 = vmul.f32 %v2506, %v2258
      %v2508 = vmul.f32 %v2507, %v2506
      %v2509 = vmul.f32 0.5, %v2508
      %v2510 = vsub.f32 1.5, %v2509
      %v2511 = vmul.f32 %v2506, %v2510
      %vm2512 = vweird.f32 %v2258
      %vm2513 = vweird.f32 %v2506
      %vm2514 = vmor %vm2512, %vm2513
      %v2515 = vsel %vm2514, %v2506, %v2511
      %v2516 = vrsqrt.pop %v2259
      %v2517 = vmul.f32 %v2516, %v2259
      %v2518 = vmul.f32 %v2517, %v2516
      %v2519 = vmul.f32 0.5, %v2518
      %v2520 = vsub.f32 1.5, %v2519
      %v2521 = vmul.f32 %v2516, %v2520
      %vm2522 = vweird.f32 %v2259
      %vm2523 = vweird.f32 %v2516
      %vm2524 = vmor %vm2522, %vm2523
      %v2525 = vsel %vm2524, %v2516, %v2521
      %v2526 = vrsqrt.pop %v2260
      %v2527 = vmul.f32 %v2526, %v2260
      %v2528 = vmul.f32 %v2527, %v2526
      %v2529 = vmul.f32 0.5, %v2528
      %v2530 = vsub.f32 1.5, %v2529
      %v2531 = vmul.f32 %v2526, %v2530
      %vm2532 = vweird.f32 %v2260
      %vm2533 = vweird.f32 %v2526
      %vm2534 = vmor %vm2532, %vm2533
      %v2535 = vsel %vm2534, %v2526, %v2531
      %v2536 = vrsqrt.pop %v2261
      %v2537 = vmul.f32 %v2536, %v2261
      %v2538 = vmul.f32 %v2537, %v2536
      %v2539 = vmul.f32 0.5, %v2538
      %v2540 = vsub.f32 1.5, %v2539
      %v2541 = vmul.f32 %v2536, %v2540
      %vm2542 = vweird.f32 %v2261
      %vm2543 = vweird.f32 %v2536
      %vm2544 = vmor %vm2542, %vm2543
      %v2545 = vsel %vm2544, %v2536, %v2541
      %v2546 = vrsqrt.pop %v2262
      %v2547 = vmul.f32 %v2546, %v2262
      %v2548 = vmul.f32 %v2547, %v2546
      %v2549 = vmul.f32 0.5, %v2548
      %v2550 = vsub.f32 1.5, %v2549
      %v2551 = vmul.f32 %v2546, %v2550
      %vm2552 = vweird.f32 %v2262
      %vm2553 = vweird.f32 %v2546
      %vm2554 = vmor %vm2552, %vm2553
      %v2555 = vsel %vm2554, %v2546, %v2551
      %v2556 = vrsqrt.pop %v2263
      %v2557 = vmul.f32 %v2556, %v2263
      %v2558 = vmul.f32 %v2557, %v2556
      %v2559 = vmul.f32 0.5, %v2558
      %v2560 = vsub.f32 1.5, %v2559
      %v2561 = vmul.f32 %v2556, %v2560
      %vm2562 = vweird.f32 %v2263
      %vm2563 = vweird.f32 %v2556
      %vm2564 = vmor %vm2562, %vm2563
      %v2565 = vsel %vm2564, %v2556, %v2561
      %v2566 = vrsqrt.pop %v2264
      %v2567 = vmul.f32 %v2566, %v2264
      %v2568 = vmul.f32 %v2567, %v2566
      %v2569 = vmul.f32 0.5, %v2568
      %v2570 = vsub.f32 1.5, %v2569
      %v2571 = vmul.f32 %v2566, %v2570
      %vm2572 = vweird.f32 %v2264
      %vm2573 = vweird.f32 %v2566
      %vm2574 = vmor %vm2572, %vm2573
      %v2575 = vsel %vm2574, %v2566, %v2571
      %v2576 = vrsqrt.pop %v2265
      %v2577 = vmul.f32 %v2576, %v2265
      %v2578 = vmul.f32 %v2577, %v2576
      %v2579 = vmul.f32 0.5, %v2578
      %v2580 = vsub.f32 1.5, %v2579
      %v2581 = vmul.f32 %v2576, %v2580
      %vm2582 = vweird.f32 %v2265
      %vm2583 = vweird.f32 %v2576
      %vm2584 = vmor %vm2582, %vm2583
      %v2585 = vsel %vm2584, %v2576, %v2581
      %v2586 = vld [vmem:[%s277] sm:$0xff]
      %v2587 = vld [vmem:[%s277 + $0x8] sm:$0xff]
      %v2588 = vld [vmem:[%s277 + $0x10] sm:$0xff]
      %v2589 = vld [vmem:[%s277 + $0x18] sm:$0xff]
      %v2590 = vld [vmem:[%s277 + $0x20] sm:$0xff]
      %v2591 = vld [vmem:[%s277 + $0x28] sm:$0xff]
      %v2592 = vld [vmem:[%s277 + $0x30] sm:$0xff]
      %v2593 = vld [vmem:[%s277 + $0x38] sm:$0xff]
      %v2594 = vld [vmem:[%s277 + $0x40] sm:$0xff]
      %v2595 = vld [vmem:[%s277 + $0x48] sm:$0xff]
      %v2596 = vld [vmem:[%s277 + $0x50] sm:$0xff]
      %v2597 = vld [vmem:[%s277 + $0x58] sm:$0xff]
      %v2598 = vld [vmem:[%s277 + $0x60] sm:$0xff]
      %v2599 = vld [vmem:[%s277 + $0x68] sm:$0xff]
      %v2600 = vld [vmem:[%s277 + $0x70] sm:$0xff]
      %v2601 = vld [vmem:[%s277 + $0x78] sm:$0xff]
      %v2602 = vld [vmem:[%s277 + $0x80] sm:$0xff]
      %v2603 = vld [vmem:[%s277 + $0x88] sm:$0xff]
      %v2604 = vld [vmem:[%s277 + $0x90] sm:$0xff]
      %v2605 = vld [vmem:[%s277 + $0x98] sm:$0xff]
      %v2606 = vld [vmem:[%s277 + $0xa0] sm:$0xff]
      %v2607 = vld [vmem:[%s277 + $0xa8] sm:$0xff]
      %v2608 = vld [vmem:[%s277 + $0xb0] sm:$0xff]
      %v2609 = vld [vmem:[%s277 + $0xb8] sm:$0xff]
      %v2610 = vld [vmem:[%s277 + $0xc0] sm:$0xff]
      %v2611 = vld [vmem:[%s277 + $0xc8] sm:$0xff]
      %v2612 = vld [vmem:[%s277 + $0xd0] sm:$0xff]
      %v2613 = vld [vmem:[%s277 + $0xd8] sm:$0xff]
      %v2614 = vld [vmem:[%s277 + $0xe0] sm:$0xff]
      %v2615 = vld [vmem:[%s277 + $0xe8] sm:$0xff]
      %v2616 = vld [vmem:[%s277 + $0xf0] sm:$0xff]
      %v2617 = vld [vmem:[%s277 + $0xf8] sm:$0xff]
      %v2618 = vmul.f32 %v2586, %v2275
      %v2619 = vmul.f32 %v2587, %v2285
      %v2620 = vmul.f32 %v2588, %v2295
      %v2621 = vmul.f32 %v2589, %v2305
      %v2622 = vmul.f32 %v2590, %v2315
      %v2623 = vmul.f32 %v2591, %v2325
      %v2624 = vmul.f32 %v2592, %v2335
      %v2625 = vmul.f32 %v2593, %v2345
      %v2626 = vmul.f32 %v2594, %v2355
      %v2627 = vmul.f32 %v2595, %v2365
      %v2628 = vmul.f32 %v2596, %v2375
      %v2629 = vmul.f32 %v2597, %v2385
      %v2630 = vmul.f32 %v2598, %v2395
      %v2631 = vmul.f32 %v2599, %v2405
      %v2632 = vmul.f32 %v2600, %v2415
      %v2633 = vmul.f32 %v2601, %v2425
      %v2634 = vmul.f32 %v2602, %v2435
      %v2635 = vmul.f32 %v2603, %v2445
      %v2636 = vmul.f32 %v2604, %v2455
      %v2637 = vmul.f32 %v2605, %v2465
      %v2638 = vmul.f32 %v2606, %v2475
      %v2639 = vmul.f32 %v2607, %v2485
      %v2640 = vmul.f32 %v2608, %v2495
      %v2641 = vmul.f32 %v2609, %v2505
      %v2642 = vmul.f32 %v2610, %v2515
      %v2643 = vmul.f32 %v2611, %v2525
      %v2644 = vmul.f32 %v2612, %v2535
      %v2645 = vmul.f32 %v2613, %v2545
      %v2646 = vmul.f32 %v2614, %v2555
      %v2647 = vmul.f32 %v2615, %v2565
      %v2648 = vmul.f32 %v2616, %v2575
      %v2649 = vmul.f32 %v2617, %v2585
      %2651 = vset.pattern.permute.xlu0 0
      %2652 = vperm.xlu0 %2651, %v2618
      %v2653 = vpop.permute.xlu0 %2652
      %2656 = vset.pattern.permute.xlu0 0
      %2657 = vperm.xlu0 %2656, %v2619
      %v2658 = vpop.permute.xlu0 %2657
      %2661 = vset.pattern.permute.xlu0 0
      %2662 = vperm.xlu0 %2661, %v2620
      %v2663 = vpop.permute.xlu0 %2662
      %2666 = vset.pattern.permute.xlu0 0
      %2667 = vperm.xlu0 %2666, %v2621
      %v2668 = vpop.permute.xlu0 %2667
      %2671 = vset.pattern.permute.xlu0 0
      %2672 = vperm.xlu0 %2671, %v2622
      %v2673 = vpop.permute.xlu0 %2672
      %2676 = vset.pattern.permute.xlu0 0
      %2677 = vperm.xlu0 %2676, %v2623
      %v2678 = vpop.permute.xlu0 %2677
      %2681 = vset.pattern.permute.xlu0 0
      %2682 = vperm.xlu0 %2681, %v2624
      %v2683 = vpop.permute.xlu0 %2682
      %2686 = vset.pattern.permute.xlu0 0
      %2687 = vperm.xlu0 %2686, %v2625
      %v2688 = vpop.permute.xlu0 %2687
      %2691 = vset.pattern.permute.xlu0 0
      %2692 = vperm.xlu0 %2691, %v2626
      %v2693 = vpop.permute.xlu0 %2692
      %2696 = vset.pattern.permute.xlu0 0
      %2697 = vperm.xlu0 %2696, %v2627
      %v2698 = vpop.permute.xlu0 %2697
      %2701 = vset.pattern.permute.xlu0 0
      %2702 = vperm.xlu0 %2701, %v2628
      %v2703 = vpop.permute.xlu0 %2702
      %2706 = vset.pattern.permute.xlu0 0
      %2707 = vperm.xlu0 %2706, %v2629
      %v2708 = vpop.permute.xlu0 %2707
      %2711 = vset.pattern.permute.xlu0 0
      %2712 = vperm.xlu0 %2711, %v2630
      %v2713 = vpop.permute.xlu0 %2712
      %2716 = vset.pattern.permute.xlu0 0
      %2717 = vperm.xlu0 %2716, %v2631
      %v2718 = vpop.permute.xlu0 %2717
      %2721 = vset.pattern.permute.xlu0 0
      %2722 = vperm.xlu0 %2721, %v2632
      %v2723 = vpop.permute.xlu0 %2722
      %2726 = vset.pattern.permute.xlu0 0
      %2727 = vperm.xlu0 %2726, %v2633
      %v2728 = vpop.permute.xlu0 %2727
      %2731 = vset.pattern.permute.xlu0 0
      %2732 = vperm.xlu0 %2731, %v2634
      %v2733 = vpop.permute.xlu0 %2732
      %2736 = vset.pattern.permute.xlu0 0
      %2737 = vperm.xlu0 %2736, %v2635
      %v2738 = vpop.permute.xlu0 %2737
      %2741 = vset.pattern.permute.xlu0 0
      %2742 = vperm.xlu0 %2741, %v2636
      %v2743 = vpop.permute.xlu0 %2742
      %2746 = vset.pattern.permute.xlu0 0
      %2747 = vperm.xlu0 %2746, %v2637
      %v2748 = vpop.permute.xlu0 %2747
      %2751 = vset.pattern.permute.xlu0 0
      %2752 = vperm.xlu0 %2751, %v2638
      %v2753 = vpop.permute.xlu0 %2752
      %2756 = vset.pattern.permute.xlu0 0
      %2757 = vperm.xlu0 %2756, %v2639
      %v2758 = vpop.permute.xlu0 %2757
      %2761 = vset.pattern.permute.xlu0 0
      %2762 = vperm.xlu0 %2761, %v2640
      %v2763 = vpop.permute.xlu0 %2762
      %2766 = vset.pattern.permute.xlu0 0
      %2767 = vperm.xlu0 %2766, %v2641
      %v2768 = vpop.permute.xlu0 %2767
      %2771 = vset.pattern.permute.xlu0 0
      %2772 = vperm.xlu0 %2771, %v2642
      %v2773 = vpop.permute.xlu0 %2772
      %2776 = vset.pattern.permute.xlu0 0
      %2777 = vperm.xlu0 %2776, %v2643
      %v2778 = vpop.permute.xlu0 %2777
      %2781 = vset.pattern.permute.xlu0 0
      %2782 = vperm.xlu0 %2781, %v2644
      %v2783 = vpop.permute.xlu0 %2782
      %2786 = vset.pattern.permute.xlu0 0
      %2787 = vperm.xlu0 %2786, %v2645
      %v2788 = vpop.permute.xlu0 %2787
      %2791 = vset.pattern.permute.xlu0 0
      %2792 = vperm.xlu0 %2791, %v2646
      %v2793 = vpop.permute.xlu0 %2792
      %2796 = vset.pattern.permute.xlu0 0
      %2797 = vperm.xlu0 %2796, %v2647
      %v2798 = vpop.permute.xlu0 %2797
      %2801 = vset.pattern.permute.xlu0 0
      %2802 = vperm.xlu0 %2801, %v2648
      %v2803 = vpop.permute.xlu0 %2802
      %2806 = vset.pattern.permute.xlu0 0
      %2807 = vperm.xlu0 %2806, %v2649
      %v2808 = vpop.permute.xlu0 %2807
      %v2810 = vmul.f32 %v1466, %v2653
      %v2811 = vmul.f32 %v1467, %v2653
      %v2812 = vmul.f32 %v1468, %v2653
      %v2813 = vmul.f32 %v1469, %v2653
      %v2814 = vmul.f32 %v1470, %v2653
      %v2815 = vmul.f32 %v1471, %v2653
      %v2816 = vmul.f32 %v1472, %v2653
      %v2817 = vmul.f32 %v1473, %v2658
      %v2818 = vmul.f32 %v1474, %v2658
      %v2819 = vmul.f32 %v1475, %v2658
      %v2820 = vmul.f32 %v1476, %v2658
      %v2821 = vmul.f32 %v1477, %v2658
      %v2822 = vmul.f32 %v1478, %v2658
      %v2823 = vmul.f32 %v1479, %v2658
      %v2824 = vmul.f32 %v1480, %v2663
      %v2825 = vmul.f32 %v1481, %v2663
      %v2826 = vmul.f32 %v1482, %v2663
      %v2827 = vmul.f32 %v1483, %v2663
      %v2828 = vmul.f32 %v1484, %v2663
      %v2829 = vmul.f32 %v1485, %v2663
      %v2830 = vmul.f32 %v1486, %v2663
      %v2831 = vmul.f32 %v1487, %v2668
      %v2832 = vmul.f32 %v1488, %v2668
      %v2833 = vmul.f32 %v1489, %v2668
      %v2834 = vmul.f32 %v1490, %v2668
      %v2835 = vmul.f32 %v1491, %v2668
      %v2836 = vmul.f32 %v1492, %v2668
      %v2837 = vmul.f32 %v1493, %v2668
      %v2838 = vmul.f32 %v1494, %v2673
      %v2839 = vmul.f32 %v1495, %v2673
      %v2840 = vmul.f32 %v1496, %v2673
      %v2841 = vmul.f32 %v1497, %v2673
      %v2842 = vmul.f32 %v1498, %v2673
      %v2843 = vmul.f32 %v1499, %v2673
      %v2844 = vmul.f32 %v1500, %v2673
      %v2845 = vmul.f32 %v1501, %v2678
      %v2846 = vmul.f32 %v1502, %v2678
      %v2847 = vmul.f32 %v1503, %v2678
      %v2848 = vmul.f32 %v1504, %v2678
      %v2849 = vmul.f32 %v1505, %v2678
      %v2850 = vmul.f32 %v1506, %v2678
      %v2851 = vmul.f32 %v1507, %v2678
      %v2852 = vmul.f32 %v1508, %v2683
      %v2853 = vmul.f32 %v1509, %v2683
      %v2854 = vmul.f32 %v1510, %v2683
      %v2855 = vmul.f32 %v1511, %v2683
      %v2856 = vmul.f32 %v1512, %v2683
      %v2857 = vmul.f32 %v1513, %v2683
      %v2858 = vmul.f32 %v1514, %v2683
      %v2859 = vmul.f32 %v1515, %v2688
      %v2860 = vmul.f32 %v1516, %v2688
      %v2861 = vmul.f32 %v1517, %v2688
      %v2862 = vmul.f32 %v1518, %v2688
      %v2863 = vmul.f32 %v1519, %v2688
      %v2864 = vmul.f32 %v1520, %v2688
      %v2865 = vmul.f32 %v1521, %v2688
      %v2866 = vmul.f32 %v1522, %v2693
      %v2867 = vmul.f32 %v1523, %v2693
      %v2868 = vmul.f32 %v1524, %v2693
      %v2869 = vmul.f32 %v1525, %v2693
      %v2870 = vmul.f32 %v1526, %v2693
      %v2871 = vmul.f32 %v1527, %v2693
      %v2872 = vmul.f32 %v1528, %v2693
      %v2873 = vmul.f32 %v1529, %v2698
      %v2874 = vmul.f32 %v1530, %v2698
      %v2875 = vmul.f32 %v1531, %v2698
      %v2876 = vmul.f32 %v1532, %v2698
      %v2877 = vmul.f32 %v1533, %v2698
      %v2878 = vmul.f32 %v1534, %v2698
      %v2879 = vmul.f32 %v1535, %v2698
      %v2880 = vmul.f32 %v1536, %v2703
      %v2881 = vmul.f32 %v1537, %v2703
      %v2882 = vmul.f32 %v1538, %v2703
      %v2883 = vmul.f32 %v1539, %v2703
      %v2884 = vmul.f32 %v1540, %v2703
      %v2885 = vmul.f32 %v1541, %v2703
      %v2886 = vmul.f32 %v1542, %v2703
      %v2887 = vmul.f32 %v1543, %v2708
      %v2888 = vmul.f32 %v1544, %v2708
      %v2889 = vmul.f32 %v1545, %v2708
      %v2890 = vmul.f32 %v1546, %v2708
      %v2891 = vmul.f32 %v1547, %v2708
      %v2892 = vmul.f32 %v1548, %v2708
      %v2893 = vmul.f32 %v1549, %v2708
      %v2894 = vmul.f32 %v1550, %v2713
      %v2895 = vmul.f32 %v1551, %v2713
      %v2896 = vmul.f32 %v1552, %v2713
      %v2897 = vmul.f32 %v1553, %v2713
      %v2898 = vmul.f32 %v1554, %v2713
      %v2899 = vmul.f32 %v1555, %v2713
      %v2900 = vmul.f32 %v1556, %v2713
      %v2901 = vmul.f32 %v1557, %v2718
      %v2902 = vmul.f32 %v1558, %v2718
      %v2903 = vmul.f32 %v1559, %v2718
      %v2904 = vmul.f32 %v1560, %v2718
      %v2905 = vmul.f32 %v1561, %v2718
      %v2906 = vmul.f32 %v1562, %v2718
      %v2907 = vmul.f32 %v1563, %v2718
      %v2908 = vmul.f32 %v1564, %v2723
      %v2909 = vmul.f32 %v1565, %v2723
      %v2910 = vmul.f32 %v1566, %v2723
      %v2911 = vmul.f32 %v1567, %v2723
      %v2912 = vmul.f32 %v1568, %v2723
      %v2913 = vmul.f32 %v1569, %v2723
      %v2914 = vmul.f32 %v1570, %v2723
      %v2915 = vmul.f32 %v1571, %v2728
      %v2916 = vmul.f32 %v1572, %v2728
      %v2917 = vmul.f32 %v1573, %v2728
      %v2918 = vmul.f32 %v1574, %v2728
      %v2919 = vmul.f32 %v1575, %v2728
      %v2920 = vmul.f32 %v1576, %v2728
      %v2921 = vmul.f32 %v1577, %v2728
      %v2922 = vmul.f32 %v1578, %v2733
      %v2923 = vmul.f32 %v1579, %v2733
      %v2924 = vmul.f32 %v1580, %v2733
      %v2925 = vmul.f32 %v1581, %v2733
      %v2926 = vmul.f32 %v1582, %v2733
      %v2927 = vmul.f32 %v1583, %v2733
      %v2928 = vmul.f32 %v1584, %v2733
      %v2929 = vmul.f32 %v1585, %v2738
      %v2930 = vmul.f32 %v1586, %v2738
      %v2931 = vmul.f32 %v1587, %v2738
      %v2932 = vmul.f32 %v1588, %v2738
      %v2933 = vmul.f32 %v1589, %v2738
      %v2934 = vmul.f32 %v1590, %v2738
      %v2935 = vmul.f32 %v1591, %v2738
      %v2936 = vmul.f32 %v1592, %v2743
      %v2937 = vmul.f32 %v1593, %v2743
      %v2938 = vmul.f32 %v1594, %v2743
      %v2939 = vmul.f32 %v1595, %v2743
      %v2940 = vmul.f32 %v1596, %v2743
      %v2941 = vmul.f32 %v1597, %v2743
      %v2942 = vmul.f32 %v1598, %v2743
      %v2943 = vmul.f32 %v1599, %v2748
      %v2944 = vmul.f32 %v1600, %v2748
      %v2945 = vmul.f32 %v1601, %v2748
      %v2946 = vmul.f32 %v1602, %v2748
      %v2947 = vmul.f32 %v1603, %v2748
      %v2948 = vmul.f32 %v1604, %v2748
      %v2949 = vmul.f32 %v1605, %v2748
      %v2950 = vmul.f32 %v1606, %v2753
      %v2951 = vmul.f32 %v1607, %v2753
      %v2952 = vmul.f32 %v1608, %v2753
      %v2953 = vmul.f32 %v1609, %v2753
      %v2954 = vmul.f32 %v1610, %v2753
      %v2955 = vmul.f32 %v1611, %v2753
      %v2956 = vmul.f32 %v1612, %v2753
      %v2957 = vmul.f32 %v1613, %v2758
      %v2958 = vmul.f32 %v1614, %v2758
      %v2959 = vmul.f32 %v1615, %v2758
      %v2960 = vmul.f32 %v1616, %v2758
      %v2961 = vmul.f32 %v1617, %v2758
      %v2962 = vmul.f32 %v1618, %v2758
      %v2963 = vmul.f32 %v1619, %v2758
      %v2964 = vmul.f32 %v1620, %v2763
      %v2965 = vmul.f32 %v1621, %v2763
      %v2966 = vmul.f32 %v1622, %v2763
      %v2967 = vmul.f32 %v1623, %v2763
      %v2968 = vmul.f32 %v1624, %v2763
      %v2969 = vmul.f32 %v1625, %v2763
      %v2970 = vmul.f32 %v1626, %v2763
      %v2971 = vmul.f32 %v1627, %v2768
      %v2972 = vmul.f32 %v1628, %v2768
      %v2973 = vmul.f32 %v1629, %v2768
      %v2974 = vmul.f32 %v1630, %v2768
      %v2975 = vmul.f32 %v1631, %v2768
      %v2976 = vmul.f32 %v1632, %v2768
      %v2977 = vmul.f32 %v1633, %v2768
      %v2978 = vmul.f32 %v1634, %v2773
      %v2979 = vmul.f32 %v1635, %v2773
      %v2980 = vmul.f32 %v1636, %v2773
      %v2981 = vmul.f32 %v1637, %v2773
      %v2982 = vmul.f32 %v1638, %v2773
      %v2983 = vmul.f32 %v1639, %v2773
      %v2984 = vmul.f32 %v1640, %v2773
      %v2985 = vmul.f32 %v1641, %v2778
      %v2986 = vmul.f32 %v1642, %v2778
      %v2987 = vmul.f32 %v1643, %v2778
      %v2988 = vmul.f32 %v1644, %v2778
      %v2989 = vmul.f32 %v1645, %v2778
      %v2990 = vmul.f32 %v1646, %v2778
      %v2991 = vmul.f32 %v1647, %v2778
      %v2992 = vmul.f32 %v1648, %v2783
      %v2993 = vmul.f32 %v1649, %v2783
      %v2994 = vmul.f32 %v1650, %v2783
      %v2995 = vmul.f32 %v1651, %v2783
      %v2996 = vmul.f32 %v1652, %v2783
      %v2997 = vmul.f32 %v1653, %v2783
      %v2998 = vmul.f32 %v1654, %v2783
      %v2999 = vmul.f32 %v1655, %v2788
      %v3000 = vmul.f32 %v1656, %v2788
      %v3001 = vmul.f32 %v1657, %v2788
      %v3002 = vmul.f32 %v1658, %v2788
      %v3003 = vmul.f32 %v1659, %v2788
      %v3004 = vmul.f32 %v1660, %v2788
      %v3005 = vmul.f32 %v1661, %v2788
      %v3006 = vmul.f32 %v1662, %v2793
      %v3007 = vmul.f32 %v1663, %v2793
      %v3008 = vmul.f32 %v1664, %v2793
      %v3009 = vmul.f32 %v1665, %v2793
      %v3010 = vmul.f32 %v1666, %v2793
      %v3011 = vmul.f32 %v1667, %v2793
      %v3012 = vmul.f32 %v1668, %v2793
      %v3013 = vmul.f32 %v1669, %v2798
      %v3014 = vmul.f32 %v1670, %v2798
      %v3015 = vmul.f32 %v1671, %v2798
      %v3016 = vmul.f32 %v1672, %v2798
      %v3017 = vmul.f32 %v1673, %v2798
      %v3018 = vmul.f32 %v1674, %v2798
      %v3019 = vmul.f32 %v1675, %v2798
      %v3020 = vmul.f32 %v1676, %v2803
      %v3021 = vmul.f32 %v1677, %v2803
      %v3022 = vmul.f32 %v1678, %v2803
      %v3023 = vmul.f32 %v1679, %v2803
      %v3024 = vmul.f32 %v1680, %v2803
      %v3025 = vmul.f32 %v1681, %v2803
      %v3026 = vmul.f32 %v1682, %v2803
      %v3027 = vmul.f32 %v1683, %v2808
      %v3028 = vmul.f32 %v1684, %v2808
      %v3029 = vmul.f32 %v1685, %v2808
      %v3030 = vmul.f32 %v1686, %v2808
      %v3031 = vmul.f32 %v1687, %v2808
      %v3032 = vmul.f32 %v1688, %v2808
      %v3033 = vmul.f32 %v1689, %v2808
      %v3034 = vld [vmem:[%s283] sm:$0xff]
      %v3035 = vld [vmem:[%s283 + $0x8] sm:$0xff]
      %v3036 = vld [vmem:[%s283 + $0x10] sm:$0xff]
      %v3037 = vld [vmem:[%s283 + $0x18] sm:$0xff]
      %v3038 = vld [vmem:[%s283 + $0x20] sm:$0xff]
      %v3039 = vld [vmem:[%s283 + $0x28] sm:$0xff]
      %v3040 = vld [vmem:[%s283 + $0x30] sm:$0xff]
      %v3041 = vld [vmem:[%s283 + $0x38] sm:$0xff]
      %v3042 = vld [vmem:[%s283 + $0x40] sm:$0xff]
      %v3043 = vld [vmem:[%s283 + $0x48] sm:$0xff]
      %v3044 = vld [vmem:[%s283 + $0x50] sm:$0xff]
      %v3045 = vld [vmem:[%s283 + $0x58] sm:$0xff]
      %v3046 = vld [vmem:[%s283 + $0x60] sm:$0xff]
      %v3047 = vld [vmem:[%s283 + $0x68] sm:$0xff]
      %v3048 = vld [vmem:[%s283 + $0x70] sm:$0xff]
      %v3049 = vld [vmem:[%s283 + $0x78] sm:$0xff]
      %v3050 = vld [vmem:[%s283 + $0x80] sm:$0xff]
      %v3051 = vld [vmem:[%s283 + $0x88] sm:$0xff]
      %v3052 = vld [vmem:[%s283 + $0x90] sm:$0xff]
      %v3053 = vld [vmem:[%s283 + $0x98] sm:$0xff]
      %v3054 = vld [vmem:[%s283 + $0xa0] sm:$0xff]
      %v3055 = vld [vmem:[%s283 + $0xa8] sm:$0xff]
      %v3056 = vld [vmem:[%s283 + $0xb0] sm:$0xff]
      %v3057 = vld [vmem:[%s283 + $0xb8] sm:$0xff]
      %v3058 = vld [vmem:[%s283 + $0xc0] sm:$0xff]
      %v3059 = vld [vmem:[%s283 + $0xc8] sm:$0xff]
      %v3060 = vld [vmem:[%s283 + $0xd0] sm:$0xff]
      %v3061 = vld [vmem:[%s283 + $0xd8] sm:$0xff]
      %v3062 = vld [vmem:[%s283 + $0xe0] sm:$0xff]
      %v3063 = vld [vmem:[%s283 + $0xe8] sm:$0xff]
      %v3064 = vld [vmem:[%s283 + $0xf0] sm:$0xff]
      %v3065 = vld [vmem:[%s283 + $0xf8] sm:$0xff]
      %3067 = vset.pattern.permute.xlu0 0
      %3068 = vperm.xlu0 %3067, %v3034
      %v3069 = vpop.permute.xlu0 %3068
      %3072 = vset.pattern.permute.xlu0 0
      %3073 = vperm.xlu0 %3072, %v3035
      %v3074 = vpop.permute.xlu0 %3073
      %3077 = vset.pattern.permute.xlu0 0
      %3078 = vperm.xlu0 %3077, %v3036
      %v3079 = vpop.permute.xlu0 %3078
      %3082 = vset.pattern.permute.xlu0 0
      %3083 = vperm.xlu0 %3082, %v3037
      %v3084 = vpop.permute.xlu0 %3083
      %3087 = vset.pattern.permute.xlu0 0
      %3088 = vperm.xlu0 %3087, %v3038
      %v3089 = vpop.permute.xlu0 %3088
      %3092 = vset.pattern.permute.xlu0 0
      %3093 = vperm.xlu0 %3092, %v3039
      %v3094 = vpop.permute.xlu0 %3093
      %3097 = vset.pattern.permute.xlu0 0
      %3098 = vperm.xlu0 %3097, %v3040
      %v3099 = vpop.permute.xlu0 %3098
      %3102 = vset.pattern.permute.xlu0 0
      %3103 = vperm.xlu0 %3102, %v3041
      %v3104 = vpop.permute.xlu0 %3103
      %3107 = vset.pattern.permute.xlu0 0
      %3108 = vperm.xlu0 %3107, %v3042
      %v3109 = vpop.permute.xlu0 %3108
      %3112 = vset.pattern.permute.xlu0 0
      %3113 = vperm.xlu0 %3112, %v3043
      %v3114 = vpop.permute.xlu0 %3113
      %3117 = vset.pattern.permute.xlu0 0
      %3118 = vperm.xlu0 %3117, %v3044
      %v3119 = vpop.permute.xlu0 %3118
      %3122 = vset.pattern.permute.xlu0 0
      %3123 = vperm.xlu0 %3122, %v3045
      %v3124 = vpop.permute.xlu0 %3123
      %3127 = vset.pattern.permute.xlu0 0
      %3128 = vperm.xlu0 %3127, %v3046
      %v3129 = vpop.permute.xlu0 %3128
      %3132 = vset.pattern.permute.xlu0 0
      %3133 = vperm.xlu0 %3132, %v3047
      %v3134 = vpop.permute.xlu0 %3133
      %3137 = vset.pattern.permute.xlu0 0
      %3138 = vperm.xlu0 %3137, %v3048
      %v3139 = vpop.permute.xlu0 %3138
      %3142 = vset.pattern.permute.xlu0 0
      %3143 = vperm.xlu0 %3142, %v3049
      %v3144 = vpop.permute.xlu0 %3143
      %3147 = vset.pattern.permute.xlu0 0
      %3148 = vperm.xlu0 %3147, %v3050
      %v3149 = vpop.permute.xlu0 %3148
      %3152 = vset.pattern.permute.xlu0 0
      %3153 = vperm.xlu0 %3152, %v3051
      %v3154 = vpop.permute.xlu0 %3153
      %3157 = vset.pattern.permute.xlu0 0
      %3158 = vperm.xlu0 %3157, %v3052
      %v3159 = vpop.permute.xlu0 %3158
      %3162 = vset.pattern.permute.xlu0 0
      %3163 = vperm.xlu0 %3162, %v3053
      %v3164 = vpop.permute.xlu0 %3163
      %3167 = vset.pattern.permute.xlu0 0
      %3168 = vperm.xlu0 %3167, %v3054
      %v3169 = vpop.permute.xlu0 %3168
      %3172 = vset.pattern.permute.xlu0 0
      %3173 = vperm.xlu0 %3172, %v3055
      %v3174 = vpop.permute.xlu0 %3173
      %3177 = vset.pattern.permute.xlu0 0
      %3178 = vperm.xlu0 %3177, %v3056
      %v3179 = vpop.permute.xlu0 %3178
      %3182 = vset.pattern.permute.xlu0 0
      %3183 = vperm.xlu0 %3182, %v3057
      %v3184 = vpop.permute.xlu0 %3183
      %3187 = vset.pattern.permute.xlu0 0
      %3188 = vperm.xlu0 %3187, %v3058
      %v3189 = vpop.permute.xlu0 %3188
      %3192 = vset.pattern.permute.xlu0 0
      %3193 = vperm.xlu0 %3192, %v3059
      %v3194 = vpop.permute.xlu0 %3193
      %3197 = vset.pattern.permute.xlu0 0
      %3198 = vperm.xlu0 %3197, %v3060
      %v3199 = vpop.permute.xlu0 %3198
      %3202 = vset.pattern.permute.xlu0 0
      %3203 = vperm.xlu0 %3202, %v3061
      %v3204 = vpop.permute.xlu0 %3203
      %3207 = vset.pattern.permute.xlu0 0
      %3208 = vperm.xlu0 %3207, %v3062
      %v3209 = vpop.permute.xlu0 %3208
      %3212 = vset.pattern.permute.xlu0 0
      %3213 = vperm.xlu0 %3212, %v3063
      %v3214 = vpop.permute.xlu0 %3213
      %3217 = vset.pattern.permute.xlu0 0
      %3218 = vperm.xlu0 %3217, %v3064
      %v3219 = vpop.permute.xlu0 %3218
      %3222 = vset.pattern.permute.xlu0 0
      %3223 = vperm.xlu0 %3222, %v3065
      %v3224 = vpop.permute.xlu0 %3223
      %v3226 = vadd.f32 %v2810, %v3069
      %v3227 = vadd.f32 %v2811, %v3069
      %v3228 = vadd.f32 %v2812, %v3069
      %v3229 = vadd.f32 %v2813, %v3069
      %v3230 = vadd.f32 %v2814, %v3069
      %v3231 = vadd.f32 %v2815, %v3069
      %v3232 = vadd.f32 %v2816, %v3069
      %v3233 = vadd.f32 %v2817, %v3074
      %v3234 = vadd.f32 %v2818, %v3074
      %v3235 = vadd.f32 %v2819, %v3074
      %v3236 = vadd.f32 %v2820, %v3074
      %v3237 = vadd.f32 %v2821, %v3074
      %v3238 = vadd.f32 %v2822, %v3074
      %v3239 = vadd.f32 %v2823, %v3074
      %v3240 = vadd.f32 %v2824, %v3079
      %v3241 = vadd.f32 %v2825, %v3079
      %v3242 = vadd.f32 %v2826, %v3079
      %v3243 = vadd.f32 %v2827, %v3079
      %v3244 = vadd.f32 %v2828, %v3079
      %v3245 = vadd.f32 %v2829, %v3079
      %v3246 = vadd.f32 %v2830, %v3079
      %v3247 = vadd.f32 %v2831, %v3084
      %v3248 = vadd.f32 %v2832, %v3084
      %v3249 = vadd.f32 %v2833, %v3084
      %v3250 = vadd.f32 %v2834, %v3084
      %v3251 = vadd.f32 %v2835, %v3084
      %v3252 = vadd.f32 %v2836, %v3084
      %v3253 = vadd.f32 %v2837, %v3084
      %v3254 = vadd.f32 %v2838, %v3089
      %v3255 = vadd.f32 %v2839, %v3089
      %v3256 = vadd.f32 %v2840, %v3089
      %v3257 = vadd.f32 %v2841, %v3089
      %v3258 = vadd.f32 %v2842, %v3089
      %v3259 = vadd.f32 %v2843, %v3089
      %v3260 = vadd.f32 %v2844, %v3089
      %v3261 = vadd.f32 %v2845, %v3094
      %v3262 = vadd.f32 %v2846, %v3094
      %v3263 = vadd.f32 %v2847, %v3094
      %v3264 = vadd.f32 %v2848, %v3094
      %v3265 = vadd.f32 %v2849, %v3094
      %v3266 = vadd.f32 %v2850, %v3094
      %v3267 = vadd.f32 %v2851, %v3094
      %v3268 = vadd.f32 %v2852, %v3099
      %v3269 = vadd.f32 %v2853, %v3099
      %v3270 = vadd.f32 %v2854, %v3099
      %v3271 = vadd.f32 %v2855, %v3099
      %v3272 = vadd.f32 %v2856, %v3099
      %v3273 = vadd.f32 %v2857, %v3099
      %v3274 = vadd.f32 %v2858, %v3099
      %v3275 = vadd.f32 %v2859, %v3104
      %v3276 = vadd.f32 %v2860, %v3104
      %v3277 = vadd.f32 %v2861, %v3104
      %v3278 = vadd.f32 %v2862, %v3104
      %v3279 = vadd.f32 %v2863, %v3104
      %v3280 = vadd.f32 %v2864, %v3104
      %v3281 = vadd.f32 %v2865, %v3104
      %v3282 = vadd.f32 %v2866, %v3109
      %v3283 = vadd.f32 %v2867, %v3109
      %v3284 = vadd.f32 %v2868, %v3109
      %v3285 = vadd.f32 %v2869, %v3109
      %v3286 = vadd.f32 %v2870, %v3109
      %v3287 = vadd.f32 %v2871, %v3109
      %v3288 = vadd.f32 %v2872, %v3109
      %v3289 = vadd.f32 %v2873, %v3114
      %v3290 = vadd.f32 %v2874, %v3114
      %v3291 = vadd.f32 %v2875, %v3114
      %v3292 = vadd.f32 %v2876, %v3114
      %v3293 = vadd.f32 %v2877, %v3114
      %v3294 = vadd.f32 %v2878, %v3114
      %v3295 = vadd.f32 %v2879, %v3114
      %v3296 = vadd.f32 %v2880, %v3119
      %v3297 = vadd.f32 %v2881, %v3119
      %v3298 = vadd.f32 %v2882, %v3119
      %v3299 = vadd.f32 %v2883, %v3119
      %v3300 = vadd.f32 %v2884, %v3119
      %v3301 = vadd.f32 %v2885, %v3119
      %v3302 = vadd.f32 %v2886, %v3119
      %v3303 = vadd.f32 %v2887, %v3124
      %v3304 = vadd.f32 %v2888, %v3124
      %v3305 = vadd.f32 %v2889, %v3124
      %v3306 = vadd.f32 %v2890, %v3124
      %v3307 = vadd.f32 %v2891, %v3124
      %v3308 = vadd.f32 %v2892, %v3124
      %v3309 = vadd.f32 %v2893, %v3124
      %v3310 = vadd.f32 %v2894, %v3129
      %v3311 = vadd.f32 %v2895, %v3129
      %v3312 = vadd.f32 %v2896, %v3129
      %v3313 = vadd.f32 %v2897, %v3129
      %v3314 = vadd.f32 %v2898, %v3129
      %v3315 = vadd.f32 %v2899, %v3129
      %v3316 = vadd.f32 %v2900, %v3129
      %v3317 = vadd.f32 %v2901, %v3134
      %v3318 = vadd.f32 %v2902, %v3134
      %v3319 = vadd.f32 %v2903, %v3134
      %v3320 = vadd.f32 %v2904, %v3134
      %v3321 = vadd.f32 %v2905, %v3134
      %v3322 = vadd.f32 %v2906, %v3134
      %v3323 = vadd.f32 %v2907, %v3134
      %v3324 = vadd.f32 %v2908, %v3139
      %v3325 = vadd.f32 %v2909, %v3139
      %v3326 = vadd.f32 %v2910, %v3139
      %v3327 = vadd.f32 %v2911, %v3139
      %v3328 = vadd.f32 %v2912, %v3139
      %v3329 = vadd.f32 %v2913, %v3139
      %v3330 = vadd.f32 %v2914, %v3139
      %v3331 = vadd.f32 %v2915, %v3144
      %v3332 = vadd.f32 %v2916, %v3144
      %v3333 = vadd.f32 %v2917, %v3144
      %v3334 = vadd.f32 %v2918, %v3144
      %v3335 = vadd.f32 %v2919, %v3144
      %v3336 = vadd.f32 %v2920, %v3144
      %v3337 = vadd.f32 %v2921, %v3144
      %v3338 = vadd.f32 %v2922, %v3149
      %v3339 = vadd.f32 %v2923, %v3149
      %v3340 = vadd.f32 %v2924, %v3149
      %v3341 = vadd.f32 %v2925, %v3149
      %v3342 = vadd.f32 %v2926, %v3149
      %v3343 = vadd.f32 %v2927, %v3149
      %v3344 = vadd.f32 %v2928, %v3149
      %v3345 = vadd.f32 %v2929, %v3154
      %v3346 = vadd.f32 %v2930, %v3154
      %v3347 = vadd.f32 %v2931, %v3154
      %v3348 = vadd.f32 %v2932, %v3154
      %v3349 = vadd.f32 %v2933, %v3154
      %v3350 = vadd.f32 %v2934, %v3154
      %v3351 = vadd.f32 %v2935, %v3154
      %v3352 = vadd.f32 %v2936, %v3159
      %v3353 = vadd.f32 %v2937, %v3159
      %v3354 = vadd.f32 %v2938, %v3159
      %v3355 = vadd.f32 %v2939, %v3159
      %v3356 = vadd.f32 %v2940, %v3159
      %v3357 = vadd.f32 %v2941, %v3159
      %v3358 = vadd.f32 %v2942, %v3159
      %v3359 = vadd.f32 %v2943, %v3164
      %v3360 = vadd.f32 %v2944, %v3164
      %v3361 = vadd.f32 %v2945, %v3164
      %v3362 = vadd.f32 %v2946, %v3164
      %v3363 = vadd.f32 %v2947, %v3164
      %v3364 = vadd.f32 %v2948, %v3164
      %v3365 = vadd.f32 %v2949, %v3164
      %v3366 = vadd.f32 %v2950, %v3169
      %v3367 = vadd.f32 %v2951, %v3169
      %v3368 = vadd.f32 %v2952, %v3169
      %v3369 = vadd.f32 %v2953, %v3169
      %v3370 = vadd.f32 %v2954, %v3169
      %v3371 = vadd.f32 %v2955, %v3169
      %v3372 = vadd.f32 %v2956, %v3169
      %v3373 = vadd.f32 %v2957, %v3174
      %v3374 = vadd.f32 %v2958, %v3174
      %v3375 = vadd.f32 %v2959, %v3174
      %v3376 = vadd.f32 %v2960, %v3174
      %v3377 = vadd.f32 %v2961, %v3174
      %v3378 = vadd.f32 %v2962, %v3174
      %v3379 = vadd.f32 %v2963, %v3174
      %v3380 = vadd.f32 %v2964, %v3179
      %v3381 = vadd.f32 %v2965, %v3179
      %v3382 = vadd.f32 %v2966, %v3179
      %v3383 = vadd.f32 %v2967, %v3179
      %v3384 = vadd.f32 %v2968, %v3179
      %v3385 = vadd.f32 %v2969, %v3179
      %v3386 = vadd.f32 %v2970, %v3179
      %v3387 = vadd.f32 %v2971, %v3184
      %v3388 = vadd.f32 %v2972, %v3184
      %v3389 = vadd.f32 %v2973, %v3184
      %v3390 = vadd.f32 %v2974, %v3184
      %v3391 = vadd.f32 %v2975, %v3184
      %v3392 = vadd.f32 %v2976, %v3184
      %v3393 = vadd.f32 %v2977, %v3184
      %v3394 = vadd.f32 %v2978, %v3189
      %v3395 = vadd.f32 %v2979, %v3189
      %v3396 = vadd.f32 %v2980, %v3189
      %v3397 = vadd.f32 %v2981, %v3189
      %v3398 = vadd.f32 %v2982, %v3189
      %v3399 = vadd.f32 %v2983, %v3189
      %v3400 = vadd.f32 %v2984, %v3189
      %v3401 = vadd.f32 %v2985, %v3194
      %v3402 = vadd.f32 %v2986, %v3194
      %v3403 = vadd.f32 %v2987, %v3194
      %v3404 = vadd.f32 %v2988, %v3194
      %v3405 = vadd.f32 %v2989, %v3194
      %v3406 = vadd.f32 %v2990, %v3194
      %v3407 = vadd.f32 %v2991, %v3194
      %v3408 = vadd.f32 %v2992, %v3199
      %v3409 = vadd.f32 %v2993, %v3199
      %v3410 = vadd.f32 %v2994, %v3199
      %v3411 = vadd.f32 %v2995, %v3199
      %v3412 = vadd.f32 %v2996, %v3199
      %v3413 = vadd.f32 %v2997, %v3199
      %v3414 = vadd.f32 %v2998, %v3199
      %v3415 = vadd.f32 %v2999, %v3204
      %v3416 = vadd.f32 %v3000, %v3204
      %v3417 = vadd.f32 %v3001, %v3204
      %v3418 = vadd.f32 %v3002, %v3204
      %v3419 = vadd.f32 %v3003, %v3204
      %v3420 = vadd.f32 %v3004, %v3204
      %v3421 = vadd.f32 %v3005, %v3204
      %v3422 = vadd.f32 %v3006, %v3209
      %v3423 = vadd.f32 %v3007, %v3209
      %v3424 = vadd.f32 %v3008, %v3209
      %v3425 = vadd.f32 %v3009, %v3209
      %v3426 = vadd.f32 %v3010, %v3209
      %v3427 = vadd.f32 %v3011, %v3209
      %v3428 = vadd.f32 %v3012, %v3209
      %v3429 = vadd.f32 %v3013, %v3214
      %v3430 = vadd.f32 %v3014, %v3214
      %v3431 = vadd.f32 %v3015, %v3214
      %v3432 = vadd.f32 %v3016, %v3214
      %v3433 = vadd.f32 %v3017, %v3214
      %v3434 = vadd.f32 %v3018, %v3214
      %v3435 = vadd.f32 %v3019, %v3214
      %v3436 = vadd.f32 %v3020, %v3219
      %v3437 = vadd.f32 %v3021, %v3219
      %v3438 = vadd.f32 %v3022, %v3219
      %v3439 = vadd.f32 %v3023, %v3219
      %v3440 = vadd.f32 %v3024, %v3219
      %v3441 = vadd.f32 %v3025, %v3219
      %v3442 = vadd.f32 %v3026, %v3219
      %v3443 = vadd.f32 %v3027, %v3224
      %v3444 = vadd.f32 %v3028, %v3224
      %v3445 = vadd.f32 %v3029, %v3224
      %v3446 = vadd.f32 %v3030, %v3224
      %v3447 = vadd.f32 %v3031, %v3224
      %v3448 = vadd.f32 %v3032, %v3224
      %v3449 = vadd.f32 %v3033, %v3224
      %v3450 = vld [vmem:[%s290] sm:$0xff]
      %v3451 = vld [vmem:[%s290 + $0x8] sm:$0xff]
      %v3452 = vld [vmem:[%s290 + $0x10] sm:$0xff]
      %v3453 = vld [vmem:[%s290 + $0x18] sm:$0xff]
      %v3454 = vld [vmem:[%s290 + $0x20] sm:$0xff]
      %v3455 = vld [vmem:[%s290 + $0x28] sm:$0xff]
      %v3456 = vld [vmem:[%s290 + $0x30] sm:$0xff]
      %v3457 = vld [vmem:[%s290 + $0x38] sm:$0xff]
      %v3458 = vld [vmem:[%s290 + $0x40] sm:$0xff]
      %v3459 = vld [vmem:[%s290 + $0x48] sm:$0xff]
      %v3460 = vld [vmem:[%s290 + $0x50] sm:$0xff]
      %v3461 = vld [vmem:[%s290 + $0x58] sm:$0xff]
      %v3462 = vld [vmem:[%s290 + $0x60] sm:$0xff]
      %v3463 = vld [vmem:[%s290 + $0x68] sm:$0xff]
      %v3464 = vld [vmem:[%s290 + $0x70] sm:$0xff]
      %v3465 = vld [vmem:[%s290 + $0x78] sm:$0xff]
      %v3466 = vld [vmem:[%s290 + $0x80] sm:$0xff]
      %v3467 = vld [vmem:[%s290 + $0x88] sm:$0xff]
      %v3468 = vld [vmem:[%s290 + $0x90] sm:$0xff]
      %v3469 = vld [vmem:[%s290 + $0x98] sm:$0xff]
      %v3470 = vld [vmem:[%s290 + $0xa0] sm:$0xff]
      %v3471 = vld [vmem:[%s290 + $0xa8] sm:$0xff]
      %v3472 = vld [vmem:[%s290 + $0xb0] sm:$0xff]
      %v3473 = vld [vmem:[%s290 + $0xb8] sm:$0xff]
      %v3474 = vld [vmem:[%s290 + $0xc0] sm:$0xff]
      %v3475 = vld [vmem:[%s290 + $0xc8] sm:$0xff]
      %v3476 = vld [vmem:[%s290 + $0xd0] sm:$0xff]
      %v3477 = vld [vmem:[%s290 + $0xd8] sm:$0xff]
      %v3478 = vld [vmem:[%s290 + $0xe0] sm:$0xff]
      %v3479 = vld [vmem:[%s290 + $0xe8] sm:$0xff]
      %v3480 = vld [vmem:[%s290 + $0xf0] sm:$0xff]
      %v3481 = vld [vmem:[%s290 + $0xf8] sm:$0xff]
      %v3482 = vld [vmem:[%s290 + $0x100] sm:$0xff]
      %v3483 = vld [vmem:[%s290 + $0x108] sm:$0xff]
      %v3484 = vld [vmem:[%s290 + $0x110] sm:$0xff]
      %v3485 = vld [vmem:[%s290 + $0x118] sm:$0xff]
      %v3486 = vld [vmem:[%s290 + $0x120] sm:$0xff]
      %v3487 = vld [vmem:[%s290 + $0x128] sm:$0xff]
      %v3488 = vld [vmem:[%s290 + $0x130] sm:$0xff]
      %v3489 = vld [vmem:[%s290 + $0x138] sm:$0xff]
      %v3490 = vld [vmem:[%s290 + $0x140] sm:$0xff]
      %v3491 = vld [vmem:[%s290 + $0x148] sm:$0xff]
      %v3492 = vld [vmem:[%s290 + $0x150] sm:$0xff]
      %v3493 = vld [vmem:[%s290 + $0x158] sm:$0xff]
      %v3494 = vld [vmem:[%s290 + $0x160] sm:$0xff]
      %v3495 = vld [vmem:[%s290 + $0x168] sm:$0xff]
      %v3496 = vld [vmem:[%s290 + $0x170] sm:$0xff]
      %v3497 = vld [vmem:[%s290 + $0x178] sm:$0xff]
      %v3498 = vld [vmem:[%s290 + $0x180] sm:$0xff]
      %v3499 = vld [vmem:[%s290 + $0x188] sm:$0xff]
      %v3500 = vld [vmem:[%s290 + $0x190] sm:$0xff]
      %v3501 = vld [vmem:[%s290 + $0x198] sm:$0xff]
      %v3502 = vld [vmem:[%s290 + $0x1a0] sm:$0xff]
      %v3503 = vld [vmem:[%s290 + $0x1a8] sm:$0xff]
      %v3504 = vld [vmem:[%s290 + $0x1b0] sm:$0xff]
      %v3505 = vld [vmem:[%s290 + $0x1b8] sm:$0xff]
      %v3506 = vld [vmem:[%s290 + $0x1c0] sm:$0xff]
      %v3507 = vld [vmem:[%s290 + $0x1c8] sm:$0xff]
      %v3508 = vld [vmem:[%s290 + $0x1d0] sm:$0xff]
      %v3509 = vld [vmem:[%s290 + $0x1d8] sm:$0xff]
      %v3510 = vld [vmem:[%s290 + $0x1e0] sm:$0xff]
      %v3511 = vld [vmem:[%s290 + $0x1e8] sm:$0xff]
      %v3512 = vld [vmem:[%s290 + $0x1f0] sm:$0xff]
      %v3513 = vld [vmem:[%s290 + $0x1f8] sm:$0xff]
      %v3514 = vld [vmem:[%s290 + $0x200] sm:$0xff]
      %v3515 = vld [vmem:[%s290 + $0x208] sm:$0xff]
      %v3516 = vld [vmem:[%s290 + $0x210] sm:$0xff]
      %v3517 = vld [vmem:[%s290 + $0x218] sm:$0xff]
      %v3518 = vld [vmem:[%s290 + $0x220] sm:$0xff]
      %v3519 = vld [vmem:[%s290 + $0x228] sm:$0xff]
      %v3520 = vld [vmem:[%s290 + $0x230] sm:$0xff]
      %v3521 = vld [vmem:[%s290 + $0x238] sm:$0xff]
      %v3522 = vld [vmem:[%s290 + $0x240] sm:$0xff]
      %v3523 = vld [vmem:[%s290 + $0x248] sm:$0xff]
      %v3524 = vld [vmem:[%s290 + $0x250] sm:$0xff]
      %v3525 = vld [vmem:[%s290 + $0x258] sm:$0xff]
      %v3526 = vld [vmem:[%s290 + $0x260] sm:$0xff]
      %v3527 = vld [vmem:[%s290 + $0x268] sm:$0xff]
      %v3528 = vld [vmem:[%s290 + $0x270] sm:$0xff]
      %v3529 = vld [vmem:[%s290 + $0x278] sm:$0xff]
      %v3530 = vld [vmem:[%s290 + $0x280] sm:$0xff]
      %v3531 = vld [vmem:[%s290 + $0x288] sm:$0xff]
      %v3532 = vld [vmem:[%s290 + $0x290] sm:$0xff]
      %v3533 = vld [vmem:[%s290 + $0x298] sm:$0xff]
      %v3534 = vld [vmem:[%s290 + $0x2a0] sm:$0xff]
      %v3535 = vld [vmem:[%s290 + $0x2a8] sm:$0xff]
      %v3536 = vld [vmem:[%s290 + $0x2b0] sm:$0xff]
      %v3537 = vld [vmem:[%s290 + $0x2b8] sm:$0xff]
      %v3538 = vld [vmem:[%s290 + $0x2c0] sm:$0xff]
      %v3539 = vld [vmem:[%s290 + $0x2c8] sm:$0xff]
      %v3540 = vld [vmem:[%s290 + $0x2d0] sm:$0xff]
      %v3541 = vld [vmem:[%s290 + $0x2d8] sm:$0xff]
      %v3542 = vld [vmem:[%s290 + $0x2e0] sm:$0xff]
      %v3543 = vld [vmem:[%s290 + $0x2e8] sm:$0xff]
      %v3544 = vld [vmem:[%s290 + $0x2f0] sm:$0xff]
      %v3545 = vld [vmem:[%s290 + $0x2f8] sm:$0xff]
      %v3546 = vld [vmem:[%s290 + $0x300] sm:$0xff]
      %v3547 = vld [vmem:[%s290 + $0x308] sm:$0xff]
      %v3548 = vld [vmem:[%s290 + $0x310] sm:$0xff]
      %v3549 = vld [vmem:[%s290 + $0x318] sm:$0xff]
      %v3550 = vld [vmem:[%s290 + $0x320] sm:$0xff]
      %v3551 = vld [vmem:[%s290 + $0x328] sm:$0xff]
      %v3552 = vld [vmem:[%s290 + $0x330] sm:$0xff]
      %v3553 = vld [vmem:[%s290 + $0x338] sm:$0xff]
      %v3554 = vld [vmem:[%s290 + $0x340] sm:$0xff]
      %v3555 = vld [vmem:[%s290 + $0x348] sm:$0xff]
      %v3556 = vld [vmem:[%s290 + $0x350] sm:$0xff]
      %v3557 = vld [vmem:[%s290 + $0x358] sm:$0xff]
      %v3558 = vld [vmem:[%s290 + $0x360] sm:$0xff]
      %v3559 = vld [vmem:[%s290 + $0x368] sm:$0xff]
      %v3560 = vld [vmem:[%s290 + $0x370] sm:$0xff]
      %v3561 = vld [vmem:[%s290 + $0x378] sm:$0xff]
      %v3562 = vld [vmem:[%s290 + $0x380] sm:$0xff]
      %v3563 = vld [vmem:[%s290 + $0x388] sm:$0xff]
      %v3564 = vld [vmem:[%s290 + $0x390] sm:$0xff]
      %v3565 = vld [vmem:[%s290 + $0x398] sm:$0xff]
      %v3566 = vld [vmem:[%s290 + $0x3a0] sm:$0xff]
      %v3567 = vld [vmem:[%s290 + $0x3a8] sm:$0xff]
      %v3568 = vld [vmem:[%s290 + $0x3b0] sm:$0xff]
      %v3569 = vld [vmem:[%s290 + $0x3b8] sm:$0xff]
      %v3570 = vld [vmem:[%s290 + $0x3c0] sm:$0xff]
      %v3571 = vld [vmem:[%s290 + $0x3c8] sm:$0xff]
      %v3572 = vld [vmem:[%s290 + $0x3d0] sm:$0xff]
      %v3573 = vld [vmem:[%s290 + $0x3d8] sm:$0xff]
      %v3574 = vld [vmem:[%s290 + $0x3e0] sm:$0xff]
      %v3575 = vld [vmem:[%s290 + $0x3e8] sm:$0xff]
      %v3576 = vld [vmem:[%s290 + $0x3f0] sm:$0xff]
      %v3577 = vld [vmem:[%s290 + $0x3f8] sm:$0xff]
      %v3578 = vld [vmem:[%s290 + $0x400] sm:$0xff]
      %v3579 = vld [vmem:[%s290 + $0x408] sm:$0xff]
      %v3580 = vld [vmem:[%s290 + $0x410] sm:$0xff]
      %v3581 = vld [vmem:[%s290 + $0x418] sm:$0xff]
      %v3582 = vld [vmem:[%s290 + $0x420] sm:$0xff]
      %v3583 = vld [vmem:[%s290 + $0x428] sm:$0xff]
      %v3584 = vld [vmem:[%s290 + $0x430] sm:$0xff]
      %v3585 = vld [vmem:[%s290 + $0x438] sm:$0xff]
      %v3586 = vld [vmem:[%s290 + $0x440] sm:$0xff]
      %v3587 = vld [vmem:[%s290 + $0x448] sm:$0xff]
      %v3588 = vld [vmem:[%s290 + $0x450] sm:$0xff]
      %v3589 = vld [vmem:[%s290 + $0x458] sm:$0xff]
      %v3590 = vld [vmem:[%s290 + $0x460] sm:$0xff]
      %v3591 = vld [vmem:[%s290 + $0x468] sm:$0xff]
      %v3592 = vld [vmem:[%s290 + $0x470] sm:$0xff]
      %v3593 = vld [vmem:[%s290 + $0x478] sm:$0xff]
      %v3594 = vld [vmem:[%s290 + $0x480] sm:$0xff]
      %v3595 = vld [vmem:[%s290 + $0x488] sm:$0xff]
      %v3596 = vld [vmem:[%s290 + $0x490] sm:$0xff]
      %v3597 = vld [vmem:[%s290 + $0x498] sm:$0xff]
      %v3598 = vld [vmem:[%s290 + $0x4a0] sm:$0xff]
      %v3599 = vld [vmem:[%s290 + $0x4a8] sm:$0xff]
      %v3600 = vld [vmem:[%s290 + $0x4b0] sm:$0xff]
      %v3601 = vld [vmem:[%s290 + $0x4b8] sm:$0xff]
      %v3602 = vld [vmem:[%s290 + $0x4c0] sm:$0xff]
      %v3603 = vld [vmem:[%s290 + $0x4c8] sm:$0xff]
      %v3604 = vld [vmem:[%s290 + $0x4d0] sm:$0xff]
      %v3605 = vld [vmem:[%s290 + $0x4d8] sm:$0xff]
      %v3606 = vld [vmem:[%s290 + $0x4e0] sm:$0xff]
      %v3607 = vld [vmem:[%s290 + $0x4e8] sm:$0xff]
      %v3608 = vld [vmem:[%s290 + $0x4f0] sm:$0xff]
      %v3609 = vld [vmem:[%s290 + $0x4f8] sm:$0xff]
      %v3610 = vld [vmem:[%s290 + $0x500] sm:$0xff]
      %v3611 = vld [vmem:[%s290 + $0x508] sm:$0xff]
      %v3612 = vld [vmem:[%s290 + $0x510] sm:$0xff]
      %v3613 = vld [vmem:[%s290 + $0x518] sm:$0xff]
      %v3614 = vld [vmem:[%s290 + $0x520] sm:$0xff]
      %v3615 = vld [vmem:[%s290 + $0x528] sm:$0xff]
      %v3616 = vld [vmem:[%s290 + $0x530] sm:$0xff]
      %v3617 = vld [vmem:[%s290 + $0x538] sm:$0xff]
      %v3618 = vld [vmem:[%s290 + $0x540] sm:$0xff]
      %v3619 = vld [vmem:[%s290 + $0x548] sm:$0xff]
      %v3620 = vld [vmem:[%s290 + $0x550] sm:$0xff]
      %v3621 = vld [vmem:[%s290 + $0x558] sm:$0xff]
      %v3622 = vld [vmem:[%s290 + $0x560] sm:$0xff]
      %v3623 = vld [vmem:[%s290 + $0x568] sm:$0xff]
      %v3624 = vld [vmem:[%s290 + $0x570] sm:$0xff]
      %v3625 = vld [vmem:[%s290 + $0x578] sm:$0xff]
      %v3626 = vld [vmem:[%s290 + $0x580] sm:$0xff]
      %v3627 = vld [vmem:[%s290 + $0x588] sm:$0xff]
      %v3628 = vld [vmem:[%s290 + $0x590] sm:$0xff]
      %v3629 = vld [vmem:[%s290 + $0x598] sm:$0xff]
      %v3630 = vld [vmem:[%s290 + $0x5a0] sm:$0xff]
      %v3631 = vld [vmem:[%s290 + $0x5a8] sm:$0xff]
      %v3632 = vld [vmem:[%s290 + $0x5b0] sm:$0xff]
      %v3633 = vld [vmem:[%s290 + $0x5b8] sm:$0xff]
      %v3634 = vld [vmem:[%s290 + $0x5c0] sm:$0xff]
      %v3635 = vld [vmem:[%s290 + $0x5c8] sm:$0xff]
      %v3636 = vld [vmem:[%s290 + $0x5d0] sm:$0xff]
      %v3637 = vld [vmem:[%s290 + $0x5d8] sm:$0xff]
      %v3638 = vld [vmem:[%s290 + $0x5e0] sm:$0xff]
      %v3639 = vld [vmem:[%s290 + $0x5e8] sm:$0xff]
      %v3640 = vld [vmem:[%s290 + $0x5f0] sm:$0xff]
      %v3641 = vld [vmem:[%s290 + $0x5f8] sm:$0xff]
      %v3642 = vld [vmem:[%s290 + $0x600] sm:$0xff]
      %v3643 = vld [vmem:[%s290 + $0x608] sm:$0xff]
      %v3644 = vld [vmem:[%s290 + $0x610] sm:$0xff]
      %v3645 = vld [vmem:[%s290 + $0x618] sm:$0xff]
      %v3646 = vld [vmem:[%s290 + $0x620] sm:$0xff]
      %v3647 = vld [vmem:[%s290 + $0x628] sm:$0xff]
      %v3648 = vld [vmem:[%s290 + $0x630] sm:$0xff]
      %v3649 = vld [vmem:[%s290 + $0x638] sm:$0xff]
      %v3650 = vld [vmem:[%s290 + $0x640] sm:$0xff]
      %v3651 = vld [vmem:[%s290 + $0x648] sm:$0xff]
      %v3652 = vld [vmem:[%s290 + $0x650] sm:$0xff]
      %v3653 = vld [vmem:[%s290 + $0x658] sm:$0xff]
      %v3654 = vld [vmem:[%s290 + $0x660] sm:$0xff]
      %v3655 = vld [vmem:[%s290 + $0x668] sm:$0xff]
      %v3656 = vld [vmem:[%s290 + $0x670] sm:$0xff]
      %v3657 = vld [vmem:[%s290 + $0x678] sm:$0xff]
      %v3658 = vld [vmem:[%s290 + $0x680] sm:$0xff]
      %v3659 = vld [vmem:[%s290 + $0x688] sm:$0xff]
      %v3660 = vld [vmem:[%s290 + $0x690] sm:$0xff]
      %v3661 = vld [vmem:[%s290 + $0x698] sm:$0xff]
      %v3662 = vld [vmem:[%s290 + $0x6a0] sm:$0xff]
      %v3663 = vld [vmem:[%s290 + $0x6a8] sm:$0xff]
      %v3664 = vld [vmem:[%s290 + $0x6b0] sm:$0xff]
      %v3665 = vld [vmem:[%s290 + $0x6b8] sm:$0xff]
      %v3666 = vld [vmem:[%s290 + $0x6c0] sm:$0xff]
      %v3667 = vld [vmem:[%s290 + $0x6c8] sm:$0xff]
      %v3668 = vld [vmem:[%s290 + $0x6d0] sm:$0xff]
      %v3669 = vld [vmem:[%s290 + $0x6d8] sm:$0xff]
      %v3670 = vld [vmem:[%s290 + $0x6e0] sm:$0xff]
      %v3671 = vld [vmem:[%s290 + $0x6e8] sm:$0xff]
      %v3672 = vld [vmem:[%s290 + $0x6f0] sm:$0xff]
      %v3673 = vld [vmem:[%s290 + $0x6f8] sm:$0xff]
      %v3674 = vadd.f32 %v3226, %v3450
      %v3675 = vadd.f32 %v3227, %v3451
      %v3676 = vadd.f32 %v3228, %v3452
      %v3677 = vadd.f32 %v3229, %v3453
      %v3678 = vadd.f32 %v3230, %v3454
      %v3679 = vadd.f32 %v3231, %v3455
      %v3680 = vadd.f32 %v3232, %v3456
      %v3681 = vadd.f32 %v3233, %v3457
      %v3682 = vadd.f32 %v3234, %v3458
      %v3683 = vadd.f32 %v3235, %v3459
      %v3684 = vadd.f32 %v3236, %v3460
      %v3685 = vadd.f32 %v3237, %v3461
      %v3686 = vadd.f32 %v3238, %v3462
      %v3687 = vadd.f32 %v3239, %v3463
      %v3688 = vadd.f32 %v3240, %v3464
      %v3689 = vadd.f32 %v3241, %v3465
      %v3690 = vadd.f32 %v3242, %v3466
      %v3691 = vadd.f32 %v3243, %v3467
      %v3692 = vadd.f32 %v3244, %v3468
      %v3693 = vadd.f32 %v3245, %v3469
      %v3694 = vadd.f32 %v3246, %v3470
      %v3695 = vadd.f32 %v3247, %v3471
      %v3696 = vadd.f32 %v3248, %v3472
      %v3697 = vadd.f32 %v3249, %v3473
      %v3698 = vadd.f32 %v3250, %v3474
      %v3699 = vadd.f32 %v3251, %v3475
      %v3700 = vadd.f32 %v3252, %v3476
      %v3701 = vadd.f32 %v3253, %v3477
      %v3702 = vadd.f32 %v3254, %v3478
      %v3703 = vadd.f32 %v3255, %v3479
      %v3704 = vadd.f32 %v3256, %v3480
      %v3705 = vadd.f32 %v3257, %v3481
      %v3706 = vadd.f32 %v3258, %v3482
      %v3707 = vadd.f32 %v3259, %v3483
      %v3708 = vadd.f32 %v3260, %v3484
      %v3709 = vadd.f32 %v3261, %v3485
      %v3710 = vadd.f32 %v3262, %v3486
      %v3711 = vadd.f32 %v3263, %v3487
      %v3712 = vadd.f32 %v3264, %v3488
      %v3713 = vadd.f32 %v3265, %v3489
      %v3714 = vadd.f32 %v3266, %v3490
      %v3715 = vadd.f32 %v3267, %v3491
      %v3716 = vadd.f32 %v3268, %v3492
      %v3717 = vadd.f32 %v3269, %v3493
      %v3718 = vadd.f32 %v3270, %v3494
      %v3719 = vadd.f32 %v3271, %v3495
      %v3720 = vadd.f32 %v3272, %v3496
      %v3721 = vadd.f32 %v3273, %v3497
      %v3722 = vadd.f32 %v3274, %v3498
      %v3723 = vadd.f32 %v3275, %v3499
      %v3724 = vadd.f32 %v3276, %v3500
      %v3725 = vadd.f32 %v3277, %v3501
      %v3726 = vadd.f32 %v3278, %v3502
      %v3727 = vadd.f32 %v3279, %v3503
      %v3728 = vadd.f32 %v3280, %v3504
      %v3729 = vadd.f32 %v3281, %v3505
      %v3730 = vadd.f32 %v3282, %v3506
      %v3731 = vadd.f32 %v3283, %v3507
      %v3732 = vadd.f32 %v3284, %v3508
      %v3733 = vadd.f32 %v3285, %v3509
      %v3734 = vadd.f32 %v3286, %v3510
      %v3735 = vadd.f32 %v3287, %v3511
      %v3736 = vadd.f32 %v3288, %v3512
      %v3737 = vadd.f32 %v3289, %v3513
      %v3738 = vadd.f32 %v3290, %v3514
      %v3739 = vadd.f32 %v3291, %v3515
      %v3740 = vadd.f32 %v3292, %v3516
      %v3741 = vadd.f32 %v3293, %v3517
      %v3742 = vadd.f32 %v3294, %v3518
      %v3743 = vadd.f32 %v3295, %v3519
      %v3744 = vadd.f32 %v3296, %v3520
      %v3745 = vadd.f32 %v3297, %v3521
      %v3746 = vadd.f32 %v3298, %v3522
      %v3747 = vadd.f32 %v3299, %v3523
      %v3748 = vadd.f32 %v3300, %v3524
      %v3749 = vadd.f32 %v3301, %v3525
      %v3750 = vadd.f32 %v3302, %v3526
      %v3751 = vadd.f32 %v3303, %v3527
      %v3752 = vadd.f32 %v3304, %v3528
      %v3753 = vadd.f32 %v3305, %v3529
      %v3754 = vadd.f32 %v3306, %v3530
      %v3755 = vadd.f32 %v3307, %v3531
      %v3756 = vadd.f32 %v3308, %v3532
      %v3757 = vadd.f32 %v3309, %v3533
      %v3758 = vadd.f32 %v3310, %v3534
      %v3759 = vadd.f32 %v3311, %v3535
      %v3760 = vadd.f32 %v3312, %v3536
      %v3761 = vadd.f32 %v3313, %v3537
      %v3762 = vadd.f32 %v3314, %v3538
      %v3763 = vadd.f32 %v3315, %v3539
      %v3764 = vadd.f32 %v3316, %v3540
      %v3765 = vadd.f32 %v3317, %v3541
      %v3766 = vadd.f32 %v3318, %v3542
      %v3767 = vadd.f32 %v3319, %v3543
      %v3768 = vadd.f32 %v3320, %v3544
      %v3769 = vadd.f32 %v3321, %v3545
      %v3770 = vadd.f32 %v3322, %v3546
      %v3771 = vadd.f32 %v3323, %v3547
      %v3772 = vadd.f32 %v3324, %v3548
      %v3773 = vadd.f32 %v3325, %v3549
      %v3774 = vadd.f32 %v3326, %v3550
      %v3775 = vadd.f32 %v3327, %v3551
      %v3776 = vadd.f32 %v3328, %v3552
      %v3777 = vadd.f32 %v3329, %v3553
      %v3778 = vadd.f32 %v3330, %v3554
      %v3779 = vadd.f32 %v3331, %v3555
      %v3780 = vadd.f32 %v3332, %v3556
      %v3781 = vadd.f32 %v3333, %v3557
      %v3782 = vadd.f32 %v3334, %v3558
      %v3783 = vadd.f32 %v3335, %v3559
      %v3784 = vadd.f32 %v3336, %v3560
      %v3785 = vadd.f32 %v3337, %v3561
      %v3786 = vadd.f32 %v3338, %v3562
      %v3787 = vadd.f32 %v3339, %v3563
      %v3788 = vadd.f32 %v3340, %v3564
      %v3789 = vadd.f32 %v3341, %v3565
      %v3790 = vadd.f32 %v3342, %v3566
      %v3791 = vadd.f32 %v3343, %v3567
      %v3792 = vadd.f32 %v3344, %v3568
      %v3793 = vadd.f32 %v3345, %v3569
      %v3794 = vadd.f32 %v3346, %v3570
      %v3795 = vadd.f32 %v3347, %v3571
      %v3796 = vadd.f32 %v3348, %v3572
      %v3797 = vadd.f32 %v3349, %v3573
      %v3798 = vadd.f32 %v3350, %v3574
      %v3799 = vadd.f32 %v3351, %v3575
      %v3800 = vadd.f32 %v3352, %v3576
      %v3801 = vadd.f32 %v3353, %v3577
      %v3802 = vadd.f32 %v3354, %v3578
      %v3803 = vadd.f32 %v3355, %v3579
      %v3804 = vadd.f32 %v3356, %v3580
      %v3805 = vadd.f32 %v3357, %v3581
      %v3806 = vadd.f32 %v3358, %v3582
      %v3807 = vadd.f32 %v3359, %v3583
      %v3808 = vadd.f32 %v3360, %v3584
      %v3809 = vadd.f32 %v3361, %v3585
      %v3810 = vadd.f32 %v3362, %v3586
      %v3811 = vadd.f32 %v3363, %v3587
      %v3812 = vadd.f32 %v3364, %v3588
      %v3813 = vadd.f32 %v3365, %v3589
      %v3814 = vadd.f32 %v3366, %v3590
      %v3815 = vadd.f32 %v3367, %v3591
      %v3816 = vadd.f32 %v3368, %v3592
      %v3817 = vadd.f32 %v3369, %v3593
      %v3818 = vadd.f32 %v3370, %v3594
      %v3819 = vadd.f32 %v3371, %v3595
      %v3820 = vadd.f32 %v3372, %v3596
      %v3821 = vadd.f32 %v3373, %v3597
      %v3822 = vadd.f32 %v3374, %v3598
      %v3823 = vadd.f32 %v3375, %v3599
      %v3824 = vadd.f32 %v3376, %v3600
      %v3825 = vadd.f32 %v3377, %v3601
      %v3826 = vadd.f32 %v3378, %v3602
      %v3827 = vadd.f32 %v3379, %v3603
      %v3828 = vadd.f32 %v3380, %v3604
      %v3829 = vadd.f32 %v3381, %v3605
      %v3830 = vadd.f32 %v3382, %v3606
      %v3831 = vadd.f32 %v3383, %v3607
      %v3832 = vadd.f32 %v3384, %v3608
      %v3833 = vadd.f32 %v3385, %v3609
      %v3834 = vadd.f32 %v3386, %v3610
      %v3835 = vadd.f32 %v3387, %v3611
      %v3836 = vadd.f32 %v3388, %v3612
      %v3837 = vadd.f32 %v3389, %v3613
      %v3838 = vadd.f32 %v3390, %v3614
      %v3839 = vadd.f32 %v3391, %v3615
      %v3840 = vadd.f32 %v3392, %v3616
      %v3841 = vadd.f32 %v3393, %v3617
      %v3842 = vadd.f32 %v3394, %v3618
      %v3843 = vadd.f32 %v3395, %v3619
      %v3844 = vadd.f32 %v3396, %v3620
      %v3845 = vadd.f32 %v3397, %v3621
      %v3846 = vadd.f32 %v3398, %v3622
      %v3847 = vadd.f32 %v3399, %v3623
      %v3848 = vadd.f32 %v3400, %v3624
      %v3849 = vadd.f32 %v3401, %v3625
      %v3850 = vadd.f32 %v3402, %v3626
      %v3851 = vadd.f32 %v3403, %v3627
      %v3852 = vadd.f32 %v3404, %v3628
      %v3853 = vadd.f32 %v3405, %v3629
      %v3854 = vadd.f32 %v3406, %v3630
      %v3855 = vadd.f32 %v3407, %v3631
      %v3856 = vadd.f32 %v3408, %v3632
      %v3857 = vadd.f32 %v3409, %v3633
      %v3858 = vadd.f32 %v3410, %v3634
      %v3859 = vadd.f32 %v3411, %v3635
      %v3860 = vadd.f32 %v3412, %v3636
      %v3861 = vadd.f32 %v3413, %v3637
      %v3862 = vadd.f32 %v3414, %v3638
      %v3863 = vadd.f32 %v3415, %v3639
      %v3864 = vadd.f32 %v3416, %v3640
      %v3865 = vadd.f32 %v3417, %v3641
      %v3866 = vadd.f32 %v3418, %v3642
      %v3867 = vadd.f32 %v3419, %v3643
      %v3868 = vadd.f32 %v3420, %v3644
      %v3869 = vadd.f32 %v3421, %v3645
      %v3870 = vadd.f32 %v3422, %v3646
      %v3871 = vadd.f32 %v3423, %v3647
      %v3872 = vadd.f32 %v3424, %v3648
      %v3873 = vadd.f32 %v3425, %v3649
      %v3874 = vadd.f32 %v3426, %v3650
      %v3875 = vadd.f32 %v3427, %v3651
      %v3876 = vadd.f32 %v3428, %v3652
      %v3877 = vadd.f32 %v3429, %v3653
      %v3878 = vadd.f32 %v3430, %v3654
      %v3879 = vadd.f32 %v3431, %v3655
      %v3880 = vadd.f32 %v3432, %v3656
      %v3881 = vadd.f32 %v3433, %v3657
      %v3882 = vadd.f32 %v3434, %v3658
      %v3883 = vadd.f32 %v3435, %v3659
      %v3884 = vadd.f32 %v3436, %v3660
      %v3885 = vadd.f32 %v3437, %v3661
      %v3886 = vadd.f32 %v3438, %v3662
      %v3887 = vadd.f32 %v3439, %v3663
      %v3888 = vadd.f32 %v3440, %v3664
      %v3889 = vadd.f32 %v3441, %v3665
      %v3890 = vadd.f32 %v3442, %v3666
      %v3891 = vadd.f32 %v3443, %v3667
      %v3892 = vadd.f32 %v3444, %v3668
      %v3893 = vadd.f32 %v3445, %v3669
      %v3894 = vadd.f32 %v3446, %v3670
      %v3895 = vadd.f32 %v3447, %v3671
      %v3896 = vadd.f32 %v3448, %v3672
      %v3897 = vadd.f32 %v3449, %v3673
      %v3898 = vmax.f32 %v3674, 0.0
      %v3899 = vmax.f32 %v3675, 0.0
      %v3900 = vmax.f32 %v3676, 0.0
      %v3901 = vmax.f32 %v3677, 0.0
      %v3902 = vmax.f32 %v3678, 0.0
      %v3903 = vmax.f32 %v3679, 0.0
      %v3904 = vmax.f32 %v3680, 0.0
      %v3905 = vmax.f32 %v3681, 0.0
      %v3906 = vmax.f32 %v3682, 0.0
      %v3907 = vmax.f32 %v3683, 0.0
      %v3908 = vmax.f32 %v3684, 0.0
      %v3909 = vmax.f32 %v3685, 0.0
      %v3910 = vmax.f32 %v3686, 0.0
      %v3911 = vmax.f32 %v3687, 0.0
      %v3912 = vmax.f32 %v3688, 0.0
      %v3913 = vmax.f32 %v3689, 0.0
      %v3914 = vmax.f32 %v3690, 0.0
      %v3915 = vmax.f32 %v3691, 0.0
      %v3916 = vmax.f32 %v3692, 0.0
      %v3917 = vmax.f32 %v3693, 0.0
      %v3918 = vmax.f32 %v3694, 0.0
      %v3919 = vmax.f32 %v3695, 0.0
      %v3920 = vmax.f32 %v3696, 0.0
      %v3921 = vmax.f32 %v3697, 0.0
      %v3922 = vmax.f32 %v3698, 0.0
      %v3923 = vmax.f32 %v3699, 0.0
      %v3924 = vmax.f32 %v3700, 0.0
      %v3925 = vmax.f32 %v3701, 0.0
      %v3926 = vmax.f32 %v3702, 0.0
      %v3927 = vmax.f32 %v3703, 0.0
      %v3928 = vmax.f32 %v3704, 0.0
      %v3929 = vmax.f32 %v3705, 0.0
      %v3930 = vmax.f32 %v3706, 0.0
      %v3931 = vmax.f32 %v3707, 0.0
      %v3932 = vmax.f32 %v3708, 0.0
      %v3933 = vmax.f32 %v3709, 0.0
      %v3934 = vmax.f32 %v3710, 0.0
      %v3935 = vmax.f32 %v3711, 0.0
      %v3936 = vmax.f32 %v3712, 0.0
      %v3937 = vmax.f32 %v3713, 0.0
      %v3938 = vmax.f32 %v3714, 0.0
      %v3939 = vmax.f32 %v3715, 0.0
      %v3940 = vmax.f32 %v3716, 0.0
      %v3941 = vmax.f32 %v3717, 0.0
      %v3942 = vmax.f32 %v3718, 0.0
      %v3943 = vmax.f32 %v3719, 0.0
      %v3944 = vmax.f32 %v3720, 0.0
      %v3945 = vmax.f32 %v3721, 0.0
      %v3946 = vmax.f32 %v3722, 0.0
      %v3947 = vmax.f32 %v3723, 0.0
      %v3948 = vmax.f32 %v3724, 0.0
      %v3949 = vmax.f32 %v3725, 0.0
      %v3950 = vmax.f32 %v3726, 0.0
      %v3951 = vmax.f32 %v3727, 0.0
      %v3952 = vmax.f32 %v3728, 0.0
      %v3953 = vmax.f32 %v3729, 0.0
      %v3954 = vmax.f32 %v3730, 0.0
      %v3955 = vmax.f32 %v3731, 0.0
      %v3956 = vmax.f32 %v3732, 0.0
      %v3957 = vmax.f32 %v3733, 0.0
      %v3958 = vmax.f32 %v3734, 0.0
      %v3959 = vmax.f32 %v3735, 0.0
      %v3960 = vmax.f32 %v3736, 0.0
      %v3961 = vmax.f32 %v3737, 0.0
      %v3962 = vmax.f32 %v3738, 0.0
      %v3963 = vmax.f32 %v3739, 0.0
      %v3964 = vmax.f32 %v3740, 0.0
      %v3965 = vmax.f32 %v3741, 0.0
      %v3966 = vmax.f32 %v3742, 0.0
      %v3967 = vmax.f32 %v3743, 0.0
      %v3968 = vmax.f32 %v3744, 0.0
      %v3969 = vmax.f32 %v3745, 0.0
      %v3970 = vmax.f32 %v3746, 0.0
      %v3971 = vmax.f32 %v3747, 0.0
      %v3972 = vmax.f32 %v3748, 0.0
      %v3973 = vmax.f32 %v3749, 0.0
      %v3974 = vmax.f32 %v3750, 0.0
      %v3975 = vmax.f32 %v3751, 0.0
      %v3976 = vmax.f32 %v3752, 0.0
      %v3977 = vmax.f32 %v3753, 0.0
      %v3978 = vmax.f32 %v3754, 0.0
      %v3979 = vmax.f32 %v3755, 0.0
      %v3980 = vmax.f32 %v3756, 0.0
      %v3981 = vmax.f32 %v3757, 0.0
      %v3982 = vmax.f32 %v3758, 0.0
      %v3983 = vmax.f32 %v3759, 0.0
      %v3984 = vmax.f32 %v3760, 0.0
      %v3985 = vmax.f32 %v3761, 0.0
      %v3986 = vmax.f32 %v3762, 0.0
      %v3987 = vmax.f32 %v3763, 0.0
      %v3988 = vmax.f32 %v3764, 0.0
      %v3989 = vmax.f32 %v3765, 0.0
      %v3990 = vmax.f32 %v3766, 0.0
      %v3991 = vmax.f32 %v3767, 0.0
      %v3992 = vmax.f32 %v3768, 0.0
      %v3993 = vmax.f32 %v3769, 0.0
      %v3994 = vmax.f32 %v3770, 0.0
      %v3995 = vmax.f32 %v3771, 0.0
      %v3996 = vmax.f32 %v3772, 0.0
      %v3997 = vmax.f32 %v3773, 0.0
      %v3998 = vmax.f32 %v3774, 0.0
      %v3999 = vmax.f32 %v3775, 0.0
      %v4000 = vmax.f32 %v3776, 0.0
      %v4001 = vmax.f32 %v3777, 0.0
      %v4002 = vmax.f32 %v3778, 0.0
      %v4003 = vmax.f32 %v3779, 0.0
      %v4004 = vmax.f32 %v3780, 0.0
      %v4005 = vmax.f32 %v3781, 0.0
      %v4006 = vmax.f32 %v3782, 0.0
      %v4007 = vmax.f32 %v3783, 0.0
      %v4008 = vmax.f32 %v3784, 0.0
      %v4009 = vmax.f32 %v3785, 0.0
      %v4010 = vmax.f32 %v3786, 0.0
      %v4011 = vmax.f32 %v3787, 0.0
      %v4012 = vmax.f32 %v3788, 0.0
      %v4013 = vmax.f32 %v3789, 0.0
      %v4014 = vmax.f32 %v3790, 0.0
      %v4015 = vmax.f32 %v3791, 0.0
      %v4016 = vmax.f32 %v3792, 0.0
      %v4017 = vmax.f32 %v3793, 0.0
      %v4018 = vmax.f32 %v3794, 0.0
      %v4019 = vmax.f32 %v3795, 0.0
      %v4020 = vmax.f32 %v3796, 0.0
      %v4021 = vmax.f32 %v3797, 0.0
      %v4022 = vmax.f32 %v3798, 0.0
      %v4023 = vmax.f32 %v3799, 0.0
      %v4024 = vmax.f32 %v3800, 0.0
      %v4025 = vmax.f32 %v3801, 0.0
      %v4026 = vmax.f32 %v3802, 0.0
      %v4027 = vmax.f32 %v3803, 0.0
      %v4028 = vmax.f32 %v3804, 0.0
      %v4029 = vmax.f32 %v3805, 0.0
      %v4030 = vmax.f32 %v3806, 0.0
      %v4031 = vmax.f32 %v3807, 0.0
      %v4032 = vmax.f32 %v3808, 0.0
      %v4033 = vmax.f32 %v3809, 0.0
      %v4034 = vmax.f32 %v3810, 0.0
      %v4035 = vmax.f32 %v3811, 0.0
      %v4036 = vmax.f32 %v3812, 0.0
      %v4037 = vmax.f32 %v3813, 0.0
      %v4038 = vmax.f32 %v3814, 0.0
      %v4039 = vmax.f32 %v3815, 0.0
      %v4040 = vmax.f32 %v3816, 0.0
      %v4041 = vmax.f32 %v3817, 0.0
      %v4042 = vmax.f32 %v3818, 0.0
      %v4043 = vmax.f32 %v3819, 0.0
      %v4044 = vmax.f32 %v3820, 0.0
      %v4045 = vmax.f32 %v3821, 0.0
      %v4046 = vmax.f32 %v3822, 0.0
      %v4047 = vmax.f32 %v3823, 0.0
      %v4048 = vmax.f32 %v3824, 0.0
      %v4049 = vmax.f32 %v3825, 0.0
      %v4050 = vmax.f32 %v3826, 0.0
      %v4051 = vmax.f32 %v3827, 0.0
      %v4052 = vmax.f32 %v3828, 0.0
      %v4053 = vmax.f32 %v3829, 0.0
      %v4054 = vmax.f32 %v3830, 0.0
      %v4055 = vmax.f32 %v3831, 0.0
      %v4056 = vmax.f32 %v3832, 0.0
      %v4057 = vmax.f32 %v3833, 0.0
      %v4058 = vmax.f32 %v3834, 0.0
      %v4059 = vmax.f32 %v3835, 0.0
      %v4060 = vmax.f32 %v3836, 0.0
      %v4061 = vmax.f32 %v3837, 0.0
      %v4062 = vmax.f32 %v3838, 0.0
      %v4063 = vmax.f32 %v3839, 0.0
      %v4064 = vmax.f32 %v3840, 0.0
      %v4065 = vmax.f32 %v3841, 0.0
      %v4066 = vmax.f32 %v3842, 0.0
      %v4067 = vmax.f32 %v3843, 0.0
      %v4068 = vmax.f32 %v3844, 0.0
      %v4069 = vmax.f32 %v3845, 0.0
      %v4070 = vmax.f32 %v3846, 0.0
      %v4071 = vmax.f32 %v3847, 0.0
      %v4072 = vmax.f32 %v3848, 0.0
      %v4073 = vmax.f32 %v3849, 0.0
      %v4074 = vmax.f32 %v3850, 0.0
      %v4075 = vmax.f32 %v3851, 0.0
      %v4076 = vmax.f32 %v3852, 0.0
      %v4077 = vmax.f32 %v3853, 0.0
      %v4078 = vmax.f32 %v3854, 0.0
      %v4079 = vmax.f32 %v3855, 0.0
      %v4080 = vmax.f32 %v3856, 0.0
      %v4081 = vmax.f32 %v3857, 0.0
      %v4082 = vmax.f32 %v3858, 0.0
      %v4083 = vmax.f32 %v3859, 0.0
      %v4084 = vmax.f32 %v3860, 0.0
      %v4085 = vmax.f32 %v3861, 0.0
      %v4086 = vmax.f32 %v3862, 0.0
      %v4087 = vmax.f32 %v3863, 0.0
      %v4088 = vmax.f32 %v3864, 0.0
      %v4089 = vmax.f32 %v3865, 0.0
      %v4090 = vmax.f32 %v3866, 0.0
      %v4091 = vmax.f32 %v3867, 0.0
      %v4092 = vmax.f32 %v3868, 0.0
      %v4093 = vmax.f32 %v3869, 0.0
      %v4094 = vmax.f32 %v3870, 0.0
      %v4095 = vmax.f32 %v3871, 0.0
      %v4096 = vmax.f32 %v3872, 0.0
      %v4097 = vmax.f32 %v3873, 0.0
      %v4098 = vmax.f32 %v3874, 0.0
      %v4099 = vmax.f32 %v3875, 0.0
      %v4100 = vmax.f32 %v3876, 0.0
      %v4101 = vmax.f32 %v3877, 0.0
      %v4102 = vmax.f32 %v3878, 0.0
      %v4103 = vmax.f32 %v3879, 0.0
      %v4104 = vmax.f32 %v3880, 0.0
      %v4105 = vmax.f32 %v3881, 0.0
      %v4106 = vmax.f32 %v3882, 0.0
      %v4107 = vmax.f32 %v3883, 0.0
      %v4108 = vmax.f32 %v3884, 0.0
      %v4109 = vmax.f32 %v3885, 0.0
      %v4110 = vmax.f32 %v3886, 0.0
      %v4111 = vmax.f32 %v3887, 0.0
      %v4112 = vmax.f32 %v3888, 0.0
      %v4113 = vmax.f32 %v3889, 0.0
      %v4114 = vmax.f32 %v3890, 0.0
      %v4115 = vmax.f32 %v3891, 0.0
      %v4116 = vmax.f32 %v3892, 0.0
      %v4117 = vmax.f32 %v3893, 0.0
      %v4118 = vmax.f32 %v3894, 0.0
      %v4119 = vmax.f32 %v3895, 0.0
      %v4120 = vmax.f32 %v3896, 0.0
      %v4121 = vmax.f32 %v3897, 0.0
      %v4122 = vpack.c.bf16 %v3899, %v3898
      %v4123 = vpack.c.bf16 %v3901, %v3900
      %v4124 = vpack.c.bf16 %v3903, %v3902
      %v4125 = vpack.c.bf16 %v3904, %v3904
      %v4126 = vpack.c.bf16 %v3906, %v3905
      %v4127 = vpack.c.bf16 %v3908, %v3907
      %v4128 = vpack.c.bf16 %v3910, %v3909
      %v4129 = vpack.c.bf16 %v3911, %v3911
      %v4130 = vpack.c.bf16 %v3913, %v3912
      %v4131 = vpack.c.bf16 %v3915, %v3914
      %v4132 = vpack.c.bf16 %v3917, %v3916
      %v4133 = vpack.c.bf16 %v3918, %v3918
      %v4134 = vpack.c.bf16 %v3920, %v3919
      %v4135 = vpack.c.bf16 %v3922, %v3921
      %v4136 = vpack.c.bf16 %v3924, %v3923
      %v4137 = vpack.c.bf16 %v3925, %v3925
      %v4138 = vpack.c.bf16 %v3927, %v3926
      %v4139 = vpack.c.bf16 %v3929, %v3928
      %v4140 = vpack.c.bf16 %v3931, %v3930
      %v4141 = vpack.c.bf16 %v3932, %v3932
      %v4142 = vpack.c.bf16 %v3934, %v3933
      %v4143 = vpack.c.bf16 %v3936, %v3935
      %v4144 = vpack.c.bf16 %v3938, %v3937
      %v4145 = vpack.c.bf16 %v3939, %v3939
      %v4146 = vpack.c.bf16 %v3941, %v3940
      %v4147 = vpack.c.bf16 %v3943, %v3942
      %v4148 = vpack.c.bf16 %v3945, %v3944
      %v4149 = vpack.c.bf16 %v3946, %v3946
      %v4150 = vpack.c.bf16 %v3948, %v3947
      %v4151 = vpack.c.bf16 %v3950, %v3949
      %v4152 = vpack.c.bf16 %v3952, %v3951
      %v4153 = vpack.c.bf16 %v3953, %v3953
      %v4154 = vpack.c.bf16 %v3955, %v3954
      %v4155 = vpack.c.bf16 %v3957, %v3956
      %v4156 = vpack.c.bf16 %v3959, %v3958
      %v4157 = vpack.c.bf16 %v3960, %v3960
      %v4158 = vpack.c.bf16 %v3962, %v3961
      %v4159 = vpack.c.bf16 %v3964, %v3963
      %v4160 = vpack.c.bf16 %v3966, %v3965
      %v4161 = vpack.c.bf16 %v3967, %v3967
      %v4162 = vpack.c.bf16 %v3969, %v3968
      %v4163 = vpack.c.bf16 %v3971, %v3970
      %v4164 = vpack.c.bf16 %v3973, %v3972
      %v4165 = vpack.c.bf16 %v3974, %v3974
      %v4166 = vpack.c.bf16 %v3976, %v3975
      %v4167 = vpack.c.bf16 %v3978, %v3977
      %v4168 = vpack.c.bf16 %v3980, %v3979
      %v4169 = vpack.c.bf16 %v3981, %v3981
      %v4170 = vpack.c.bf16 %v3983, %v3982
      %v4171 = vpack.c.bf16 %v3985, %v3984
      %v4172 = vpack.c.bf16 %v3987, %v3986
      %v4173 = vpack.c.bf16 %v3988, %v3988
      %v4174 = vpack.c.bf16 %v3990, %v3989
      %v4175 = vpack.c.bf16 %v3992, %v3991
      %v4176 = vpack.c.bf16 %v3994, %v3993
      %v4177 = vpack.c.bf16 %v3995, %v3995
      %v4178 = vpack.c.bf16 %v3997, %v3996
      %v4179 = vpack.c.bf16 %v3999, %v3998
      %v4180 = vpack.c.bf16 %v4001, %v4000
      %v4181 = vpack.c.bf16 %v4002, %v4002
      %v4182 = vpack.c.bf16 %v4004, %v4003
      %v4183 = vpack.c.bf16 %v4006, %v4005
      %v4184 = vpack.c.bf16 %v4008, %v4007
      %v4185 = vpack.c.bf16 %v4009, %v4009
      %v4186 = vpack.c.bf16 %v4011, %v4010
      %v4187 = vpack.c.bf16 %v4013, %v4012
      %v4188 = vpack.c.bf16 %v4015, %v4014
      %v4189 = vpack.c.bf16 %v4016, %v4016
      %v4190 = vpack.c.bf16 %v4018, %v4017
      %v4191 = vpack.c.bf16 %v4020, %v4019
      %v4192 = vpack.c.bf16 %v4022, %v4021
      %v4193 = vpack.c.bf16 %v4023, %v4023
      %v4194 = vpack.c.bf16 %v4025, %v4024
      %v4195 = vpack.c.bf16 %v4027, %v4026
      %v4196 = vpack.c.bf16 %v4029, %v4028
      %v4197 = vpack.c.bf16 %v4030, %v4030
      %v4198 = vpack.c.bf16 %v4032, %v4031
      %v4199 = vpack.c.bf16 %v4034, %v4033
      %v4200 = vpack.c.bf16 %v4036, %v4035
      %v4201 = vpack.c.bf16 %v4037, %v4037
      %v4202 = vpack.c.bf16 %v4039, %v4038
      %v4203 = vpack.c.bf16 %v4041, %v4040
      %v4204 = vpack.c.bf16 %v4043, %v4042
      %v4205 = vpack.c.bf16 %v4044, %v4044
      %v4206 = vpack.c.bf16 %v4046, %v4045
      %v4207 = vpack.c.bf16 %v4048, %v4047
      %v4208 = vpack.c.bf16 %v4050, %v4049
      %v4209 = vpack.c.bf16 %v4051, %v4051
      %v4210 = vpack.c.bf16 %v4053, %v4052
      %v4211 = vpack.c.bf16 %v4055, %v4054
      %v4212 = vpack.c.bf16 %v4057, %v4056
      %v4213 = vpack.c.bf16 %v4058, %v4058
      %v4214 = vpack.c.bf16 %v4060, %v4059
      %v4215 = vpack.c.bf16 %v4062, %v4061
      %v4216 = vpack.c.bf16 %v4064, %v4063
      %v4217 = vpack.c.bf16 %v4065, %v4065
      %v4218 = vpack.c.bf16 %v4067, %v4066
      %v4219 = vpack.c.bf16 %v4069, %v4068
      %v4220 = vpack.c.bf16 %v4071, %v4070
      %v4221 = vpack.c.bf16 %v4072, %v4072
      %v4222 = vpack.c.bf16 %v4074, %v4073
      %v4223 = vpack.c.bf16 %v4076, %v4075
      %v4224 = vpack.c.bf16 %v4078, %v4077
      %v4225 = vpack.c.bf16 %v4079, %v4079
      %v4226 = vpack.c.bf16 %v4081, %v4080
      %v4227 = vpack.c.bf16 %v4083, %v4082
      %v4228 = vpack.c.bf16 %v4085, %v4084
      %v4229 = vpack.c.bf16 %v4086, %v4086
      %v4230 = vpack.c.bf16 %v4088, %v4087
      %v4231 = vpack.c.bf16 %v4090, %v4089
      %v4232 = vpack.c.bf16 %v4092, %v4091
      %v4233 = vpack.c.bf16 %v4093, %v4093
      %v4234 = vpack.c.bf16 %v4095, %v4094
      %v4235 = vpack.c.bf16 %v4097, %v4096
      %v4236 = vpack.c.bf16 %v4099, %v4098
      %v4237 = vpack.c.bf16 %v4100, %v4100
      %v4238 = vpack.c.bf16 %v4102, %v4101
      %v4239 = vpack.c.bf16 %v4104, %v4103
      %v4240 = vpack.c.bf16 %v4106, %v4105
      %v4241 = vpack.c.bf16 %v4107, %v4107
      %v4242 = vpack.c.bf16 %v4109, %v4108
      %v4243 = vpack.c.bf16 %v4111, %v4110
      %v4244 = vpack.c.bf16 %v4113, %v4112
      %v4245 = vpack.c.bf16 %v4114, %v4114
      %v4246 = vpack.c.bf16 %v4116, %v4115
      %v4247 = vpack.c.bf16 %v4118, %v4117
      %v4248 = vpack.c.bf16 %v4120, %v4119
      %v4249 = vpack.c.bf16 %v4121, %v4121
      %4250 = vst [vmem:[%s297] sm:$0xff] %v4122
      %4251 = vst [vmem:[%s297 + $0x8] sm:$0xff] %v4123
      %4252 = vst [vmem:[%s297 + $0x10] sm:$0xff] %v4124
      %vm4253 = vcmask 125952
      %4254 = vst.msk [vmem:[%s297 + $0x18] sm:$0xf] %vm4253, %v4125
      %4255 = vst [vmem:[%s297 + $0x1c] sm:$0xff] %v4126
      %4256 = vst [vmem:[%s297 + $0x24] sm:$0xff] %v4127
      %4257 = vst [vmem:[%s297 + $0x2c] sm:$0xff] %v4128
      %4258 = vst.msk [vmem:[%s297 + $0x34] sm:$0xf] %vm4253, %v4129
      %4259 = vst [vmem:[%s297 + $0x38] sm:$0xff] %v4130
      %4260 = vst [vmem:[%s297 + $0x40] sm:$0xff] %v4131
      %4261 = vst [vmem:[%s297 + $0x48] sm:$0xff] %v4132
      %4262 = vst.msk [vmem:[%s297 + $0x50] sm:$0xf] %vm4253, %v4133
      %4263 = vst [vmem:[%s297 + $0x54] sm:$0xff] %v4134
      %4264 = vst [vmem:[%s297 + $0x5c] sm:$0xff] %v4135
      %4265 = vst [vmem:[%s297 + $0x64] sm:$0xff] %v4136
      %4266 = vst.msk [vmem:[%s297 + $0x6c] sm:$0xf] %vm4253, %v4137
      %4267 = vst [vmem:[%s297 + $0x70] sm:$0xff] %v4138
      %4268 = vst [vmem:[%s297 + $0x78] sm:$0xff] %v4139
      %4269 = vst [vmem:[%s297 + $0x80] sm:$0xff] %v4140
      %4270 = vst.msk [vmem:[%s297 + $0x88] sm:$0xf] %vm4253, %v4141
      %4271 = vst [vmem:[%s297 + $0x8c] sm:$0xff] %v4142
      %4272 = vst [vmem:[%s297 + $0x94] sm:$0xff] %v4143
      %4273 = vst [vmem:[%s297 + $0x9c] sm:$0xff] %v4144
      %4274 = vst.msk [vmem:[%s297 + $0xa4] sm:$0xf] %vm4253, %v4145
      %4275 = vst [vmem:[%s297 + $0xa8] sm:$0xff] %v4146
      %4276 = vst [vmem:[%s297 + $0xb0] sm:$0xff] %v4147
      %4277 = vst [vmem:[%s297 + $0xb8] sm:$0xff] %v4148
      %4278 = vst.msk [vmem:[%s297 + $0xc0] sm:$0xf] %vm4253, %v4149
      %4279 = vst [vmem:[%s297 + $0xc4] sm:$0xff] %v4150
      %4280 = vst [vmem:[%s297 + $0xcc] sm:$0xff] %v4151
      %4281 = vst [vmem:[%s297 + $0xd4] sm:$0xff] %v4152
      %4282 = vst.msk [vmem:[%s297 + $0xdc] sm:$0xf] %vm4253, %v4153
      %4283 = vst [vmem:[%s297 + $0xe0] sm:$0xff] %v4154
      %4284 = vst [vmem:[%s297 + $0xe8] sm:$0xff] %v4155
      %4285 = vst [vmem:[%s297 + $0xf0] sm:$0xff] %v4156
      %4286 = vst.msk [vmem:[%s297 + $0xf8] sm:$0xf] %vm4253, %v4157
      %4287 = vst [vmem:[%s297 + $0xfc] sm:$0xff] %v4158
      %4288 = vst [vmem:[%s297 + $0x104] sm:$0xff] %v4159
      %4289 = vst [vmem:[%s297 + $0x10c] sm:$0xff] %v4160
      %4290 = vst.msk [vmem:[%s297 + $0x114] sm:$0xf] %vm4253, %v4161
      %4291 = vst [vmem:[%s297 + $0x118] sm:$0xff] %v4162
      %4292 = vst [vmem:[%s297 + $0x120] sm:$0xff] %v4163
      %4293 = vst [vmem:[%s297 + $0x128] sm:$0xff] %v4164
      %4294 = vst.msk [vmem:[%s297 + $0x130] sm:$0xf] %vm4253, %v4165
      %4295 = vst [vmem:[%s297 + $0x134] sm:$0xff] %v4166
      %4296 = vst [vmem:[%s297 + $0x13c] sm:$0xff] %v4167
      %4297 = vst [vmem:[%s297 + $0x144] sm:$0xff] %v4168
      %4298 = vst.msk [vmem:[%s297 + $0x14c] sm:$0xf] %vm4253, %v4169
      %4299 = vst [vmem:[%s297 + $0x150] sm:$0xff] %v4170
      %4300 = vst [vmem:[%s297 + $0x158] sm:$0xff] %v4171
      %4301 = vst [vmem:[%s297 + $0x160] sm:$0xff] %v4172
      %4302 = vst.msk [vmem:[%s297 + $0x168] sm:$0xf] %vm4253, %v4173
      %4303 = vst [vmem:[%s297 + $0x16c] sm:$0xff] %v4174
      %4304 = vst [vmem:[%s297 + $0x174] sm:$0xff] %v4175
      %4305 = vst [vmem:[%s297 + $0x17c] sm:$0xff] %v4176
      %4306 = vst.msk [vmem:[%s297 + $0x184] sm:$0xf] %vm4253, %v4177
      %4307 = vst [vmem:[%s297 + $0x188] sm:$0xff] %v4178
      %4308 = vst [vmem:[%s297 + $0x190] sm:$0xff] %v4179
      %4309 = vst [vmem:[%s297 + $0x198] sm:$0xff] %v4180
      %4310 = vst.msk [vmem:[%s297 + $0x1a0] sm:$0xf] %vm4253, %v4181
      %4311 = vst [vmem:[%s297 + $0x1a4] sm:$0xff] %v4182
      %4312 = vst [vmem:[%s297 + $0x1ac] sm:$0xff] %v4183
      %4313 = vst [vmem:[%s297 + $0x1b4] sm:$0xff] %v4184
      %4314 = vst.msk [vmem:[%s297 + $0x1bc] sm:$0xf] %vm4253, %v4185
      %4315 = vst [vmem:[%s297 + $0x1c0] sm:$0xff] %v4186
      %4316 = vst [vmem:[%s297 + $0x1c8] sm:$0xff] %v4187
      %4317 = vst [vmem:[%s297 + $0x1d0] sm:$0xff] %v4188
      %4318 = vst.msk [vmem:[%s297 + $0x1d8] sm:$0xf] %vm4253, %v4189
      %4319 = vst [vmem:[%s297 + $0x1dc] sm:$0xff] %v4190
      %4320 = vst [vmem:[%s297 + $0x1e4] sm:$0xff] %v4191
      %4321 = vst [vmem:[%s297 + $0x1ec] sm:$0xff] %v4192
      %4322 = vst.msk [vmem:[%s297 + $0x1f4] sm:$0xf] %vm4253, %v4193
      %4323 = vst [vmem:[%s297 + $0x1f8] sm:$0xff] %v4194
      %4324 = vst [vmem:[%s297 + $0x200] sm:$0xff] %v4195
      %4325 = vst [vmem:[%s297 + $0x208] sm:$0xff] %v4196
      %4326 = vst.msk [vmem:[%s297 + $0x210] sm:$0xf] %vm4253, %v4197
      %4327 = vst [vmem:[%s297 + $0x214] sm:$0xff] %v4198
      %4328 = vst [vmem:[%s297 + $0x21c] sm:$0xff] %v4199
      %4329 = vst [vmem:[%s297 + $0x224] sm:$0xff] %v4200
      %4330 = vst.msk [vmem:[%s297 + $0x22c] sm:$0xf] %vm4253, %v4201
      %4331 = vst [vmem:[%s297 + $0x230] sm:$0xff] %v4202
      %4332 = vst [vmem:[%s297 + $0x238] sm:$0xff] %v4203
      %4333 = vst [vmem:[%s297 + $0x240] sm:$0xff] %v4204
      %4334 = vst.msk [vmem:[%s297 + $0x248] sm:$0xf] %vm4253, %v4205
      %4335 = vst [vmem:[%s297 + $0x24c] sm:$0xff] %v4206
      %4336 = vst [vmem:[%s297 + $0x254] sm:$0xff] %v4207
      %4337 = vst [vmem:[%s297 + $0x25c] sm:$0xff] %v4208
      %4338 = vst.msk [vmem:[%s297 + $0x264] sm:$0xf] %vm4253, %v4209
      %4339 = vst [vmem:[%s297 + $0x268] sm:$0xff] %v4210
      %4340 = vst [vmem:[%s297 + $0x270] sm:$0xff] %v4211
      %4341 = vst [vmem:[%s297 + $0x278] sm:$0xff] %v4212
      %4342 = vst.msk [vmem:[%s297 + $0x280] sm:$0xf] %vm4253, %v4213
      %4343 = vst [vmem:[%s297 + $0x284] sm:$0xff] %v4214
      %4344 = vst [vmem:[%s297 + $0x28c] sm:$0xff] %v4215
      %4345 = vst [vmem:[%s297 + $0x294] sm:$0xff] %v4216
      %4346 = vst.msk [vmem:[%s297 + $0x29c] sm:$0xf] %vm4253, %v4217
      %4347 = vst [vmem:[%s297 + $0x2a0] sm:$0xff] %v4218
      %4348 = vst [vmem:[%s297 + $0x2a8] sm:$0xff] %v4219
      %4349 = vst [vmem:[%s297 + $0x2b0] sm:$0xff] %v4220
      %4350 = vst.msk [vmem:[%s297 + $0x2b8] sm:$0xf] %vm4253, %v4221
      %4351 = vst [vmem:[%s297 + $0x2bc] sm:$0xff] %v4222
      %4352 = vst [vmem:[%s297 + $0x2c4] sm:$0xff] %v4223
      %4353 = vst [vmem:[%s297 + $0x2cc] sm:$0xff] %v4224
      %4354 = vst.msk [vmem:[%s297 + $0x2d4] sm:$0xf] %vm4253, %v4225
      %4355 = vst [vmem:[%s297 + $0x2d8] sm:$0xff] %v4226
      %4356 = vst [vmem:[%s297 + $0x2e0] sm:$0xff] %v4227
      %4357 = vst [vmem:[%s297 + $0x2e8] sm:$0xff] %v4228
      %4358 = vst.msk [vmem:[%s297 + $0x2f0] sm:$0xf] %vm4253, %v4229
      %4359 = vst [vmem:[%s297 + $0x2f4] sm:$0xff] %v4230
      %4360 = vst [vmem:[%s297 + $0x2fc] sm:$0xff] %v4231
      %4361 = vst [vmem:[%s297 + $0x304] sm:$0xff] %v4232
      %4362 = vst.msk [vmem:[%s297 + $0x30c] sm:$0xf] %vm4253, %v4233
      %4363 = vst [vmem:[%s297 + $0x310] sm:$0xff] %v4234
      %4364 = vst [vmem:[%s297 + $0x318] sm:$0xff] %v4235
      %4365 = vst [vmem:[%s297 + $0x320] sm:$0xff] %v4236
      %4366 = vst.msk [vmem:[%s297 + $0x328] sm:$0xf] %vm4253, %v4237
      %4367 = vst [vmem:[%s297 + $0x32c] sm:$0xff] %v4238
      %4368 = vst [vmem:[%s297 + $0x334] sm:$0xff] %v4239
      %4369 = vst [vmem:[%s297 + $0x33c] sm:$0xff] %v4240
      %4370 = vst.msk [vmem:[%s297 + $0x344] sm:$0xf] %vm4253, %v4241
      %4371 = vst [vmem:[%s297 + $0x348] sm:$0xff] %v4242
      %4372 = vst [vmem:[%s297 + $0x350] sm:$0xff] %v4243
      %4373 = vst [vmem:[%s297 + $0x358] sm:$0xff] %v4244
      %4374 = vst.msk [vmem:[%s297 + $0x360] sm:$0xf] %vm4253, %v4245
      %4375 = vst [vmem:[%s297 + $0x364] sm:$0xff] %v4246
      %4376 = vst [vmem:[%s297 + $0x36c] sm:$0xff] %v4247
      %4377 = vst [vmem:[%s297 + $0x374] sm:$0xff] %v4248
      %4378 = vst.msk [vmem:[%s297 + $0x37c] sm:$0xf] %vm4253, %v4249
      %s4379 = smul.u32 32, %s16
      %p4380 = scmp.lt.s32.totalorder %s4379, 63
      %s4381 = scalar_select %p4380, %s4379, 63
      %s4382 = smul.addr %s4381, 7
      %s4383 = smul.addr %s4382, 4
      %s4384 = scalar_lea.vmem %s5, %s4383
      // Predicated region
      $region41: #{tpu_custom_call.1} parent=39 // pred_check
        %p4385 = pneg %p159
      $region42: #{tpu_custom_call.1} parent=39 // pred_check_branch
        %4387 = sbr.rel (%p4385) target = $region44
      $region43: #{tpu_custom_call.1} parent=39 // pred_region
        %s4388 = smul.u32 32, %s16
      $region44: #{tpu_custom_call.1} parent=39 // pred_fallthru
        _
    $region40: #{tpu_custom_call.1} parent=5 // pred_fallthru
      _
    %p4389 = scmp.le.s32.totalorder 2, %s11
    // Predicated region
    $region45: #{tpu_custom_call.1} parent=5 // pred_check
      %p4390 = pneg %p4389
    $region46: #{tpu_custom_call.1} parent=5 // pred_check_branch
      %4392 = sbr.rel (%p4390) target = $region48
    $region47: #{tpu_custom_call.1} parent=5 // pred_region
      %s4393 = ssub.s32 %s11, 2
      // Predicated region
      $region49: #{tpu_custom_call.1} parent=47 // pred_check
        %p4394 = pneg %p165
      $region50: #{tpu_custom_call.1} parent=47 // pred_check_branch
        %4396 = sbr.rel (%p4394) target = $region52
      $region51: #{tpu_custom_call.1} parent=47 // pred_region
        %s4397 = smul.u32 32, %s17
        %p4398 = scmp.lt.s32.totalorder %s4397, 63
        %s4399 = scalar_select %p4398, %s4397, 63
        %s4400 = smul.addr %s4399, 7
        %s4401 = smul.addr %s4400, 4
        %s4402 = scalar_lea.vmem %s5, %s4401
      $region52: #{tpu_custom_call.1} parent=47 // pred_fallthru
        _
    $region48: #{tpu_custom_call.1} parent=5 // pred_fallthru
      _
  $region6: #{tpu_custom_call.1} parent=0 // loop_footer
    %s15 = sadd.s32 1, %s11
  $region7: #{tpu_custom_call.1} parent=0 // loop_footer_branch
    %10 = sbr.rel target = $region3
  $region8: #{tpu_custom_call.1} parent=0 // loop_exit
    _

</llo_original>
